<compile_context>
chip_gen: v5e
topology: v5e:2x2
jax: 0.10.0
libtpu: 0.0.40
codegen_flags: <defaults>
</compile_context>

<pallas_src>
import math
import functools

import jax
import jax.numpy as jnp
from jax.experimental import pallas as pl
from jax.experimental.pallas import tpu as pltpu

EPS = 1e-6  # LayerNorm eps (added to std, matching the PyTorch module)


def sa_kernel(y_ref, mask_ref,
              wq_ref, bq_ref, wk_ref, bk_ref, wv_ref, bv_ref, wm_ref, bm_ref,
              w1_ref, c1_ref, w2_ref, c2_ref,
              a1_ref, g1_ref, a2_ref, g2_ref,
              out_ref,
              *, num_heads, batch_tile, seq_len, ff_chunk, approx_recip):
    Bt, S, NH = batch_tile, seq_len, num_heads
    x = y_ref[...]                       # (rows, H) f32 activation slab
    rows, H = x.shape
    dh = H // NH
    mm = wq_ref.dtype                    # matmul operand dtype (bf16 or f32)
    xm = x.astype(mm)

    # --- QKV projections: three full-width (rows,H)@(H,H) matmuls -----------
    q = jnp.dot(xm, wq_ref[...], preferred_element_type=jnp.float32) + bq_ref[...]
    k = jnp.dot(xm, wk_ref[...], preferred_element_type=jnp.float32) + bk_ref[...]
    v = jnp.dot(xm, wv_ref[...], preferred_element_type=jnp.float32) + bv_ref[...]
    # Fold 1/sqrt(dh) into q once (touches rows*H elems, not heads*S*S scores).
    q = q * jnp.float32(1.0 / math.sqrt(dh))

    # Additive mask bias hoisted out of attention (1.0 == masked key position),
    # kept in f32 so -1e9 never meets bf16.
    bias = jnp.where(mask_ref[...] > 0.5, jnp.float32(-1e9),
                     jnp.float32(0.0))                          # (Bt, 1, S)
    bias_hm = jnp.broadcast_to(bias[None], (NH, Bt, 1, S)).reshape(NH * Bt, 1, S)

    # --- restack head-major: (rows, H) -> (NH*Bt, S, dh), index = h*Bt + b ---
    def head_major(t):
        parts = [t[:, h * dh:(h + 1) * dh].reshape(Bt, S, dh).astype(mm)
                 for h in range(NH)]
        return jnp.concatenate(parts, axis=0)

    qh = head_major(q)
    kh = head_major(k)
    vh = head_major(v)

    # --- attention as batched einsums over the (NH*Bt) batch axis ------------
    # TODO(synk): for large S (>= ~512) tile KV flash-style with online softmax
    # instead of materializing the full (NH*Bt, S, S) score block.
    s = jnp.einsum('bqd,bkd->bqk', qh, kh,
                   preferred_element_type=jnp.float32) + bias_hm
    m = jnp.max(s, axis=-1, keepdims=True)
    e = jnp.exp(s - m)
    p = e * pl.reciprocal(jnp.sum(e, axis=-1, keepdims=True), approx=approx_recip)
    # TODO(synk): attention dropout omitted (inference / identity).
    ov = jnp.einsum('bqk,bkd->bqd', p.astype(mm), vh,
                    preferred_element_type=jnp.float32)         # (NH*Bt, S, dh)

    # --- lane-concat heads back to (rows, H); single K=H merge matmul --------
    merged = jnp.concatenate(
        [ov[h * Bt:(h + 1) * Bt].reshape(rows, dh) for h in range(NH)], axis=-1)
    atted = jnp.dot(merged.astype(mm), wm_ref[...],
                    preferred_element_type=jnp.float32) + bm_ref[...]

    # --- residual + LayerNorm 1 (torch.std: unbiased, eps added to std) ------
    r1 = x + atted
    mean1 = jnp.mean(r1, axis=-1, keepdims=True)
    xc1 = r1 - mean1
    std1 = jnp.sqrt(jnp.sum(xc1 * xc1, axis=-1, keepdims=True) * (1.0 / (H - 1)))
    n1 = a1_ref[...] * xc1 * pl.reciprocal(std1 + EPS, approx=False) + g1_ref[...]

    # --- FFN: Linear -> ReLU -> Linear, chunked over the FF dimension --------
    # TODO(synk): at very large ff_size, stream w1/w2 via FF-tiled BlockSpecs
    # (extra "arbitrary" grid axis) instead of keeping them fully VMEM-resident.
    n1m = n1.astype(mm)
    FF = w1_ref.shape[1]
    f = jnp.zeros((rows, H), jnp.float32)
    for lo in range(0, FF, ff_chunk):
        hi = min(FF, lo + ff_chunk)
        hid = jnp.dot(n1m, w1_ref[:, lo:hi],
                      preferred_element_type=jnp.float32) + c1_ref[:, lo:hi]
        hid = jnp.maximum(hid, 0.0)
        f = f + jnp.dot(hid.astype(mm), w2_ref[lo:hi, :],
                        preferred_element_type=jnp.float32)
    f = f + c2_ref[...]

    # --- residual + LayerNorm 2 ----------------------------------------------
    r2 = n1 + f
    mean2 = jnp.mean(r2, axis=-1, keepdims=True)
    xc2 = r2 - mean2
    std2 = jnp.sqrt(jnp.sum(xc2 * xc2, axis=-1, keepdims=True) * (1.0 / (H - 1)))
    out_ref[...] = (a2_ref[...] * xc2 * pl.reciprocal(std2 + EPS, approx=False)
                    + g2_ref[...]).astype(out_ref.dtype)


def _pick_batch_tile(B, S, target_rows=256):
    """Batch-tile so Bt*S approaches `target_rows` (256 fills the v6e/v7x MXU M
    dim and amortizes per-step overhead), preferring an even grid-step count
    (>= 2) so both v7x TensorCores stay busy, with B % Bt == 0."""
    want = max(1, target_rows // S)
    divs = [d for d in range(1, B + 1) if B % d == 0 and d <= want] or [1]
    even = [d for d in divs if (B // d) >= 2 and (B // d) % 2 == 0]
    multi = [d for d in divs if (B // d) >= 2]
    bt = max(even or multi or divs)
    if (bt * S) % 8 != 0 and bt != B:
        bt = B  # full-array block is always layout-legal
    return bt


def _default_vmem_limit():
    try:
        cap = pltpu.get_tpu_info().vmem_capacity_bytes
    except Exception:
        cap = 64 * 1024 * 1024
    return min(int(cap * 7 // 8), 112 * 1024 * 1024)


def _const_spec(shape, single_buffer):
    zeros = (0,) * len(shape)
    if single_buffer:
        # Constant index_map => the block never changes; single-buffer it so
        # production-size weights are resident once, not twice.
        return pl.BlockSpec(shape, lambda i, z=zeros: z,
                            pipeline_mode=pl.Buffered(buffer_count=1))
    return pl.BlockSpec(shape, lambda i, z=zeros: z)


def sa_forward(y, mask, p, num_heads, *,
               matmul_dtype=jnp.bfloat16, approx_recip=True,
               batch_tile=None, ff_chunk=None, out_dtype=None,
               single_buffer_weights=True):
    B, S, H = y.shape
    assert H % num_heads == 0
    FF = p["w1"].shape[1]
    Bt = batch_tile if batch_tile is not None else _pick_batch_tile(B, S)
    assert B % Bt == 0
    rows = Bt * S
    out_dt = out_dtype if out_dtype is not None else y.dtype  # bf16 possible
    fchunk = ff_chunk if ff_chunk is not None else min(FF, 1024)

    # Lane/sublane-dense 2-D activation slab at the pallas_call boundary.
    y2d = y.reshape(B * S, H)

    # Cast only the matmul weight matrices (biases / LN params stay f32).
    md = matmul_dtype
    wq, wk, wv, wm = (p[n].astype(md) for n in ("wq", "wk", "wv", "wm"))
    w1, w2 = p["w1"].astype(md), p["w2"].astype(md)

    kernel = functools.partial(sa_kernel, num_heads=num_heads, batch_tile=Bt,
                               seq_len=S, ff_chunk=fchunk,
                               approx_recip=approx_recip)

    args = (y2d, mask,
            wq, p["bq"], wk, p["bk"], wv, p["bv"], wm, p["bm"],
            w1, p["c1"], w2, p["c2"],
            p["a1"], p["g1"], p["a2"], p["g2"])

    def run(single_buffer):
        in_specs = [
            pl.BlockSpec((rows, H), lambda i: (i, 0)),       # y slab
            pl.BlockSpec((Bt, 1, S), lambda i: (i, 0, 0)),   # mask
        ] + [_const_spec(a.shape, single_buffer) for a in args[2:]]
        out_spec = pl.BlockSpec((rows, H), lambda i: (i, 0))
        return pl.pallas_call(
            kernel,
            out_shape=jax.ShapeDtypeStruct((B * S, H), out_dt),
            grid_spec=pltpu.PrefetchScalarGridSpec(
                num_scalar_prefetch=0, grid=(B // Bt,),
                in_specs=in_specs, out_specs=out_spec),
            compiler_params=pltpu.CompilerParams(
                dimension_semantics=("parallel",),
                vmem_limit_bytes=_default_vmem_limit()),
        )(*args)

    if single_buffer_weights:
        try:
            return run(True).reshape(B, S, H)
        except Exception:
            # pl.Buffered(1) not supported by this JAX build -> default buffering.
            pass
    return run(False).reshape(B, S, H)


def sa_reference(y, mask, p, num_heads):
    # Pure-JAX reference replicating the PyTorch forward exactly.
    B, S, H = y.shape
    dh = H // num_heads

    def ln(x, a, b):
        mean = x.mean(-1, keepdims=True)
        std = jnp.sqrt(((x - mean) ** 2).sum(-1, keepdims=True) / (H - 1))
        return a * (x - mean) / (std + EPS) + b

    q = y @ p["wq"] + p["bq"]
    k = y @ p["wk"] + p["bk"]
    v = y @ p["wv"] + p["bv"]
    qh = q.reshape(B, S, num_heads, dh).transpose(0, 2, 1, 3)
    kh = k.reshape(B, S, num_heads, dh).transpose(0, 2, 1, 3)
    vh = v.reshape(B, S, num_heads, dh).transpose(0, 2, 1, 3)
    scores = jnp.einsum("bhqd,bhkd->bhqk", qh, kh) / math.sqrt(dh)
    scores = jnp.where(mask[:, None, :, :] > 0.5, -1e9, scores)
    att = jax.nn.softmax(scores, axis=-1)
    o = jnp.einsum("bhqk,bhkd->bhqd", att, vh).transpose(0, 2, 1, 3).reshape(B, S, H)
    atted = o @ p["wm"] + p["bm"]
    n1 = ln(y + atted, p["a1"], p["g1"])
    f = jnp.maximum(n1 @ p["w1"] + p["c1"], 0.0) @ p["w2"] + p["c2"]
    return ln(n1 + f, p["a2"], p["g2"])


if __name__ == "__main__":
    B, S, H, NH, FF = 2, 8, 32, 4, 64   # batch, seq, hidden_size, multi_head, ff_size

    key = jax.random.PRNGKey(0)
    ks = jax.random.split(key, 16)

    def w(k_, shape, scale=0.1):
        return (scale * jax.random.normal(k_, shape)).astype(jnp.float32)

    params = {
        "wq": w(ks[0], (H, H)), "bq": w(ks[1], (1, H)),
        "wk": w(ks[2], (H, H)), "bk": w(ks[3], (1, H)),
        "wv": w(ks[4], (H, H)), "bv": w(ks[5], (1, H)),
        "wm": w(ks[6], (H, H)), "bm": w(ks[7], (1, H)),
        "w1": w(ks[8], (H, FF)), "c1": w(ks[9], (1, FF)),
        "w2": w(ks[10], (FF, H)), "c2": w(ks[11], (1, H)),
        "a1": jnp.ones((1, H), jnp.float32), "g1": jnp.zeros((1, H), jnp.float32),
        "a2": jnp.ones((1, H), jnp.float32), "g2": jnp.zeros((1, H), jnp.float32),
    }

    y = jax.random.normal(ks[12], (B, S, H), dtype=jnp.float32)
    # y_mask: 1.0 = padded key position (batch 0: full length, batch 1: last 2 padded)
    lengths = jnp.array([S, S - 2])
    mask = (jnp.arange(S)[None, :] >= lengths[:, None]).astype(jnp.float32)
    mask = mask.reshape(B, 1, S)

    ref = sa_reference(y, mask, params, NH)

    # Exact path (f32 MXU operands, exact reciprocals) -- strict check.
    out = jax.block_until_ready(
        sa_forward(y, mask, params, NH,
                   matmul_dtype=jnp.float32, approx_recip=False))
    if not bool(jnp.allclose(out, ref, atol=1e-4, rtol=1e-4)):
        raise SystemExit("f32 mismatch vs reference: max err = "
                         f"{float(jnp.max(jnp.abs(out - ref)))}")

    # Fast default path (bf16 MXU operands + approx EUP reciprocal) -- loose check.
    out_fast = jax.block_until_ready(sa_forward(y, mask, params, NH))
    if not bool(jnp.allclose(out_fast, ref, atol=5e-2, rtol=5e-2)):
        raise SystemExit("bf16 mismatch vs reference: max err = "
                         f"{float(jnp.max(jnp.abs(out_fast - ref)))}")

    print("KERNEL_OK")
</pallas_src>

<mosaic_0001>
module attributes {stable_mosaic.version = 11 : i64} {
  func.func @sa_kernel(%arg0: i32, %arg1: memref<8x32xf32, #tpu.memory_space<vmem>>, %arg2: memref<1x1x8xf32, #tpu.memory_space<vmem>>, %arg3: memref<32x32xf32, #tpu.memory_space<vmem>>, %arg4: memref<1x32xf32, #tpu.memory_space<vmem>>, %arg5: memref<32x32xf32, #tpu.memory_space<vmem>>, %arg6: memref<1x32xf32, #tpu.memory_space<vmem>>, %arg7: memref<32x32xf32, #tpu.memory_space<vmem>>, %arg8: memref<1x32xf32, #tpu.memory_space<vmem>>, %arg9: memref<32x32xf32, #tpu.memory_space<vmem>>, %arg10: memref<1x32xf32, #tpu.memory_space<vmem>>, %arg11: memref<32x64xf32, #tpu.memory_space<vmem>>, %arg12: memref<1x64xf32, #tpu.memory_space<vmem>>, %arg13: memref<64x32xf32, #tpu.memory_space<vmem>>, %arg14: memref<1x32xf32, #tpu.memory_space<vmem>>, %arg15: memref<1x32xf32, #tpu.memory_space<vmem>>, %arg16: memref<1x32xf32, #tpu.memory_space<vmem>>, %arg17: memref<1x32xf32, #tpu.memory_space<vmem>>, %arg18: memref<1x32xf32, #tpu.memory_space<vmem>>, %arg19: memref<8x32xf32, #tpu.memory_space<vmem>>) attributes {dimension_semantics = [#tpu.dimension_semantics<parallel>], iteration_bounds = array<i64: 2>, scalar_prefetch = 0 : i64, scratch_operands = 0 : i64, tpu.core_type = #tpu.core_type<tc>, window_params = [{transform_indices = @transform_0, window_bounds = array<i64: 8, 32>}, {transform_indices = @transform_1, window_bounds = array<i64: 1, 1, 8>}, {pipeline_mode = #tpu.pipeline_mode<synchronous>, transform_indices = @transform_2, window_bounds = array<i64: 32, 32>}, {pipeline_mode = #tpu.pipeline_mode<synchronous>, transform_indices = @transform_3, window_bounds = array<i64: 1, 32>}, {pipeline_mode = #tpu.pipeline_mode<synchronous>, transform_indices = @transform_4, window_bounds = array<i64: 32, 32>}, {pipeline_mode = #tpu.pipeline_mode<synchronous>, transform_indices = @transform_5, window_bounds = array<i64: 1, 32>}, {pipeline_mode = #tpu.pipeline_mode<synchronous>, transform_indices = @transform_6, window_bounds = array<i64: 32, 32>}, {pipeline_mode = #tpu.pipeline_mode<synchronous>, transform_indices = @transform_7, window_bounds = array<i64: 1, 32>}, {pipeline_mode = #tpu.pipeline_mode<synchronous>, transform_indices = @transform_8, window_bounds = array<i64: 32, 32>}, {pipeline_mode = #tpu.pipeline_mode<synchronous>, transform_indices = @transform_9, window_bounds = array<i64: 1, 32>}, {pipeline_mode = #tpu.pipeline_mode<synchronous>, transform_indices = @transform_10, window_bounds = array<i64: 32, 64>}, {pipeline_mode = #tpu.pipeline_mode<synchronous>, transform_indices = @transform_11, window_bounds = array<i64: 1, 64>}, {pipeline_mode = #tpu.pipeline_mode<synchronous>, transform_indices = @transform_12, window_bounds = array<i64: 64, 32>}, {pipeline_mode = #tpu.pipeline_mode<synchronous>, transform_indices = @transform_13, window_bounds = array<i64: 1, 32>}, {pipeline_mode = #tpu.pipeline_mode<synchronous>, transform_indices = @transform_14, window_bounds = array<i64: 1, 32>}, {pipeline_mode = #tpu.pipeline_mode<synchronous>, transform_indices = @transform_15, window_bounds = array<i64: 1, 32>}, {pipeline_mode = #tpu.pipeline_mode<synchronous>, transform_indices = @transform_16, window_bounds = array<i64: 1, 32>}, {pipeline_mode = #tpu.pipeline_mode<synchronous>, transform_indices = @transform_17, window_bounds = array<i64: 1, 32>}, {transform_indices = @transform_18, window_bounds = array<i64: 8, 32>}]} {
    %c0 = arith.constant 0 : index
    %c0_0 = arith.constant 0 : index
    %0 = vector.load %arg1[%c0, %c0_0] : memref<8x32xf32, #tpu.memory_space<vmem>>, vector<8x32xf32>
    %c0_1 = arith.constant 0 : index
    %c0_2 = arith.constant 0 : index
    %1 = vector.load %arg3[%c0_1, %c0_2] : memref<32x32xf32, #tpu.memory_space<vmem>>, vector<32x32xf32>
    %cst = arith.constant dense<0.000000e+00> : vector<8x32xf32>
    %2 = tpu.matmul %0, %1, %cst {dimension_numbers = #tpu.dot_dimension_numbers<[1], [0], [0], [1], [0, 0, 1, 1], [], []>} : vector<8x32xf32>, vector<32x32xf32>, vector<8x32xf32> -> vector<8x32xf32>
    %c0_3 = arith.constant 0 : index
    %c0_4 = arith.constant 0 : index
    %3 = vector.load %arg4[%c0_3, %c0_4] : memref<1x32xf32, #tpu.memory_space<vmem>>, vector<1x32xf32>
    %4 = vector.broadcast %3 : vector<1x32xf32> to vector<8x32xf32>
    %5 = arith.addf %2, %4 : vector<8x32xf32>
    %c0_5 = arith.constant 0 : index
    %c0_6 = arith.constant 0 : index
    %6 = vector.load %arg5[%c0_5, %c0_6] : memref<32x32xf32, #tpu.memory_space<vmem>>, vector<32x32xf32>
    %cst_7 = arith.constant dense<0.000000e+00> : vector<8x32xf32>
    %7 = tpu.matmul %0, %6, %cst_7 {dimension_numbers = #tpu.dot_dimension_numbers<[1], [0], [0], [1], [0, 0, 1, 1], [], []>} : vector<8x32xf32>, vector<32x32xf32>, vector<8x32xf32> -> vector<8x32xf32>
    %c0_8 = arith.constant 0 : index
    %c0_9 = arith.constant 0 : index
    %8 = vector.load %arg6[%c0_8, %c0_9] : memref<1x32xf32, #tpu.memory_space<vmem>>, vector<1x32xf32>
    %9 = vector.broadcast %8 : vector<1x32xf32> to vector<8x32xf32>
    %10 = arith.addf %7, %9 : vector<8x32xf32>
    %c0_10 = arith.constant 0 : index
    %c0_11 = arith.constant 0 : index
    %11 = vector.load %arg7[%c0_10, %c0_11] : memref<32x32xf32, #tpu.memory_space<vmem>>, vector<32x32xf32>
    %cst_12 = arith.constant dense<0.000000e+00> : vector<8x32xf32>
    %12 = tpu.matmul %0, %11, %cst_12 {dimension_numbers = #tpu.dot_dimension_numbers<[1], [0], [0], [1], [0, 0, 1, 1], [], []>} : vector<8x32xf32>, vector<32x32xf32>, vector<8x32xf32> -> vector<8x32xf32>
    %c0_13 = arith.constant 0 : index
    %c0_14 = arith.constant 0 : index
    %13 = vector.load %arg8[%c0_13, %c0_14] : memref<1x32xf32, #tpu.memory_space<vmem>>, vector<1x32xf32>
    %14 = vector.broadcast %13 : vector<1x32xf32> to vector<8x32xf32>
    %15 = arith.addf %12, %14 : vector<8x32xf32>
    %cst_15 = arith.constant 0.353553385 : f32
    %16 = vector.broadcast %cst_15 : f32 to vector<8x32xf32>
    %17 = arith.mulf %5, %16 : vector<8x32xf32>
    %c0_16 = arith.constant 0 : index
    %c0_17 = arith.constant 0 : index
    %c0_18 = arith.constant 0 : index
    %18 = vector.load %arg2[%c0_16, %c0_17, %c0_18] : memref<1x1x8xf32, #tpu.memory_space<vmem>>, vector<1x1x8xf32>
    %cst_19 = arith.constant 5.000000e-01 : f32
    %19 = vector.broadcast %cst_19 : f32 to vector<1x1x8xf32>
    %20 = arith.cmpf ogt, %18, %19 : vector<1x1x8xf32>
    %cst_20 = arith.constant -1.000000e+09 : f32
    %cst_21 = arith.constant 0.000000e+00 : f32
    %21 = vector.broadcast %cst_20 : f32 to vector<1x1x8xf32>
    %22 = vector.broadcast %cst_21 : f32 to vector<1x1x8xf32>
    %23 = arith.select %20, %21, %22 : vector<1x1x8xi1>, vector<1x1x8xf32>
    %24 = vector.shape_cast %23 : vector<1x1x8xf32> to vector<1x1x1x8xf32>
    %25 = vector.shape_cast %24 : vector<1x1x1x8xf32> to vector<1x1x1x8xf32>
    %26 = vector.broadcast %25 : vector<1x1x1x8xf32> to vector<4x1x1x8xf32>
    %27 = vector.shape_cast %26 : vector<4x1x1x8xf32> to vector<4x1x8xf32>
    %28 = vector.extract_strided_slice %17 {offsets = [0, 0], sizes = [8, 8], strides = [1, 1]} : vector<8x32xf32> to vector<8x8xf32>
    %29 = vector.shape_cast %28 : vector<8x8xf32> to vector<1x8x8xf32>
    %30 = vector.extract_strided_slice %17 {offsets = [0, 8], sizes = [8, 8], strides = [1, 1]} : vector<8x32xf32> to vector<8x8xf32>
    %31 = vector.shape_cast %30 : vector<8x8xf32> to vector<1x8x8xf32>
    %32 = vector.extract_strided_slice %17 {offsets = [0, 16], sizes = [8, 8], strides = [1, 1]} : vector<8x32xf32> to vector<8x8xf32>
    %33 = vector.shape_cast %32 : vector<8x8xf32> to vector<1x8x8xf32>
    %34 = vector.extract_strided_slice %17 {offsets = [0, 24], sizes = [8, 8], strides = [1, 1]} : vector<8x32xf32> to vector<8x8xf32>
    %35 = vector.shape_cast %34 : vector<8x8xf32> to vector<1x8x8xf32>
    %36 = tpu.concatenate %29, %31, %33, %35 in 0 : vector<1x8x8xf32>, vector<1x8x8xf32>, vector<1x8x8xf32>, vector<1x8x8xf32> -> vector<4x8x8xf32>
    %37 = vector.extract_strided_slice %10 {offsets = [0, 0], sizes = [8, 8], strides = [1, 1]} : vector<8x32xf32> to vector<8x8xf32>
    %38 = vector.shape_cast %37 : vector<8x8xf32> to vector<1x8x8xf32>
    %39 = vector.extract_strided_slice %10 {offsets = [0, 8], sizes = [8, 8], strides = [1, 1]} : vector<8x32xf32> to vector<8x8xf32>
    %40 = vector.shape_cast %39 : vector<8x8xf32> to vector<1x8x8xf32>
    %41 = vector.extract_strided_slice %10 {offsets = [0, 16], sizes = [8, 8], strides = [1, 1]} : vector<8x32xf32> to vector<8x8xf32>
    %42 = vector.shape_cast %41 : vector<8x8xf32> to vector<1x8x8xf32>
    %43 = vector.extract_strided_slice %10 {offsets = [0, 24], sizes = [8, 8], strides = [1, 1]} : vector<8x32xf32> to vector<8x8xf32>
    %44 = vector.shape_cast %43 : vector<8x8xf32> to vector<1x8x8xf32>
    %45 = tpu.concatenate %38, %40, %42, %44 in 0 : vector<1x8x8xf32>, vector<1x8x8xf32>, vector<1x8x8xf32>, vector<1x8x8xf32> -> vector<4x8x8xf32>
    %46 = vector.extract_strided_slice %15 {offsets = [0, 0], sizes = [8, 8], strides = [1, 1]} : vector<8x32xf32> to vector<8x8xf32>
    %47 = vector.shape_cast %46 : vector<8x8xf32> to vector<1x8x8xf32>
    %48 = vector.extract_strided_slice %15 {offsets = [0, 8], sizes = [8, 8], strides = [1, 1]} : vector<8x32xf32> to vector<8x8xf32>
    %49 = vector.shape_cast %48 : vector<8x8xf32> to vector<1x8x8xf32>
    %50 = vector.extract_strided_slice %15 {offsets = [0, 16], sizes = [8, 8], strides = [1, 1]} : vector<8x32xf32> to vector<8x8xf32>
    %51 = vector.shape_cast %50 : vector<8x8xf32> to vector<1x8x8xf32>
    %52 = vector.extract_strided_slice %15 {offsets = [0, 24], sizes = [8, 8], strides = [1, 1]} : vector<8x32xf32> to vector<8x8xf32>
    %53 = vector.shape_cast %52 : vector<8x8xf32> to vector<1x8x8xf32>
    %54 = tpu.concatenate %47, %49, %51, %53 in 0 : vector<1x8x8xf32>, vector<1x8x8xf32>, vector<1x8x8xf32>, vector<1x8x8xf32> -> vector<4x8x8xf32>
    "tpu.trace_start"() <{level = 10 : i32, message = "bqd,bkd->bqk"}> : () -> ()
    %cst_22 = arith.constant dense<0.000000e+00> : vector<4x8x8xf32>
    %55 = tpu.matmul %36, %45, %cst_22 {dimension_numbers = #tpu.dot_dimension_numbers<[2], [2], [1], [1], [0, 0, 0, 1, 1, 1], [0], [0]>} : vector<4x8x8xf32>, vector<4x8x8xf32>, vector<4x8x8xf32> -> vector<4x8x8xf32>
    "tpu.trace_stop"() : () -> ()
    %56 = vector.broadcast %27 : vector<4x1x8xf32> to vector<4x8x8xf32>
    %57 = arith.addf %55, %56 : vector<4x8x8xf32>
    %cst_23 = arith.constant dense<0xFF800000> : vector<4x8xf32>
    %58 = vector.multi_reduction <maximumf>, %57, %cst_23 [2] : vector<4x8x8xf32> to vector<4x8xf32>
    %59 = vector.shape_cast %58 : vector<4x8xf32> to vector<4x8x1xf32>
    %60 = vector.broadcast %59 : vector<4x8x1xf32> to vector<4x8x8xf32>
    %61 = arith.subf %57, %60 : vector<4x8x8xf32>
    %62 = math.exp %61 : vector<4x8x8xf32>
    %cst_24 = arith.constant dense<0.000000e+00> : vector<4x8xf32>
    %63 = vector.multi_reduction <add>, %62, %cst_24 [2] : vector<4x8x8xf32> to vector<4x8xf32>
    %64 = vector.shape_cast %63 : vector<4x8xf32> to vector<4x8x1xf32>
    %65 = tpu.reciprocal %64 : vector<4x8x1xf32> -> vector<4x8x1xf32>
    %66 = vector.broadcast %65 : vector<4x8x1xf32> to vector<4x8x8xf32>
    %67 = arith.mulf %62, %66 : vector<4x8x8xf32>
    "tpu.trace_start"() <{level = 10 : i32, message = "bqk,bkd->bqd"}> : () -> ()
    %cst_25 = arith.constant dense<0.000000e+00> : vector<4x8x8xf32>
    %68 = tpu.matmul %67, %54, %cst_25 {dimension_numbers = #tpu.dot_dimension_numbers<[2], [1], [1], [2], [0, 0, 0, 1, 1, 2], [0], [0]>} : vector<4x8x8xf32>, vector<4x8x8xf32>, vector<4x8x8xf32> -> vector<4x8x8xf32>
    "tpu.trace_stop"() : () -> ()
    %69 = vector.extract_strided_slice %68 {offsets = [0, 0, 0], sizes = [1, 8, 8], strides = [1, 1, 1]} : vector<4x8x8xf32> to vector<1x8x8xf32>
    %70 = vector.shape_cast %69 : vector<1x8x8xf32> to vector<8x8xf32>
    %71 = vector.extract_strided_slice %68 {offsets = [1, 0, 0], sizes = [1, 8, 8], strides = [1, 1, 1]} : vector<4x8x8xf32> to vector<1x8x8xf32>
    %72 = vector.shape_cast %71 : vector<1x8x8xf32> to vector<8x8xf32>
    %73 = vector.extract_strided_slice %68 {offsets = [2, 0, 0], sizes = [1, 8, 8], strides = [1, 1, 1]} : vector<4x8x8xf32> to vector<1x8x8xf32>
    %74 = vector.shape_cast %73 : vector<1x8x8xf32> to vector<8x8xf32>
    %75 = vector.extract_strided_slice %68 {offsets = [3, 0, 0], sizes = [1, 8, 8], strides = [1, 1, 1]} : vector<4x8x8xf32> to vector<1x8x8xf32>
    %76 = vector.shape_cast %75 : vector<1x8x8xf32> to vector<8x8xf32>
    %77 = tpu.concatenate %70, %72, %74, %76 in 1 : vector<8x8xf32>, vector<8x8xf32>, vector<8x8xf32>, vector<8x8xf32> -> vector<8x32xf32>
    %c0_26 = arith.constant 0 : index
    %c0_27 = arith.constant 0 : index
    %78 = vector.load %arg9[%c0_26, %c0_27] : memref<32x32xf32, #tpu.memory_space<vmem>>, vector<32x32xf32>
    %cst_28 = arith.constant dense<0.000000e+00> : vector<8x32xf32>
    %79 = tpu.matmul %77, %78, %cst_28 {dimension_numbers = #tpu.dot_dimension_numbers<[1], [0], [0], [1], [0, 0, 1, 1], [], []>} : vector<8x32xf32>, vector<32x32xf32>, vector<8x32xf32> -> vector<8x32xf32>
    %c0_29 = arith.constant 0 : index
    %c0_30 = arith.constant 0 : index
    %80 = vector.load %arg10[%c0_29, %c0_30] : memref<1x32xf32, #tpu.memory_space<vmem>>, vector<1x32xf32>
    %81 = vector.broadcast %80 : vector<1x32xf32> to vector<8x32xf32>
    %82 = arith.addf %79, %81 : vector<8x32xf32>
    %83 = arith.addf %0, %82 : vector<8x32xf32>
    %cst_31 = arith.constant dense<0.000000e+00> : vector<8xf32>
    %84 = vector.multi_reduction <add>, %83, %cst_31 [1] : vector<8x32xf32> to vector<8xf32>
    %85 = vector.shape_cast %84 : vector<8xf32> to vector<8x1xf32>
    %cst_32 = arith.constant 3.200000e+01 : f32
    %86 = vector.broadcast %cst_32 : f32 to vector<8x1xf32>
    %87 = arith.divf %85, %86 : vector<8x1xf32>
    %88 = vector.broadcast %87 : vector<8x1xf32> to vector<8x32xf32>
    %89 = arith.subf %83, %88 : vector<8x32xf32>
    %90 = arith.mulf %89, %89 : vector<8x32xf32>
    %cst_33 = arith.constant dense<0.000000e+00> : vector<8xf32>
    %91 = vector.multi_reduction <add>, %90, %cst_33 [1] : vector<8x32xf32> to vector<8xf32>
    %92 = vector.shape_cast %91 : vector<8xf32> to vector<8x1xf32>
    %cst_34 = arith.constant 0.0322580636 : f32
    %93 = vector.broadcast %cst_34 : f32 to vector<8x1xf32>
    %94 = arith.mulf %92, %93 : vector<8x1xf32>
    %95 = math.sqrt %94 : vector<8x1xf32>
    %c0_35 = arith.constant 0 : index
    %c0_36 = arith.constant 0 : index
    %96 = vector.load %arg15[%c0_35, %c0_36] : memref<1x32xf32, #tpu.memory_space<vmem>>, vector<1x32xf32>
    %97 = vector.broadcast %96 : vector<1x32xf32> to vector<8x32xf32>
    %98 = arith.mulf %97, %89 : vector<8x32xf32>
    %cst_37 = arith.constant 9.99999997E-7 : f32
    %99 = vector.broadcast %cst_37 : f32 to vector<8x1xf32>
    %100 = arith.addf %95, %99 : vector<8x1xf32>
    %101 = tpu.reciprocal %100 : vector<8x1xf32> -> vector<8x1xf32>
    %102 = vector.broadcast %101 : vector<8x1xf32> to vector<8x32xf32>
    %103 = arith.mulf %98, %102 : vector<8x32xf32>
    %c0_38 = arith.constant 0 : index
    %c0_39 = arith.constant 0 : index
    %104 = vector.load %arg16[%c0_38, %c0_39] : memref<1x32xf32, #tpu.memory_space<vmem>>, vector<1x32xf32>
    %105 = vector.broadcast %104 : vector<1x32xf32> to vector<8x32xf32>
    %106 = arith.addf %103, %105 : vector<8x32xf32>
    %cst_40 = arith.constant 0.000000e+00 : f32
    %107 = vector.broadcast %cst_40 : f32 to vector<8x32xf32>
    %c0_41 = arith.constant 0 : index
    %c0_42 = arith.constant 0 : index
    %108 = vector.load %arg11[%c0_41, %c0_42] : memref<32x64xf32, #tpu.memory_space<vmem>>, vector<32x64xf32>
    %cst_43 = arith.constant dense<0.000000e+00> : vector<8x64xf32>
    %109 = tpu.matmul %106, %108, %cst_43 {dimension_numbers = #tpu.dot_dimension_numbers<[1], [0], [0], [1], [0, 0, 1, 1], [], []>} : vector<8x32xf32>, vector<32x64xf32>, vector<8x64xf32> -> vector<8x64xf32>
    %c0_44 = arith.constant 0 : index
    %c0_45 = arith.constant 0 : index
    %110 = vector.load %arg12[%c0_44, %c0_45] : memref<1x64xf32, #tpu.memory_space<vmem>>, vector<1x64xf32>
    %111 = vector.broadcast %110 : vector<1x64xf32> to vector<8x64xf32>
    %112 = arith.addf %109, %111 : vector<8x64xf32>
    %cst_46 = arith.constant 0.000000e+00 : f32
    %113 = vector.broadcast %cst_46 : f32 to vector<8x64xf32>
    %114 = arith.maximumf %112, %113 : vector<8x64xf32>
    %c0_47 = arith.constant 0 : index
    %c0_48 = arith.constant 0 : index
    %115 = vector.load %arg13[%c0_47, %c0_48] : memref<64x32xf32, #tpu.memory_space<vmem>>, vector<64x32xf32>
    %cst_49 = arith.constant dense<0.000000e+00> : vector<8x32xf32>
    %116 = tpu.matmul %114, %115, %cst_49 {dimension_numbers = #tpu.dot_dimension_numbers<[1], [0], [0], [1], [0, 0, 1, 1], [], []>} : vector<8x64xf32>, vector<64x32xf32>, vector<8x32xf32> -> vector<8x32xf32>
    %117 = arith.addf %107, %116 : vector<8x32xf32>
    %c0_50 = arith.constant 0 : index
    %c0_51 = arith.constant 0 : index
    %118 = vector.load %arg14[%c0_50, %c0_51] : memref<1x32xf32, #tpu.memory_space<vmem>>, vector<1x32xf32>
    %119 = vector.broadcast %118 : vector<1x32xf32> to vector<8x32xf32>
    %120 = arith.addf %117, %119 : vector<8x32xf32>
    %121 = arith.addf %106, %120 : vector<8x32xf32>
    %cst_52 = arith.constant dense<0.000000e+00> : vector<8xf32>
    %122 = vector.multi_reduction <add>, %121, %cst_52 [1] : vector<8x32xf32> to vector<8xf32>
    %123 = vector.shape_cast %122 : vector<8xf32> to vector<8x1xf32>
    %cst_53 = arith.constant 3.200000e+01 : f32
    %124 = vector.broadcast %cst_53 : f32 to vector<8x1xf32>
    %125 = arith.divf %123, %124 : vector<8x1xf32>
    %126 = vector.broadcast %125 : vector<8x1xf32> to vector<8x32xf32>
    %127 = arith.subf %121, %126 : vector<8x32xf32>
    %128 = arith.mulf %127, %127 : vector<8x32xf32>
    %cst_54 = arith.constant dense<0.000000e+00> : vector<8xf32>
    %129 = vector.multi_reduction <add>, %128, %cst_54 [1] : vector<8x32xf32> to vector<8xf32>
    %130 = vector.shape_cast %129 : vector<8xf32> to vector<8x1xf32>
    %cst_55 = arith.constant 0.0322580636 : f32
    %131 = vector.broadcast %cst_55 : f32 to vector<8x1xf32>
    %132 = arith.mulf %130, %131 : vector<8x1xf32>
    %133 = math.sqrt %132 : vector<8x1xf32>
    %c0_56 = arith.constant 0 : index
    %c0_57 = arith.constant 0 : index
    %134 = vector.load %arg17[%c0_56, %c0_57] : memref<1x32xf32, #tpu.memory_space<vmem>>, vector<1x32xf32>
    %135 = vector.broadcast %134 : vector<1x32xf32> to vector<8x32xf32>
    %136 = arith.mulf %135, %127 : vector<8x32xf32>
    %cst_58 = arith.constant 9.99999997E-7 : f32
    %137 = vector.broadcast %cst_58 : f32 to vector<8x1xf32>
    %138 = arith.addf %133, %137 : vector<8x1xf32>
    %139 = tpu.reciprocal %138 : vector<8x1xf32> -> vector<8x1xf32>
    %140 = vector.broadcast %139 : vector<8x1xf32> to vector<8x32xf32>
    %141 = arith.mulf %136, %140 : vector<8x32xf32>
    %c0_59 = arith.constant 0 : index
    %c0_60 = arith.constant 0 : index
    %142 = vector.load %arg18[%c0_59, %c0_60] : memref<1x32xf32, #tpu.memory_space<vmem>>, vector<1x32xf32>
    %143 = vector.broadcast %142 : vector<1x32xf32> to vector<8x32xf32>
    %144 = arith.addf %141, %143 : vector<8x32xf32>
    %c0_61 = arith.constant 0 : index
    %c0_62 = arith.constant 0 : index
    %145 = vector.load %arg19[%c0_61, %c0_62] : memref<8x32xf32, #tpu.memory_space<vmem>>, vector<8x32xf32>
    tpu.vector_store %arg19[%c0_61, %c0_62], %144 {strides = array<i32>} : memref<8x32xf32, #tpu.memory_space<vmem>>, vector<8x32xf32>,
    return
  }
  func.func @transform_0(%arg0: i32) -> (i32, i32) {
    %c0_i32 = arith.constant 0 : i32
    %c0_i32_0 = arith.constant 0 : i32
    return %arg0, %c0_i32 : i32, i32
  }
  func.func @transform_1(%arg0: i32) -> (i32, i32, i32) {
    %c0_i32 = arith.constant 0 : i32
    %c0_i32_0 = arith.constant 0 : i32
    %c0_i32_1 = arith.constant 0 : i32
    return %arg0, %c0_i32, %c0_i32_0 : i32, i32, i32
  }
  func.func @transform_2(%arg0: i32) -> (i32, i32) {
    %c0_i32 = arith.constant 0 : i32
    %c0_i32_0 = arith.constant 0 : i32
    %c0_i32_1 = arith.constant 0 : i32
    return %c0_i32, %c0_i32_0 : i32, i32
  }
  func.func @transform_3(%arg0: i32) -> (i32, i32) {
    %c0_i32 = arith.constant 0 : i32
    %c0_i32_0 = arith.constant 0 : i32
    %c0_i32_1 = arith.constant 0 : i32
    return %c0_i32, %c0_i32_0 : i32, i32
  }
  func.func @transform_4(%arg0: i32) -> (i32, i32) {
    %c0_i32 = arith.constant 0 : i32
    %c0_i32_0 = arith.constant 0 : i32
    %c0_i32_1 = arith.constant 0 : i32
    return %c0_i32, %c0_i32_0 : i32, i32
  }
  func.func @transform_5(%arg0: i32) -> (i32, i32) {
    %c0_i32 = arith.constant 0 : i32
    %c0_i32_0 = arith.constant 0 : i32
    %c0_i32_1 = arith.constant 0 : i32
    return %c0_i32, %c0_i32_0 : i32, i32
  }
  func.func @transform_6(%arg0: i32) -> (i32, i32) {
    %c0_i32 = arith.constant 0 : i32
    %c0_i32_0 = arith.constant 0 : i32
    %c0_i32_1 = arith.constant 0 : i32
    return %c0_i32, %c0_i32_0 : i32, i32
  }
  func.func @transform_7(%arg0: i32) -> (i32, i32) {
    %c0_i32 = arith.constant 0 : i32
    %c0_i32_0 = arith.constant 0 : i32
    %c0_i32_1 = arith.constant 0 : i32
    return %c0_i32, %c0_i32_0 : i32, i32
  }
  func.func @transform_8(%arg0: i32) -> (i32, i32) {
    %c0_i32 = arith.constant 0 : i32
    %c0_i32_0 = arith.constant 0 : i32
    %c0_i32_1 = arith.constant 0 : i32
    return %c0_i32, %c0_i32_0 : i32, i32
  }
  func.func @transform_9(%arg0: i32) -> (i32, i32) {
    %c0_i32 = arith.constant 0 : i32
    %c0_i32_0 = arith.constant 0 : i32
    %c0_i32_1 = arith.constant 0 : i32
    return %c0_i32, %c0_i32_0 : i32, i32
  }
  func.func @transform_10(%arg0: i32) -> (i32, i32) {
    %c0_i32 = arith.constant 0 : i32
    %c0_i32_0 = arith.constant 0 : i32
    %c0_i32_1 = arith.constant 0 : i32
    return %c0_i32, %c0_i32_0 : i32, i32
  }
  func.func @transform_11(%arg0: i32) -> (i32, i32) {
    %c0_i32 = arith.constant 0 : i32
    %c0_i32_0 = arith.constant 0 : i32
    %c0_i32_1 = arith.constant 0 : i32
    return %c0_i32, %c0_i32_0 : i32, i32
  }
  func.func @transform_12(%arg0: i32) -> (i32, i32) {
    %c0_i32 = arith.constant 0 : i32
    %c0_i32_0 = arith.constant 0 : i32
    %c0_i32_1 = arith.constant 0 : i32
    return %c0_i32, %c0_i32_0 : i32, i32
  }
  func.func @transform_13(%arg0: i32) -> (i32, i32) {
    %c0_i32 = arith.constant 0 : i32
    %c0_i32_0 = arith.constant 0 : i32
    %c0_i32_1 = arith.constant 0 : i32
    return %c0_i32, %c0_i32_0 : i32, i32
  }
  func.func @transform_14(%arg0: i32) -> (i32, i32) {
    %c0_i32 = arith.constant 0 : i32
    %c0_i32_0 = arith.constant 0 : i32
    %c0_i32_1 = arith.constant 0 : i32
    return %c0_i32, %c0_i32_0 : i32, i32
  }
  func.func @transform_15(%arg0: i32) -> (i32, i32) {
    %c0_i32 = arith.constant 0 : i32
    %c0_i32_0 = arith.constant 0 : i32
    %c0_i32_1 = arith.constant 0 : i32
    return %c0_i32, %c0_i32_0 : i32, i32
  }
  func.func @transform_16(%arg0: i32) -> (i32, i32) {
    %c0_i32 = arith.constant 0 : i32
    %c0_i32_0 = arith.constant 0 : i32
    %c0_i32_1 = arith.constant 0 : i32
    return %c0_i32, %c0_i32_0 : i32, i32
  }
  func.func @transform_17(%arg0: i32) -> (i32, i32) {
    %c0_i32 = arith.constant 0 : i32
    %c0_i32_0 = arith.constant 0 : i32
    %c0_i32_1 = arith.constant 0 : i32
    return %c0_i32, %c0_i32_0 : i32, i32
  }
  func.func @transform_18(%arg0: i32) -> (i32, i32) {
    %c0_i32 = arith.constant 0 : i32
    %c0_i32_0 = arith.constant 0 : i32
    return %arg0, %c0_i32 : i32, i32
  }
}

module attributes {stable_mosaic.version = 11 : i64} {
  func.func @sa_kernel(%arg0: i32, %arg1: memref<8x32xf32, #tpu.memory_space<vmem>>, %arg2: memref<1x1x8xf32, #tpu.memory_space<vmem>>, %arg3: memref<32x32xf32, #tpu.memory_space<vmem>>, %arg4: memref<1x32xf32, #tpu.memory_space<vmem>>, %arg5: memref<32x32xf32, #tpu.memory_space<vmem>>, %arg6: memref<1x32xf32, #tpu.memory_space<vmem>>, %arg7: memref<32x32xf32, #tpu.memory_space<vmem>>, %arg8: memref<1x32xf32, #tpu.memory_space<vmem>>, %arg9: memref<32x32xf32, #tpu.memory_space<vmem>>, %arg10: memref<1x32xf32, #tpu.memory_space<vmem>>, %arg11: memref<32x64xf32, #tpu.memory_space<vmem>>, %arg12: memref<1x64xf32, #tpu.memory_space<vmem>>, %arg13: memref<64x32xf32, #tpu.memory_space<vmem>>, %arg14: memref<1x32xf32, #tpu.memory_space<vmem>>, %arg15: memref<1x32xf32, #tpu.memory_space<vmem>>, %arg16: memref<1x32xf32, #tpu.memory_space<vmem>>, %arg17: memref<1x32xf32, #tpu.memory_space<vmem>>, %arg18: memref<1x32xf32, #tpu.memory_space<vmem>>, %arg19: memref<8x32xf32, #tpu.memory_space<vmem>>) attributes {dimension_semantics = [#tpu.dimension_semantics<parallel>], iteration_bounds = array<i64: 2>, scalar_prefetch = 0 : i64, scratch_operands = 0 : i64, tpu.core_type = #tpu.core_type<tc>, window_params = [{transform_indices = @transform_0, window_bounds = array<i64: 8, 32>}, {transform_indices = @transform_1, window_bounds = array<i64: 1, 1, 8>}, {pipeline_mode = #tpu.pipeline_mode<synchronous>, transform_indices = @transform_2, window_bounds = array<i64: 32, 32>}, {pipeline_mode = #tpu.pipeline_mode<synchronous>, transform_indices = @transform_3, window_bounds = array<i64: 1, 32>}, {pipeline_mode = #tpu.pipeline_mode<synchronous>, transform_indices = @transform_4, window_bounds = array<i64: 32, 32>}, {pipeline_mode = #tpu.pipeline_mode<synchronous>, transform_indices = @transform_5, window_bounds = array<i64: 1, 32>}, {pipeline_mode = #tpu.pipeline_mode<synchronous>, transform_indices = @transform_6, window_bounds = array<i64: 32, 32>}, {pipeline_mode = #tpu.pipeline_mode<synchronous>, transform_indices = @transform_7, window_bounds = array<i64: 1, 32>}, {pipeline_mode = #tpu.pipeline_mode<synchronous>, transform_indices = @transform_8, window_bounds = array<i64: 32, 32>}, {pipeline_mode = #tpu.pipeline_mode<synchronous>, transform_indices = @transform_9, window_bounds = array<i64: 1, 32>}, {pipeline_mode = #tpu.pipeline_mode<synchronous>, transform_indices = @transform_10, window_bounds = array<i64: 32, 64>}, {pipeline_mode = #tpu.pipeline_mode<synchronous>, transform_indices = @transform_11, window_bounds = array<i64: 1, 64>}, {pipeline_mode = #tpu.pipeline_mode<synchronous>, transform_indices = @transform_12, window_bounds = array<i64: 64, 32>}, {pipeline_mode = #tpu.pipeline_mode<synchronous>, transform_indices = @transform_13, window_bounds = array<i64: 1, 32>}, {pipeline_mode = #tpu.pipeline_mode<synchronous>, transform_indices = @transform_14, window_bounds = array<i64: 1, 32>}, {pipeline_mode = #tpu.pipeline_mode<synchronous>, transform_indices = @transform_15, window_bounds = array<i64: 1, 32>}, {pipeline_mode = #tpu.pipeline_mode<synchronous>, transform_indices = @transform_16, window_bounds = array<i64: 1, 32>}, {pipeline_mode = #tpu.pipeline_mode<synchronous>, transform_indices = @transform_17, window_bounds = array<i64: 1, 32>}, {transform_indices = @transform_18, window_bounds = array<i64: 8, 32>}]} {
    %c0 = arith.constant 0 : index
    %c0_0 = arith.constant 0 : index
    %0 = vector.load %arg1[%c0, %c0_0] : memref<8x32xf32, #tpu.memory_space<vmem>>, vector<8x32xf32>
    %c0_1 = arith.constant 0 : index
    %c0_2 = arith.constant 0 : index
    %1 = vector.load %arg3[%c0_1, %c0_2] : memref<32x32xf32, #tpu.memory_space<vmem>>, vector<32x32xf32>
    %cst = arith.constant dense<0.000000e+00> : vector<8x32xf32>
    %2 = tpu.matmul %0, %1, %cst {dimension_numbers = #tpu.dot_dimension_numbers<[1], [0], [0], [1], [0, 0, 1, 1], [], []>} : vector<8x32xf32>, vector<32x32xf32>, vector<8x32xf32> -> vector<8x32xf32>
    %c0_3 = arith.constant 0 : index
    %c0_4 = arith.constant 0 : index
    %3 = vector.load %arg4[%c0_3, %c0_4] : memref<1x32xf32, #tpu.memory_space<vmem>>, vector<1x32xf32>
    %4 = vector.broadcast %3 : vector<1x32xf32> to vector<8x32xf32>
    %5 = arith.addf %2, %4 : vector<8x32xf32>
    %c0_5 = arith.constant 0 : index
    %c0_6 = arith.constant 0 : index
    %6 = vector.load %arg5[%c0_5, %c0_6] : memref<32x32xf32, #tpu.memory_space<vmem>>, vector<32x32xf32>
    %cst_7 = arith.constant dense<0.000000e+00> : vector<8x32xf32>
    %7 = tpu.matmul %0, %6, %cst_7 {dimension_numbers = #tpu.dot_dimension_numbers<[1], [0], [0], [1], [0, 0, 1, 1], [], []>} : vector<8x32xf32>, vector<32x32xf32>, vector<8x32xf32> -> vector<8x32xf32>
    %c0_8 = arith.constant 0 : index
    %c0_9 = arith.constant 0 : index
    %8 = vector.load %arg6[%c0_8, %c0_9] : memref<1x32xf32, #tpu.memory_space<vmem>>, vector<1x32xf32>
    %9 = vector.broadcast %8 : vector<1x32xf32> to vector<8x32xf32>
    %10 = arith.addf %7, %9 : vector<8x32xf32>
    %c0_10 = arith.constant 0 : index
    %c0_11 = arith.constant 0 : index
    %11 = vector.load %arg7[%c0_10, %c0_11] : memref<32x32xf32, #tpu.memory_space<vmem>>, vector<32x32xf32>
    %cst_12 = arith.constant dense<0.000000e+00> : vector<8x32xf32>
    %12 = tpu.matmul %0, %11, %cst_12 {dimension_numbers = #tpu.dot_dimension_numbers<[1], [0], [0], [1], [0, 0, 1, 1], [], []>} : vector<8x32xf32>, vector<32x32xf32>, vector<8x32xf32> -> vector<8x32xf32>
    %c0_13 = arith.constant 0 : index
    %c0_14 = arith.constant 0 : index
    %13 = vector.load %arg8[%c0_13, %c0_14] : memref<1x32xf32, #tpu.memory_space<vmem>>, vector<1x32xf32>
    %14 = vector.broadcast %13 : vector<1x32xf32> to vector<8x32xf32>
    %15 = arith.addf %12, %14 : vector<8x32xf32>
    %cst_15 = arith.constant 0.353553385 : f32
    %16 = vector.broadcast %cst_15 : f32 to vector<8x32xf32>
    %17 = arith.mulf %5, %16 : vector<8x32xf32>
    %c0_16 = arith.constant 0 : index
    %c0_17 = arith.constant 0 : index
    %c0_18 = arith.constant 0 : index
    %18 = vector.load %arg2[%c0_16, %c0_17, %c0_18] : memref<1x1x8xf32, #tpu.memory_space<vmem>>, vector<1x1x8xf32>
    %cst_19 = arith.constant 5.000000e-01 : f32
    %19 = vector.broadcast %cst_19 : f32 to vector<1x1x8xf32>
    %20 = arith.cmpf ogt, %18, %19 : vector<1x1x8xf32>
    %cst_20 = arith.constant -1.000000e+09 : f32
    %cst_21 = arith.constant 0.000000e+00 : f32
    %21 = vector.broadcast %cst_20 : f32 to vector<1x1x8xf32>
    %22 = vector.broadcast %cst_21 : f32 to vector<1x1x8xf32>
    %23 = arith.select %20, %21, %22 : vector<1x1x8xi1>, vector<1x1x8xf32>
    %24 = vector.shape_cast %23 : vector<1x1x8xf32> to vector<1x1x1x8xf32>
    %25 = vector.shape_cast %24 : vector<1x1x1x8xf32> to vector<1x1x1x8xf32>
    %26 = vector.broadcast %25 : vector<1x1x1x8xf32> to vector<4x1x1x8xf32>
    %27 = vector.shape_cast %26 : vector<4x1x1x8xf32> to vector<4x1x8xf32>
    %28 = vector.extract_strided_slice %17 {offsets = [0, 0], sizes = [8, 8], strides = [1, 1]} : vector<8x32xf32> to vector<8x8xf32>
    %29 = vector.shape_cast %28 : vector<8x8xf32> to vector<1x8x8xf32>
    %30 = vector.extract_strided_slice %17 {offsets = [0, 8], sizes = [8, 8], strides = [1, 1]} : vector<8x32xf32> to vector<8x8xf32>
    %31 = vector.shape_cast %30 : vector<8x8xf32> to vector<1x8x8xf32>
    %32 = vector.extract_strided_slice %17 {offsets = [0, 16], sizes = [8, 8], strides = [1, 1]} : vector<8x32xf32> to vector<8x8xf32>
    %33 = vector.shape_cast %32 : vector<8x8xf32> to vector<1x8x8xf32>
    %34 = vector.extract_strided_slice %17 {offsets = [0, 24], sizes = [8, 8], strides = [1, 1]} : vector<8x32xf32> to vector<8x8xf32>
    %35 = vector.shape_cast %34 : vector<8x8xf32> to vector<1x8x8xf32>
    %36 = tpu.concatenate %29, %31, %33, %35 in 0 : vector<1x8x8xf32>, vector<1x8x8xf32>, vector<1x8x8xf32>, vector<1x8x8xf32> -> vector<4x8x8xf32>
    %37 = vector.extract_strided_slice %10 {offsets = [0, 0], sizes = [8, 8], strides = [1, 1]} : vector<8x32xf32> to vector<8x8xf32>
    %38 = vector.shape_cast %37 : vector<8x8xf32> to vector<1x8x8xf32>
    %39 = vector.extract_strided_slice %10 {offsets = [0, 8], sizes = [8, 8], strides = [1, 1]} : vector<8x32xf32> to vector<8x8xf32>
    %40 = vector.shape_cast %39 : vector<8x8xf32> to vector<1x8x8xf32>
    %41 = vector.extract_strided_slice %10 {offsets = [0, 16], sizes = [8, 8], strides = [1, 1]} : vector<8x32xf32> to vector<8x8xf32>
    %42 = vector.shape_cast %41 : vector<8x8xf32> to vector<1x8x8xf32>
    %43 = vector.extract_strided_slice %10 {offsets = [0, 24], sizes = [8, 8], strides = [1, 1]} : vector<8x32xf32> to vector<8x8xf32>
    %44 = vector.shape_cast %43 : vector<8x8xf32> to vector<1x8x8xf32>
    %45 = tpu.concatenate %38, %40, %42, %44 in 0 : vector<1x8x8xf32>, vector<1x8x8xf32>, vector<1x8x8xf32>, vector<1x8x8xf32> -> vector<4x8x8xf32>
    %46 = vector.extract_strided_slice %15 {offsets = [0, 0], sizes = [8, 8], strides = [1, 1]} : vector<8x32xf32> to vector<8x8xf32>
    %47 = vector.shape_cast %46 : vector<8x8xf32> to vector<1x8x8xf32>
    %48 = vector.extract_strided_slice %15 {offsets = [0, 8], sizes = [8, 8], strides = [1, 1]} : vector<8x32xf32> to vector<8x8xf32>
    %49 = vector.shape_cast %48 : vector<8x8xf32> to vector<1x8x8xf32>
    %50 = vector.extract_strided_slice %15 {offsets = [0, 16], sizes = [8, 8], strides = [1, 1]} : vector<8x32xf32> to vector<8x8xf32>
    %51 = vector.shape_cast %50 : vector<8x8xf32> to vector<1x8x8xf32>
    %52 = vector.extract_strided_slice %15 {offsets = [0, 24], sizes = [8, 8], strides = [1, 1]} : vector<8x32xf32> to vector<8x8xf32>
    %53 = vector.shape_cast %52 : vector<8x8xf32> to vector<1x8x8xf32>
    %54 = tpu.concatenate %47, %49, %51, %53 in 0 : vector<1x8x8xf32>, vector<1x8x8xf32>, vector<1x8x8xf32>, vector<1x8x8xf32> -> vector<4x8x8xf32>
    "tpu.trace_start"() <{level = 10 : i32, message = "bqd,bkd->bqk"}> : () -> ()
    %cst_22 = arith.constant dense<0.000000e+00> : vector<4x8x8xf32>
    %55 = tpu.matmul %36, %45, %cst_22 {dimension_numbers = #tpu.dot_dimension_numbers<[2], [2], [1], [1], [0, 0, 0, 1, 1, 1], [0], [0]>} : vector<4x8x8xf32>, vector<4x8x8xf32>, vector<4x8x8xf32> -> vector<4x8x8xf32>
    "tpu.trace_stop"() : () -> ()
    %56 = vector.broadcast %27 : vector<4x1x8xf32> to vector<4x8x8xf32>
    %57 = arith.addf %55, %56 : vector<4x8x8xf32>
    %cst_23 = arith.constant dense<0xFF800000> : vector<4x8xf32>
    %58 = vector.multi_reduction <maximumf>, %57, %cst_23 [2] : vector<4x8x8xf32> to vector<4x8xf32>
    %59 = vector.shape_cast %58 : vector<4x8xf32> to vector<4x8x1xf32>
    %60 = vector.broadcast %59 : vector<4x8x1xf32> to vector<4x8x8xf32>
    %61 = arith.subf %57, %60 : vector<4x8x8xf32>
    %62 = math.exp %61 : vector<4x8x8xf32>
    %cst_24 = arith.constant dense<0.000000e+00> : vector<4x8xf32>
    %63 = vector.multi_reduction <add>, %62, %cst_24 [2] : vector<4x8x8xf32> to vector<4x8xf32>
    %64 = vector.shape_cast %63 : vector<4x8xf32> to vector<4x8x1xf32>
    %65 = tpu.reciprocal %64 : vector<4x8x1xf32> -> vector<4x8x1xf32>
    %66 = vector.broadcast %65 : vector<4x8x1xf32> to vector<4x8x8xf32>
    %67 = arith.mulf %62, %66 : vector<4x8x8xf32>
    "tpu.trace_start"() <{level = 10 : i32, message = "bqk,bkd->bqd"}> : () -> ()
    %cst_25 = arith.constant dense<0.000000e+00> : vector<4x8x8xf32>
    %68 = tpu.matmul %67, %54, %cst_25 {dimension_numbers = #tpu.dot_dimension_numbers<[2], [1], [1], [2], [0, 0, 0, 1, 1, 2], [0], [0]>} : vector<4x8x8xf32>, vector<4x8x8xf32>, vector<4x8x8xf32> -> vector<4x8x8xf32>
    "tpu.trace_stop"() : () -> ()
    %69 = vector.extract_strided_slice %68 {offsets = [0, 0, 0], sizes = [1, 8, 8], strides = [1, 1, 1]} : vector<4x8x8xf32> to vector<1x8x8xf32>
    %70 = vector.shape_cast %69 : vector<1x8x8xf32> to vector<8x8xf32>
    %71 = vector.extract_strided_slice %68 {offsets = [1, 0, 0], sizes = [1, 8, 8], strides = [1, 1, 1]} : vector<4x8x8xf32> to vector<1x8x8xf32>
    %72 = vector.shape_cast %71 : vector<1x8x8xf32> to vector<8x8xf32>
    %73 = vector.extract_strided_slice %68 {offsets = [2, 0, 0], sizes = [1, 8, 8], strides = [1, 1, 1]} : vector<4x8x8xf32> to vector<1x8x8xf32>
    %74 = vector.shape_cast %73 : vector<1x8x8xf32> to vector<8x8xf32>
    %75 = vector.extract_strided_slice %68 {offsets = [3, 0, 0], sizes = [1, 8, 8], strides = [1, 1, 1]} : vector<4x8x8xf32> to vector<1x8x8xf32>
    %76 = vector.shape_cast %75 : vector<1x8x8xf32> to vector<8x8xf32>
    %77 = tpu.concatenate %70, %72, %74, %76 in 1 : vector<8x8xf32>, vector<8x8xf32>, vector<8x8xf32>, vector<8x8xf32> -> vector<8x32xf32>
    %c0_26 = arith.constant 0 : index
    %c0_27 = arith.constant 0 : index
    %78 = vector.load %arg9[%c0_26, %c0_27] : memref<32x32xf32, #tpu.memory_space<vmem>>, vector<32x32xf32>
    %cst_28 = arith.constant dense<0.000000e+00> : vector<8x32xf32>
    %79 = tpu.matmul %77, %78, %cst_28 {dimension_numbers = #tpu.dot_dimension_numbers<[1], [0], [0], [1], [0, 0, 1, 1], [], []>} : vector<8x32xf32>, vector<32x32xf32>, vector<8x32xf32> -> vector<8x32xf32>
    %c0_29 = arith.constant 0 : index
    %c0_30 = arith.constant 0 : index
    %80 = vector.load %arg10[%c0_29, %c0_30] : memref<1x32xf32, #tpu.memory_space<vmem>>, vector<1x32xf32>
    %81 = vector.broadcast %80 : vector<1x32xf32> to vector<8x32xf32>
    %82 = arith.addf %79, %81 : vector<8x32xf32>
    %83 = arith.addf %0, %82 : vector<8x32xf32>
    %cst_31 = arith.constant dense<0.000000e+00> : vector<8xf32>
    %84 = vector.multi_reduction <add>, %83, %cst_31 [1] : vector<8x32xf32> to vector<8xf32>
    %85 = vector.shape_cast %84 : vector<8xf32> to vector<8x1xf32>
    %cst_32 = arith.constant 3.200000e+01 : f32
    %86 = vector.broadcast %cst_32 : f32 to vector<8x1xf32>
    %87 = arith.divf %85, %86 : vector<8x1xf32>
    %88 = vector.broadcast %87 : vector<8x1xf32> to vector<8x32xf32>
    %89 = arith.subf %83, %88 : vector<8x32xf32>
    %90 = arith.mulf %89, %89 : vector<8x32xf32>
    %cst_33 = arith.constant dense<0.000000e+00> : vector<8xf32>
    %91 = vector.multi_reduction <add>, %90, %cst_33 [1] : vector<8x32xf32> to vector<8xf32>
    %92 = vector.shape_cast %91 : vector<8xf32> to vector<8x1xf32>
    %cst_34 = arith.constant 0.0322580636 : f32
    %93 = vector.broadcast %cst_34 : f32 to vector<8x1xf32>
    %94 = arith.mulf %92, %93 : vector<8x1xf32>
    %95 = math.sqrt %94 : vector<8x1xf32>
    %c0_35 = arith.constant 0 : index
    %c0_36 = arith.constant 0 : index
    %96 = vector.load %arg15[%c0_35, %c0_36] : memref<1x32xf32, #tpu.memory_space<vmem>>, vector<1x32xf32>
    %97 = vector.broadcast %96 : vector<1x32xf32> to vector<8x32xf32>
    %98 = arith.mulf %97, %89 : vector<8x32xf32>
    %cst_37 = arith.constant 9.99999997E-7 : f32
    %99 = vector.broadcast %cst_37 : f32 to vector<8x1xf32>
    %100 = arith.addf %95, %99 : vector<8x1xf32>
    %101 = tpu.reciprocal %100 : vector<8x1xf32> -> vector<8x1xf32>
    %102 = vector.broadcast %101 : vector<8x1xf32> to vector<8x32xf32>
    %103 = arith.mulf %98, %102 : vector<8x32xf32>
    %c0_38 = arith.constant 0 : index
    %c0_39 = arith.constant 0 : index
    %104 = vector.load %arg16[%c0_38, %c0_39] : memref<1x32xf32, #tpu.memory_space<vmem>>, vector<1x32xf32>
    %105 = vector.broadcast %104 : vector<1x32xf32> to vector<8x32xf32>
    %106 = arith.addf %103, %105 : vector<8x32xf32>
    %cst_40 = arith.constant 0.000000e+00 : f32
    %107 = vector.broadcast %cst_40 : f32 to vector<8x32xf32>
    %c0_41 = arith.constant 0 : index
    %c0_42 = arith.constant 0 : index
    %108 = vector.load %arg11[%c0_41, %c0_42] : memref<32x64xf32, #tpu.memory_space<vmem>>, vector<32x64xf32>
    %cst_43 = arith.constant dense<0.000000e+00> : vector<8x64xf32>
    %109 = tpu.matmul %106, %108, %cst_43 {dimension_numbers = #tpu.dot_dimension_numbers<[1], [0], [0], [1], [0, 0, 1, 1], [], []>} : vector<8x32xf32>, vector<32x64xf32>, vector<8x64xf32> -> vector<8x64xf32>
    %c0_44 = arith.constant 0 : index
    %c0_45 = arith.constant 0 : index
    %110 = vector.load %arg12[%c0_44, %c0_45] : memref<1x64xf32, #tpu.memory_space<vmem>>, vector<1x64xf32>
    %111 = vector.broadcast %110 : vector<1x64xf32> to vector<8x64xf32>
    %112 = arith.addf %109, %111 : vector<8x64xf32>
    %cst_46 = arith.constant 0.000000e+00 : f32
    %113 = vector.broadcast %cst_46 : f32 to vector<8x64xf32>
    %114 = arith.maximumf %112, %113 : vector<8x64xf32>
    %c0_47 = arith.constant 0 : index
    %c0_48 = arith.constant 0 : index
    %115 = vector.load %arg13[%c0_47, %c0_48] : memref<64x32xf32, #tpu.memory_space<vmem>>, vector<64x32xf32>
    %cst_49 = arith.constant dense<0.000000e+00> : vector<8x32xf32>
    %116 = tpu.matmul %114, %115, %cst_49 {dimension_numbers = #tpu.dot_dimension_numbers<[1], [0], [0], [1], [0, 0, 1, 1], [], []>} : vector<8x64xf32>, vector<64x32xf32>, vector<8x32xf32> -> vector<8x32xf32>
    %117 = arith.addf %107, %116 : vector<8x32xf32>
    %c0_50 = arith.constant 0 : index
    %c0_51 = arith.constant 0 : index
    %118 = vector.load %arg14[%c0_50, %c0_51] : memref<1x32xf32, #tpu.memory_space<vmem>>, vector<1x32xf32>
    %119 = vector.broadcast %118 : vector<1x32xf32> to vector<8x32xf32>
    %120 = arith.addf %117, %119 : vector<8x32xf32>
    %121 = arith.addf %106, %120 : vector<8x32xf32>
    %cst_52 = arith.constant dense<0.000000e+00> : vector<8xf32>
    %122 = vector.multi_reduction <add>, %121, %cst_52 [1] : vector<8x32xf32> to vector<8xf32>
    %123 = vector.shape_cast %122 : vector<8xf32> to vector<8x1xf32>
    %cst_53 = arith.constant 3.200000e+01 : f32
    %124 = vector.broadcast %cst_53 : f32 to vector<8x1xf32>
    %125 = arith.divf %123, %124 : vector<8x1xf32>
    %126 = vector.broadcast %125 : vector<8x1xf32> to vector<8x32xf32>
    %127 = arith.subf %121, %126 : vector<8x32xf32>
    %128 = arith.mulf %127, %127 : vector<8x32xf32>
    %cst_54 = arith.constant dense<0.000000e+00> : vector<8xf32>
    %129 = vector.multi_reduction <add>, %128, %cst_54 [1] : vector<8x32xf32> to vector<8xf32>
    %130 = vector.shape_cast %129 : vector<8xf32> to vector<8x1xf32>
    %cst_55 = arith.constant 0.0322580636 : f32
    %131 = vector.broadcast %cst_55 : f32 to vector<8x1xf32>
    %132 = arith.mulf %130, %131 : vector<8x1xf32>
    %133 = math.sqrt %132 : vector<8x1xf32>
    %c0_56 = arith.constant 0 : index
    %c0_57 = arith.constant 0 : index
    %134 = vector.load %arg17[%c0_56, %c0_57] : memref<1x32xf32, #tpu.memory_space<vmem>>, vector<1x32xf32>
    %135 = vector.broadcast %134 : vector<1x32xf32> to vector<8x32xf32>
    %136 = arith.mulf %135, %127 : vector<8x32xf32>
    %cst_58 = arith.constant 9.99999997E-7 : f32
    %137 = vector.broadcast %cst_58 : f32 to vector<8x1xf32>
    %138 = arith.addf %133, %137 : vector<8x1xf32>
    %139 = tpu.reciprocal %138 : vector<8x1xf32> -> vector<8x1xf32>
    %140 = vector.broadcast %139 : vector<8x1xf32> to vector<8x32xf32>
    %141 = arith.mulf %136, %140 : vector<8x32xf32>
    %c0_59 = arith.constant 0 : index
    %c0_60 = arith.constant 0 : index
    %142 = vector.load %arg18[%c0_59, %c0_60] : memref<1x32xf32, #tpu.memory_space<vmem>>, vector<1x32xf32>
    %143 = vector.broadcast %142 : vector<1x32xf32> to vector<8x32xf32>
    %144 = arith.addf %141, %143 : vector<8x32xf32>
    %c0_61 = arith.constant 0 : index
    %c0_62 = arith.constant 0 : index
    %145 = vector.load %arg19[%c0_61, %c0_62] : memref<8x32xf32, #tpu.memory_space<vmem>>, vector<8x32xf32>
    tpu.vector_store %arg19[%c0_61, %c0_62], %144 {strides = array<i32>} : memref<8x32xf32, #tpu.memory_space<vmem>>, vector<8x32xf32>,
    return
  }
  func.func @transform_0(%arg0: i32) -> (i32, i32) {
    %c0_i32 = arith.constant 0 : i32
    %c0_i32_0 = arith.constant 0 : i32
    return %arg0, %c0_i32 : i32, i32
  }
  func.func @transform_1(%arg0: i32) -> (i32, i32, i32) {
    %c0_i32 = arith.constant 0 : i32
    %c0_i32_0 = arith.constant 0 : i32
    %c0_i32_1 = arith.constant 0 : i32
    return %arg0, %c0_i32, %c0_i32_0 : i32, i32, i32
  }
  func.func @transform_2(%arg0: i32) -> (i32, i32) {
    %c0_i32 = arith.constant 0 : i32
    %c0_i32_0 = arith.constant 0 : i32
    %c0_i32_1 = arith.constant 0 : i32
    return %c0_i32, %c0_i32_0 : i32, i32
  }
  func.func @transform_3(%arg0: i32) -> (i32, i32) {
    %c0_i32 = arith.constant 0 : i32
    %c0_i32_0 = arith.constant 0 : i32
    %c0_i32_1 = arith.constant 0 : i32
    return %c0_i32, %c0_i32_0 : i32, i32
  }
  func.func @transform_4(%arg0: i32) -> (i32, i32) {
    %c0_i32 = arith.constant 0 : i32
    %c0_i32_0 = arith.constant 0 : i32
    %c0_i32_1 = arith.constant 0 : i32
    return %c0_i32, %c0_i32_0 : i32, i32
  }
  func.func @transform_5(%arg0: i32) -> (i32, i32) {
    %c0_i32 = arith.constant 0 : i32
    %c0_i32_0 = arith.constant 0 : i32
    %c0_i32_1 = arith.constant 0 : i32
    return %c0_i32, %c0_i32_0 : i32, i32
  }
  func.func @transform_6(%arg0: i32) -> (i32, i32) {
    %c0_i32 = arith.constant 0 : i32
    %c0_i32_0 = arith.constant 0 : i32
    %c0_i32_1 = arith.constant 0 : i32
    return %c0_i32, %c0_i32_0 : i32, i32
  }
  func.func @transform_7(%arg0: i32) -> (i32, i32) {
    %c0_i32 = arith.constant 0 : i32
    %c0_i32_0 = arith.constant 0 : i32
    %c0_i32_1 = arith.constant 0 : i32
    return %c0_i32, %c0_i32_0 : i32, i32
  }
  func.func @transform_8(%arg0: i32) -> (i32, i32) {
    %c0_i32 = arith.constant 0 : i32
    %c0_i32_0 = arith.constant 0 : i32
    %c0_i32_1 = arith.constant 0 : i32
    return %c0_i32, %c0_i32_0 : i32, i32
  }
  func.func @transform_9(%arg0: i32) -> (i32, i32) {
    %c0_i32 = arith.constant 0 : i32
    %c0_i32_0 = arith.constant 0 : i32
    %c0_i32_1 = arith.constant 0 : i32
    return %c0_i32, %c0_i32_0 : i32, i32
  }
  func.func @transform_10(%arg0: i32) -> (i32, i32) {
    %c0_i32 = arith.constant 0 : i32
    %c0_i32_0 = arith.constant 0 : i32
    %c0_i32_1 = arith.constant 0 : i32
    return %c0_i32, %c0_i32_0 : i32, i32
  }
  func.func @transform_11(%arg0: i32) -> (i32, i32) {
    %c0_i32 = arith.constant 0 : i32
    %c0_i32_0 = arith.constant 0 : i32
    %c0_i32_1 = arith.constant 0 : i32
    return %c0_i32, %c0_i32_0 : i32, i32
  }
  func.func @transform_12(%arg0: i32) -> (i32, i32) {
    %c0_i32 = arith.constant 0 : i32
    %c0_i32_0 = arith.constant 0 : i32
    %c0_i32_1 = arith.constant 0 : i32
    return %c0_i32, %c0_i32_0 : i32, i32
  }
  func.func @transform_13(%arg0: i32) -> (i32, i32) {
    %c0_i32 = arith.constant 0 : i32
    %c0_i32_0 = arith.constant 0 : i32
    %c0_i32_1 = arith.constant 0 : i32
    return %c0_i32, %c0_i32_0 : i32, i32
  }
  func.func @transform_14(%arg0: i32) -> (i32, i32) {
    %c0_i32 = arith.constant 0 : i32
    %c0_i32_0 = arith.constant 0 : i32
    %c0_i32_1 = arith.constant 0 : i32
    return %c0_i32, %c0_i32_0 : i32, i32
  }
  func.func @transform_15(%arg0: i32) -> (i32, i32) {
    %c0_i32 = arith.constant 0 : i32
    %c0_i32_0 = arith.constant 0 : i32
    %c0_i32_1 = arith.constant 0 : i32
    return %c0_i32, %c0_i32_0 : i32, i32
  }
  func.func @transform_16(%arg0: i32) -> (i32, i32) {
    %c0_i32 = arith.constant 0 : i32
    %c0_i32_0 = arith.constant 0 : i32
    %c0_i32_1 = arith.constant 0 : i32
    return %c0_i32, %c0_i32_0 : i32, i32
  }
  func.func @transform_17(%arg0: i32) -> (i32, i32) {
    %c0_i32 = arith.constant 0 : i32
    %c0_i32_0 = arith.constant 0 : i32
    %c0_i32_1 = arith.constant 0 : i32
    return %c0_i32, %c0_i32_0 : i32, i32
  }
  func.func @transform_18(%arg0: i32) -> (i32, i32) {
    %c0_i32 = arith.constant 0 : i32
    %c0_i32_0 = arith.constant 0 : i32
    return %arg0, %c0_i32 : i32, i32
  }
}

</mosaic_0001>

<llo_original>
// kernel: tpu_custom_call.1
$region0: #{tpu_custom_call.1}
  #allocation0 [shape = 'u32[]', space=smem, size = 0x4, offset = 0x4, fixed_abs, tag = 'smem constant byte address 0x4 - core index']
  #allocation1 [shape = 'u32[72,128]{1,0:T(1,128)}', space=vmem, size = 0x9000, scoped, tag = 'internal scratch']
  %s0 = inlined_call_operand.hbm [shape: f32[16,32], index: 0, kind: input, shape index: {}]
  %s1 = inlined_call_operand.hbm [shape: f32[2,1,8], index: 1, kind: input, shape index: {}]
  %s2 = inlined_call_operand.vmem [shape: f32[32,32], index: 2, kind: input, shape index: {}]
  %s3 = inlined_call_operand.vmem [shape: f32[1,32], index: 3, kind: input, shape index: {}]
  %s4 = inlined_call_operand.vmem [shape: f32[32,32], index: 4, kind: input, shape index: {}]
  %s5 = inlined_call_operand.vmem [shape: f32[1,32], index: 5, kind: input, shape index: {}]
  %s6 = inlined_call_operand.vmem [shape: f32[32,32], index: 6, kind: input, shape index: {}]
  %s7 = inlined_call_operand.vmem [shape: f32[1,32], index: 7, kind: input, shape index: {}]
  %s8 = inlined_call_operand.hbm [shape: f32[32,32], index: 8, kind: input, shape index: {}]
  %s9 = inlined_call_operand.vmem [shape: f32[1,32], index: 9, kind: input, shape index: {}]
  %s10 = inlined_call_operand.hbm [shape: f32[32,64], index: 10, kind: input, shape index: {}]
  %s11 = inlined_call_operand.vmem [shape: f32[1,64], index: 11, kind: input, shape index: {}]
  %s12 = inlined_call_operand.vmem [shape: f32[64,32], index: 12, kind: input, shape index: {}]
  %s13 = inlined_call_operand.vmem [shape: f32[1,32], index: 13, kind: input, shape index: {}]
  %s14 = inlined_call_operand.vmem [shape: f32[1,32], index: 14, kind: input, shape index: {}]
  %s15 = inlined_call_operand.vmem [shape: f32[1,32], index: 15, kind: input, shape index: {}]
  %s16 = inlined_call_operand.vmem [shape: f32[1,32], index: 16, kind: input, shape index: {}]
  %s17 = inlined_call_operand.vmem [shape: f32[1,32], index: 17, kind: input, shape index: {}]
  %s18 = inlined_call_operand.hbm [shape: f32[16,32], index: 18, kind: output, shape index: {}]
  %s19 = sld [smem:[#allocation0]]
  $region121: #{tpu_custom_call.1} parent=0
    _
  %s21 = ssub.s32 1, %s19
  %s22 = scalar_select 0, %s21, %s19
  $region1: #{tpu_custom_call.1} parent=0
    #allocation2 [shape = 'u8[8192]{0}', space=vmem, size = 0x2000, scoped, tag = 'input window, operand 0']
    #allocation3 [shape = 's32[2]{0}', space=sflag, size = 0x8, scoped, tag = 'scoped memory for tpu_custom_call.1']
    #allocation4 [shape = 's32[2]{0}', space=sflag, size = 0x8, scoped, tag = 'scoped memory for tpu_custom_call.1']
    #allocation5 [shape = 'u8[1024]{0}', space=vmem, size = 0x400, scoped, tag = 'input window, operand 1']
    #allocation6 [shape = 's32[2]{0}', space=sflag, size = 0x8, scoped, tag = 'scoped memory for tpu_custom_call.1']
    #allocation7 [shape = 'u8[16384]{0}', space=vmem, size = 0x4000, scoped, tag = 'input window, operand 8, single buffered']
    #allocation8 [shape = 'u8[16384]{0}', space=vmem, size = 0x4000, scoped, tag = 'input window, operand 10, single buffered']
    #allocation9 [shape = 's32[1]{0}', space=sflag, size = 0x4, scoped, tag = 'scoped memory for tpu_custom_call.1']
    #allocation10 [shape = 'u8[8192]{0}', space=vmem, size = 0x2000, scoped, tag = 'output window, operand 0']
    %23 = vsyncpa [#allocation3], 0
    %s24 = scalar_lea.sflag [#allocation3], 1
    %25 = vsyncpa %s24, 0
    %26 = vsyncpa [#allocation6], 0
    %s27 = scalar_lea.sflag [#allocation6], 1
    %28 = vsyncpa %s27, 0
    %29 = vsyncpa [#allocation9], 0
    %30 = vsyncpa [#allocation4], 0
    %s31 = scalar_lea.sflag [#allocation4], 1
    %32 = vsyncpa %s31, 0
    loop: start=0, step=1, limit=4
    $region2: #{tpu_custom_call.1} parent=1 // loop_pre_header
      _
    $region3: #{tpu_custom_call.1} parent=1 // loop_header
      %s34 = sphi 0, %s38
      %p35 = scmp.ge.s32.totalorder %s34, 4
      %s44 = sphi 0, %s46
      %s47 = sphi 0, %s44
      %s48 = sphi 0, %s47
      %s64 = sphi 0, %s48
      %s70 = sphi 0, %s72
      %s73 = sphi 0, %s70
      %s74 = sphi 0, %s73
      %s90 = sphi 0, %s74
      %s94 = sphi 0, %s94
      %s96 = sphi 0, %s94
      %s97 = sphi 0, %s96
      %s111 = sphi 0, %s97
      %s115 = sphi 0, %s115
      %s117 = sphi 0, %s115
      %s118 = sphi 0, %s117
      %s132 = sphi 0, %s118
      %s136 = sphi 0, %s136
      %s138 = sphi 0, %s136
      %s139 = sphi 0, %s138
      %s153 = sphi 0, %s139
      %s157 = sphi 0, %s157
      %s159 = sphi 0, %s157
      %s160 = sphi 0, %s159
      %s174 = sphi 0, %s160
      %s178 = sphi 0, %s178
      %s180 = sphi 0, %s178
      %s181 = sphi 0, %s180
      %s195 = sphi 0, %s181
      %s199 = sphi 0, %s199
      %s201 = sphi 0, %s199
      %s202 = sphi 0, %s201
      %s216 = sphi 0, %s202
      %s220 = sphi 0, %s220
      %s222 = sphi 0, %s220
      %s223 = sphi 0, %s222
      %s237 = sphi 0, %s223
      %s241 = sphi 0, %s241
      %s243 = sphi 0, %s241
      %s244 = sphi 0, %s243
      %s258 = sphi 0, %s244
      %s262 = sphi 0, %s262
      %s264 = sphi 0, %s262
      %s265 = sphi 0, %s264
      %s279 = sphi 0, %s265
      %s283 = sphi 0, %s283
      %s285 = sphi 0, %s283
      %s286 = sphi 0, %s285
      %s300 = sphi 0, %s286
      %s304 = sphi 0, %s304
      %s306 = sphi 0, %s304
      %s307 = sphi 0, %s306
      %s321 = sphi 0, %s307
      %s325 = sphi 0, %s325
      %s327 = sphi 0, %s325
      %s328 = sphi 0, %s327
      %s342 = sphi 0, %s328
      %s346 = sphi 0, %s346
      %s348 = sphi 0, %s346
      %s349 = sphi 0, %s348
      %s363 = sphi 0, %s349
      %s367 = sphi 0, %s367
      %s369 = sphi 0, %s367
      %s370 = sphi 0, %s369
      %s384 = sphi 0, %s370
      %s388 = sphi 0, %s388
      %s390 = sphi 0, %s388
      %s391 = sphi 0, %s390
      %s405 = sphi 0, %s391
      %s409 = sphi 0, %s409
      %s411 = sphi 0, %s409
      %s412 = sphi 0, %s411
      %s426 = sphi 0, %s412
      %s432 = sphi 0, %s434
      %s435 = sphi 0, %s432
      %s436 = sphi 0, %s435
      %s452 = sphi 0, %s436
    $region4: #{tpu_custom_call.1} parent=1 // loop_header_branch
      %37 = sbr.rel (%p35) target = $region8
    $region5: #{tpu_custom_call.1} parent=1 // loop_body
      %s39 = ssub.s32 %s34, 1
      %s40 = ssub.s32 %s34, 2
      %s41 = sadd.s32 %s34, 1
      %s42 = ssub.s32 %s34, %s41
      %p43 = scmp.eq.s32.totalorder %s42, 0
      %s45 = sadd.s32 %s44, 1
      %s46 = scalar_select %p43, %s44, %s45
      %p49 = pneg %p43
      %p50 = scmp.eq.s32.totalorder %s34, 1
      %p51 = por %p49, %p50
      %p52 = scmp.ne.s32.totalorder %s44, %s47
      %p53 = scmp.eq.s32.totalorder %s34, 0
      %p54 = por %p52, %p53
      %p55 = scmp.ne.s32.totalorder %s44, %s47
      %p56 = scmp.eq.s32.totalorder %s39, 1
      %p57 = por %p55, %p56
      %p58 = scmp.ne.s32.totalorder %s47, %s48
      %p59 = scmp.eq.s32.totalorder %s39, 0
      %p60 = por %p58, %p59
      %p61 = scmp.ne.s32.totalorder %s47, %s48
      %p62 = scmp.eq.s32.totalorder %s40, 1
      %p63 = por %p61, %p62
      %p65 = scmp.ne.s32.totalorder %s48, %s64
      %p66 = scmp.eq.s32.totalorder %s40, 0
      %p67 = por %p65, %p66
      %s68 = ssub.s32 %s34, %s41
      %p69 = scmp.eq.s32.totalorder %s68, 0
      %s71 = sadd.s32 %s70, 1
      %s72 = scalar_select %p69, %s70, %s71
      %p75 = pneg %p69
      %p76 = scmp.eq.s32.totalorder %s34, 1
      %p77 = por %p75, %p76
      %p78 = scmp.ne.s32.totalorder %s70, %s73
      %p79 = scmp.eq.s32.totalorder %s34, 0
      %p80 = por %p78, %p79
      %p81 = scmp.ne.s32.totalorder %s70, %s73
      %p82 = scmp.eq.s32.totalorder %s39, 1
      %p83 = por %p81, %p82
      %p84 = scmp.ne.s32.totalorder %s73, %s74
      %p85 = scmp.eq.s32.totalorder %s39, 0
      %p86 = por %p84, %p85
      %p87 = scmp.ne.s32.totalorder %s73, %s74
      %p88 = scmp.eq.s32.totalorder %s40, 1
      %p89 = por %p87, %p88
      %p91 = scmp.ne.s32.totalorder %s74, %s90
      %p92 = scmp.eq.s32.totalorder %s40, 0
      %p93 = por %p91, %p92
      %s95 = sadd.s32 %s94, 1
      %p98 = scmp.eq.s32.totalorder %s34, 1
      %p99 = scmp.ne.s32.totalorder %s94, %s96
      %p100 = scmp.eq.s32.totalorder %s34, 0
      %p101 = por %p99, %p100
      %p102 = scmp.ne.s32.totalorder %s94, %s96
      %p103 = scmp.eq.s32.totalorder %s39, 1
      %p104 = por %p102, %p103
      %p105 = scmp.ne.s32.totalorder %s96, %s97
      %p106 = scmp.eq.s32.totalorder %s39, 0
      %p107 = por %p105, %p106
      %p108 = scmp.ne.s32.totalorder %s96, %s97
      %p109 = scmp.eq.s32.totalorder %s40, 1
      %p110 = por %p108, %p109
      %p112 = scmp.ne.s32.totalorder %s97, %s111
      %p113 = scmp.eq.s32.totalorder %s40, 0
      %p114 = por %p112, %p113
      %s116 = sadd.s32 %s115, 1
      %p119 = scmp.eq.s32.totalorder %s34, 1
      %p120 = scmp.ne.s32.totalorder %s115, %s117
      %p121 = scmp.eq.s32.totalorder %s34, 0
      %p122 = por %p120, %p121
      %p123 = scmp.ne.s32.totalorder %s115, %s117
      %p124 = scmp.eq.s32.totalorder %s39, 1
      %p125 = por %p123, %p124
      %p126 = scmp.ne.s32.totalorder %s117, %s118
      %p127 = scmp.eq.s32.totalorder %s39, 0
      %p128 = por %p126, %p127
      %p129 = scmp.ne.s32.totalorder %s117, %s118
      %p130 = scmp.eq.s32.totalorder %s40, 1
      %p131 = por %p129, %p130
      %p133 = scmp.ne.s32.totalorder %s118, %s132
      %p134 = scmp.eq.s32.totalorder %s40, 0
      %p135 = por %p133, %p134
      %s137 = sadd.s32 %s136, 1
      %p140 = scmp.eq.s32.totalorder %s34, 1
      %p141 = scmp.ne.s32.totalorder %s136, %s138
      %p142 = scmp.eq.s32.totalorder %s34, 0
      %p143 = por %p141, %p142
      %p144 = scmp.ne.s32.totalorder %s136, %s138
      %p145 = scmp.eq.s32.totalorder %s39, 1
      %p146 = por %p144, %p145
      %p147 = scmp.ne.s32.totalorder %s138, %s139
      %p148 = scmp.eq.s32.totalorder %s39, 0
      %p149 = por %p147, %p148
      %p150 = scmp.ne.s32.totalorder %s138, %s139
      %p151 = scmp.eq.s32.totalorder %s40, 1
      %p152 = por %p150, %p151
      %p154 = scmp.ne.s32.totalorder %s139, %s153
      %p155 = scmp.eq.s32.totalorder %s40, 0
      %p156 = por %p154, %p155
      %s158 = sadd.s32 %s157, 1
      %p161 = scmp.eq.s32.totalorder %s34, 1
      %p162 = scmp.ne.s32.totalorder %s157, %s159
      %p163 = scmp.eq.s32.totalorder %s34, 0
      %p164 = por %p162, %p163
      %p165 = scmp.ne.s32.totalorder %s157, %s159
      %p166 = scmp.eq.s32.totalorder %s39, 1
      %p167 = por %p165, %p166
      %p168 = scmp.ne.s32.totalorder %s159, %s160
      %p169 = scmp.eq.s32.totalorder %s39, 0
      %p170 = por %p168, %p169
      %p171 = scmp.ne.s32.totalorder %s159, %s160
      %p172 = scmp.eq.s32.totalorder %s40, 1
      %p173 = por %p171, %p172
      %p175 = scmp.ne.s32.totalorder %s160, %s174
      %p176 = scmp.eq.s32.totalorder %s40, 0
      %p177 = por %p175, %p176
      %s179 = sadd.s32 %s178, 1
      %p182 = scmp.eq.s32.totalorder %s34, 1
      %p183 = scmp.ne.s32.totalorder %s178, %s180
      %p184 = scmp.eq.s32.totalorder %s34, 0
      %p185 = por %p183, %p184
      %p186 = scmp.ne.s32.totalorder %s178, %s180
      %p187 = scmp.eq.s32.totalorder %s39, 1
      %p188 = por %p186, %p187
      %p189 = scmp.ne.s32.totalorder %s180, %s181
      %p190 = scmp.eq.s32.totalorder %s39, 0
      %p191 = por %p189, %p190
      %p192 = scmp.ne.s32.totalorder %s180, %s181
      %p193 = scmp.eq.s32.totalorder %s40, 1
      %p194 = por %p192, %p193
      %p196 = scmp.ne.s32.totalorder %s181, %s195
      %p197 = scmp.eq.s32.totalorder %s40, 0
      %p198 = por %p196, %p197
      %s200 = sadd.s32 %s199, 1
      %p203 = scmp.eq.s32.totalorder %s34, 1
      %p204 = scmp.ne.s32.totalorder %s199, %s201
      %p205 = scmp.eq.s32.totalorder %s34, 0
      %p206 = por %p204, %p205
      %p207 = scmp.ne.s32.totalorder %s199, %s201
      %p208 = scmp.eq.s32.totalorder %s39, 1
      %p209 = por %p207, %p208
      %p210 = scmp.ne.s32.totalorder %s201, %s202
      %p211 = scmp.eq.s32.totalorder %s39, 0
      %p212 = por %p210, %p211
      %p213 = scmp.ne.s32.totalorder %s201, %s202
      %p214 = scmp.eq.s32.totalorder %s40, 1
      %p215 = por %p213, %p214
      %p217 = scmp.ne.s32.totalorder %s202, %s216
      %p218 = scmp.eq.s32.totalorder %s40, 0
      %p219 = por %p217, %p218
      %s221 = sadd.s32 %s220, 1
      %p224 = scmp.eq.s32.totalorder %s34, 1
      %p225 = scmp.ne.s32.totalorder %s220, %s222
      %p226 = scmp.eq.s32.totalorder %s34, 0
      %p227 = por %p225, %p226
      %p228 = scmp.ne.s32.totalorder %s220, %s222
      %p229 = scmp.eq.s32.totalorder %s39, 1
      %p230 = por %p228, %p229
      %p231 = scmp.ne.s32.totalorder %s222, %s223
      %p232 = scmp.eq.s32.totalorder %s39, 0
      %p233 = por %p231, %p232
      %p234 = scmp.ne.s32.totalorder %s222, %s223
      %p235 = scmp.eq.s32.totalorder %s40, 1
      %p236 = por %p234, %p235
      %p238 = scmp.ne.s32.totalorder %s223, %s237
      %p239 = scmp.eq.s32.totalorder %s40, 0
      %p240 = por %p238, %p239
      %s242 = sadd.s32 %s241, 1
      %p245 = scmp.eq.s32.totalorder %s34, 1
      %p246 = scmp.ne.s32.totalorder %s241, %s243
      %p247 = scmp.eq.s32.totalorder %s34, 0
      %p248 = por %p246, %p247
      %p249 = scmp.ne.s32.totalorder %s241, %s243
      %p250 = scmp.eq.s32.totalorder %s39, 1
      %p251 = por %p249, %p250
      %p252 = scmp.ne.s32.totalorder %s243, %s244
      %p253 = scmp.eq.s32.totalorder %s39, 0
      %p254 = por %p252, %p253
      %p255 = scmp.ne.s32.totalorder %s243, %s244
      %p256 = scmp.eq.s32.totalorder %s40, 1
      %p257 = por %p255, %p256
      %p259 = scmp.ne.s32.totalorder %s244, %s258
      %p260 = scmp.eq.s32.totalorder %s40, 0
      %p261 = por %p259, %p260
      %s263 = sadd.s32 %s262, 1
      %p266 = scmp.eq.s32.totalorder %s34, 1
      %p267 = scmp.ne.s32.totalorder %s262, %s264
      %p268 = scmp.eq.s32.totalorder %s34, 0
      %p269 = por %p267, %p268
      %p270 = scmp.ne.s32.totalorder %s262, %s264
      %p271 = scmp.eq.s32.totalorder %s39, 1
      %p272 = por %p270, %p271
      %p273 = scmp.ne.s32.totalorder %s264, %s265
      %p274 = scmp.eq.s32.totalorder %s39, 0
      %p275 = por %p273, %p274
      %p276 = scmp.ne.s32.totalorder %s264, %s265
      %p277 = scmp.eq.s32.totalorder %s40, 1
      %p278 = por %p276, %p277
      %p280 = scmp.ne.s32.totalorder %s265, %s279
      %p281 = scmp.eq.s32.totalorder %s40, 0
      %p282 = por %p280, %p281
      %s284 = sadd.s32 %s283, 1
      %p287 = scmp.eq.s32.totalorder %s34, 1
      %p288 = scmp.ne.s32.totalorder %s283, %s285
      %p289 = scmp.eq.s32.totalorder %s34, 0
      %p290 = por %p288, %p289
      %p291 = scmp.ne.s32.totalorder %s283, %s285
      %p292 = scmp.eq.s32.totalorder %s39, 1
      %p293 = por %p291, %p292
      %p294 = scmp.ne.s32.totalorder %s285, %s286
      %p295 = scmp.eq.s32.totalorder %s39, 0
      %p296 = por %p294, %p295
      %p297 = scmp.ne.s32.totalorder %s285, %s286
      %p298 = scmp.eq.s32.totalorder %s40, 1
      %p299 = por %p297, %p298
      %p301 = scmp.ne.s32.totalorder %s286, %s300
      %p302 = scmp.eq.s32.totalorder %s40, 0
      %p303 = por %p301, %p302
      %s305 = sadd.s32 %s304, 1
      %p308 = scmp.eq.s32.totalorder %s34, 1
      %p309 = scmp.ne.s32.totalorder %s304, %s306
      %p310 = scmp.eq.s32.totalorder %s34, 0
      %p311 = por %p309, %p310
      %p312 = scmp.ne.s32.totalorder %s304, %s306
      %p313 = scmp.eq.s32.totalorder %s39, 1
      %p314 = por %p312, %p313
      %p315 = scmp.ne.s32.totalorder %s306, %s307
      %p316 = scmp.eq.s32.totalorder %s39, 0
      %p317 = por %p315, %p316
      %p318 = scmp.ne.s32.totalorder %s306, %s307
      %p319 = scmp.eq.s32.totalorder %s40, 1
      %p320 = por %p318, %p319
      %p322 = scmp.ne.s32.totalorder %s307, %s321
      %p323 = scmp.eq.s32.totalorder %s40, 0
      %p324 = por %p322, %p323
      %s326 = sadd.s32 %s325, 1
      %p329 = scmp.eq.s32.totalorder %s34, 1
      %p330 = scmp.ne.s32.totalorder %s325, %s327
      %p331 = scmp.eq.s32.totalorder %s34, 0
      %p332 = por %p330, %p331
      %p333 = scmp.ne.s32.totalorder %s325, %s327
      %p334 = scmp.eq.s32.totalorder %s39, 1
      %p335 = por %p333, %p334
      %p336 = scmp.ne.s32.totalorder %s327, %s328
      %p337 = scmp.eq.s32.totalorder %s39, 0
      %p338 = por %p336, %p337
      %p339 = scmp.ne.s32.totalorder %s327, %s328
      %p340 = scmp.eq.s32.totalorder %s40, 1
      %p341 = por %p339, %p340
      %p343 = scmp.ne.s32.totalorder %s328, %s342
      %p344 = scmp.eq.s32.totalorder %s40, 0
      %p345 = por %p343, %p344
      %s347 = sadd.s32 %s346, 1
      %p350 = scmp.eq.s32.totalorder %s34, 1
      %p351 = scmp.ne.s32.totalorder %s346, %s348
      %p352 = scmp.eq.s32.totalorder %s34, 0
      %p353 = por %p351, %p352
      %p354 = scmp.ne.s32.totalorder %s346, %s348
      %p355 = scmp.eq.s32.totalorder %s39, 1
      %p356 = por %p354, %p355
      %p357 = scmp.ne.s32.totalorder %s348, %s349
      %p358 = scmp.eq.s32.totalorder %s39, 0
      %p359 = por %p357, %p358
      %p360 = scmp.ne.s32.totalorder %s348, %s349
      %p361 = scmp.eq.s32.totalorder %s40, 1
      %p362 = por %p360, %p361
      %p364 = scmp.ne.s32.totalorder %s349, %s363
      %p365 = scmp.eq.s32.totalorder %s40, 0
      %p366 = por %p364, %p365
      %s368 = sadd.s32 %s367, 1
      %p371 = scmp.eq.s32.totalorder %s34, 1
      %p372 = scmp.ne.s32.totalorder %s367, %s369
      %p373 = scmp.eq.s32.totalorder %s34, 0
      %p374 = por %p372, %p373
      %p375 = scmp.ne.s32.totalorder %s367, %s369
      %p376 = scmp.eq.s32.totalorder %s39, 1
      %p377 = por %p375, %p376
      %p378 = scmp.ne.s32.totalorder %s369, %s370
      %p379 = scmp.eq.s32.totalorder %s39, 0
      %p380 = por %p378, %p379
      %p381 = scmp.ne.s32.totalorder %s369, %s370
      %p382 = scmp.eq.s32.totalorder %s40, 1
      %p383 = por %p381, %p382
      %p385 = scmp.ne.s32.totalorder %s370, %s384
      %p386 = scmp.eq.s32.totalorder %s40, 0
      %p387 = por %p385, %p386
      %s389 = sadd.s32 %s388, 1
      %p392 = scmp.eq.s32.totalorder %s34, 1
      %p393 = scmp.ne.s32.totalorder %s388, %s390
      %p394 = scmp.eq.s32.totalorder %s34, 0
      %p395 = por %p393, %p394
      %p396 = scmp.ne.s32.totalorder %s388, %s390
      %p397 = scmp.eq.s32.totalorder %s39, 1
      %p398 = por %p396, %p397
      %p399 = scmp.ne.s32.totalorder %s390, %s391
      %p400 = scmp.eq.s32.totalorder %s39, 0
      %p401 = por %p399, %p400
      %p402 = scmp.ne.s32.totalorder %s390, %s391
      %p403 = scmp.eq.s32.totalorder %s40, 1
      %p404 = por %p402, %p403
      %p406 = scmp.ne.s32.totalorder %s391, %s405
      %p407 = scmp.eq.s32.totalorder %s40, 0
      %p408 = por %p406, %p407
      %s410 = sadd.s32 %s409, 1
      %p413 = scmp.eq.s32.totalorder %s34, 1
      %p414 = scmp.ne.s32.totalorder %s409, %s411
      %p415 = scmp.eq.s32.totalorder %s34, 0
      %p416 = por %p414, %p415
      %p417 = scmp.ne.s32.totalorder %s409, %s411
      %p418 = scmp.eq.s32.totalorder %s39, 1
      %p419 = por %p417, %p418
      %p420 = scmp.ne.s32.totalorder %s411, %s412
      %p421 = scmp.eq.s32.totalorder %s39, 0
      %p422 = por %p420, %p421
      %p423 = scmp.ne.s32.totalorder %s411, %s412
      %p424 = scmp.eq.s32.totalorder %s40, 1
      %p425 = por %p423, %p424
      %p427 = scmp.ne.s32.totalorder %s412, %s426
      %p428 = scmp.eq.s32.totalorder %s40, 0
      %p429 = por %p427, %p428
      %s430 = ssub.s32 %s34, %s41
      %p431 = scmp.eq.s32.totalorder %s430, 0
      %s433 = sadd.s32 %s432, 1
      %s434 = scalar_select %p431, %s432, %s433
      %p437 = pneg %p431
      %p438 = scmp.eq.s32.totalorder %s34, 1
      %p439 = por %p437, %p438
      %p440 = scmp.ne.s32.totalorder %s432, %s435
      %p441 = scmp.eq.s32.totalorder %s34, 0
      %p442 = por %p440, %p441
      %p443 = scmp.ne.s32.totalorder %s432, %s435
      %p444 = scmp.eq.s32.totalorder %s39, 1
      %p445 = por %p443, %p444
      %p446 = scmp.ne.s32.totalorder %s435, %s436
      %p447 = scmp.eq.s32.totalorder %s39, 0
      %p448 = por %p446, %p447
      %p449 = scmp.ne.s32.totalorder %s435, %s436
      %p450 = scmp.eq.s32.totalorder %s40, 1
      %p451 = por %p449, %p450
      %p453 = scmp.ne.s32.totalorder %s436, %s452
      %p454 = scmp.eq.s32.totalorder %s40, 0
      %p455 = por %p453, %p454
      %p456 = scmp.le.s32.totalorder 1, %s34
      %p457 = scmp.lt.s32.totalorder %s34, 3
      %p458 = pnand %p456, %p457
      %p459 = pneg %p458
      // Predicated region
      $region9: #{tpu_custom_call.1} parent=5 // pred_check
        _
      $region10: #{tpu_custom_call.1} parent=5 // pred_check_branch
        %461 = sbr.rel (%p458) target = $region12
      $region11: #{tpu_custom_call.1} parent=5 // pred_region
        %s462 = ssub.s32 %s34, 1
        // Predicated region
        $region13: #{tpu_custom_call.1} parent=11 // pred_check
          %p463 = pneg %p107
        $region14: #{tpu_custom_call.1} parent=11 // pred_check_branch
          %465 = sbr.rel (%p463) target = $region16
        $region15: #{tpu_custom_call.1} parent=11 // pred_region
          _
        $region16: #{tpu_custom_call.1} parent=11 // pred_fallthru
          _
        // Predicated region
        $region17: #{tpu_custom_call.1} parent=11 // pred_check
          %p466 = pneg %p128
        $region18: #{tpu_custom_call.1} parent=11 // pred_check_branch
          %468 = sbr.rel (%p466) target = $region20
        $region19: #{tpu_custom_call.1} parent=11 // pred_region
          _
        $region20: #{tpu_custom_call.1} parent=11 // pred_fallthru
          _
        // Predicated region
        $region21: #{tpu_custom_call.1} parent=11 // pred_check
          %p469 = pneg %p149
        $region22: #{tpu_custom_call.1} parent=11 // pred_check_branch
          %471 = sbr.rel (%p469) target = $region24
        $region23: #{tpu_custom_call.1} parent=11 // pred_region
          _
        $region24: #{tpu_custom_call.1} parent=11 // pred_fallthru
          _
        // Predicated region
        $region25: #{tpu_custom_call.1} parent=11 // pred_check
          %p472 = pneg %p170
        $region26: #{tpu_custom_call.1} parent=11 // pred_check_branch
          %474 = sbr.rel (%p472) target = $region28
        $region27: #{tpu_custom_call.1} parent=11 // pred_region
          _
        $region28: #{tpu_custom_call.1} parent=11 // pred_fallthru
          _
        // Predicated region
        $region29: #{tpu_custom_call.1} parent=11 // pred_check
          %p475 = pneg %p191
        $region30: #{tpu_custom_call.1} parent=11 // pred_check_branch
          %477 = sbr.rel (%p475) target = $region32
        $region31: #{tpu_custom_call.1} parent=11 // pred_region
          _
        $region32: #{tpu_custom_call.1} parent=11 // pred_fallthru
          _
        // Predicated region
        $region33: #{tpu_custom_call.1} parent=11 // pred_check
          %p478 = pneg %p212
        $region34: #{tpu_custom_call.1} parent=11 // pred_check_branch
          %480 = sbr.rel (%p478) target = $region36
        $region35: #{tpu_custom_call.1} parent=11 // pred_region
          _
        $region36: #{tpu_custom_call.1} parent=11 // pred_fallthru
          _
        // Predicated region
        $region37: #{tpu_custom_call.1} parent=11 // pred_check
          %p481 = pneg %p233
        $region38: #{tpu_custom_call.1} parent=11 // pred_check_branch
          %483 = sbr.rel (%p481) target = $region40
        $region39: #{tpu_custom_call.1} parent=11 // pred_region
          %485 = vsyncadd [#allocation6], 0
          %s486 = sshll.u32 %s8, 4
          %s487 = int_to_ptr.hbm [resolvable:$true] %s486
          %s488 = sshll.u32 [#allocation7], 4
          %s489 = int_to_ptr.vmem [resolvable:$true] %s488
          %494 = dma.hbm_to_vmem [thread:$0]  %s487, 512, %s489, [#allocation6], 128, 128, 8
        $region40: #{tpu_custom_call.1} parent=11 // pred_fallthru
          _
        // Predicated region
        $region41: #{tpu_custom_call.1} parent=11 // pred_check
          %p495 = pneg %p254
        $region42: #{tpu_custom_call.1} parent=11 // pred_check_branch
          %497 = sbr.rel (%p495) target = $region44
        $region43: #{tpu_custom_call.1} parent=11 // pred_region
          _
        $region44: #{tpu_custom_call.1} parent=11 // pred_fallthru
          _
        // Predicated region
        $region45: #{tpu_custom_call.1} parent=11 // pred_check
          %p498 = pneg %p275
        $region46: #{tpu_custom_call.1} parent=11 // pred_check_branch
          %500 = sbr.rel (%p498) target = $region48
        $region47: #{tpu_custom_call.1} parent=11 // pred_region
          %502 = vsyncadd [#allocation9], 0
          %s503 = sshll.u32 %s10, 4
          %s504 = int_to_ptr.hbm [resolvable:$true] %s503
          %s505 = sshll.u32 [#allocation8], 4
          %s506 = int_to_ptr.vmem [resolvable:$true] %s505
          %511 = dma.hbm_to_vmem [thread:$0]  %s504, 512, %s506, [#allocation9], 128, 128, 8
        $region48: #{tpu_custom_call.1} parent=11 // pred_fallthru
          _
        // Predicated region
        $region49: #{tpu_custom_call.1} parent=11 // pred_check
          %p512 = pneg %p296
        $region50: #{tpu_custom_call.1} parent=11 // pred_check_branch
          %514 = sbr.rel (%p512) target = $region52
        $region51: #{tpu_custom_call.1} parent=11 // pred_region
          _
        $region52: #{tpu_custom_call.1} parent=11 // pred_fallthru
          _
        // Predicated region
        $region53: #{tpu_custom_call.1} parent=11 // pred_check
          %p515 = pneg %p317
        $region54: #{tpu_custom_call.1} parent=11 // pred_check_branch
          %517 = sbr.rel (%p515) target = $region56
        $region55: #{tpu_custom_call.1} parent=11 // pred_region
          _
        $region56: #{tpu_custom_call.1} parent=11 // pred_fallthru
          _
        // Predicated region
        $region57: #{tpu_custom_call.1} parent=11 // pred_check
          %p518 = pneg %p338
        $region58: #{tpu_custom_call.1} parent=11 // pred_check_branch
          %520 = sbr.rel (%p518) target = $region60
        $region59: #{tpu_custom_call.1} parent=11 // pred_region
          _
        $region60: #{tpu_custom_call.1} parent=11 // pred_fallthru
          _
        // Predicated region
        $region61: #{tpu_custom_call.1} parent=11 // pred_check
          %p521 = pneg %p359
        $region62: #{tpu_custom_call.1} parent=11 // pred_check_branch
          %523 = sbr.rel (%p521) target = $region64
        $region63: #{tpu_custom_call.1} parent=11 // pred_region
          _
        $region64: #{tpu_custom_call.1} parent=11 // pred_fallthru
          _
        // Predicated region
        $region65: #{tpu_custom_call.1} parent=11 // pred_check
          %p524 = pneg %p380
        $region66: #{tpu_custom_call.1} parent=11 // pred_check_branch
          %526 = sbr.rel (%p524) target = $region68
        $region67: #{tpu_custom_call.1} parent=11 // pred_region
          _
        $region68: #{tpu_custom_call.1} parent=11 // pred_fallthru
          _
        // Predicated region
        $region69: #{tpu_custom_call.1} parent=11 // pred_check
          %p527 = pneg %p401
        $region70: #{tpu_custom_call.1} parent=11 // pred_check_branch
          %529 = sbr.rel (%p527) target = $region72
        $region71: #{tpu_custom_call.1} parent=11 // pred_region
          _
        $region72: #{tpu_custom_call.1} parent=11 // pred_fallthru
          _
        // Predicated region
        $region73: #{tpu_custom_call.1} parent=11 // pred_check
          %p530 = pneg %p422
        $region74: #{tpu_custom_call.1} parent=11 // pred_check_branch
          %532 = sbr.rel (%p530) target = $region76
        $region75: #{tpu_custom_call.1} parent=11 // pred_region
          _
        $region76: #{tpu_custom_call.1} parent=11 // pred_fallthru
          _
      $region12: #{tpu_custom_call.1} parent=5 // pred_fallthru
        _
      %p533 = scmp.lt.s32.totalorder %s34, 2
      // Predicated region
      $region77: #{tpu_custom_call.1} parent=5 // pred_check
        %p534 = pneg %p533
      $region78: #{tpu_custom_call.1} parent=5 // pred_check_branch
        %536 = sbr.rel (%p534) target = $region80
      $region79: #{tpu_custom_call.1} parent=5 // pred_region
        // Predicated region
        $region81: #{tpu_custom_call.1} parent=79 // pred_check
          %p537 = pneg %p54
        $region82: #{tpu_custom_call.1} parent=79 // pred_check_branch
          %539 = sbr.rel (%p537) target = $region84
        $region83: #{tpu_custom_call.1} parent=79 // pred_region
          %s540 = sand.u32 %s44, 1
          %s541 = scalar_lea.sflag [#allocation3], %s540
          %s542 = sand.u32 %s44, 1
          %s543 = smul.addr %s542, 8
          %s544 = scalar_lea.vmem [#allocation2], %s543
          %546 = vsyncadd %s541, 0
          %s547 = smul.addr %s34, 8
          %s548 = scalar_lea.hbm %s0, %s547
          %s550 = sshll.u32 %s548, 4
          %s551 = int_to_ptr.hbm [resolvable:$true] %s550
          %s552 = sshll.u32 %s544, 4
          %s553 = int_to_ptr.vmem [resolvable:$true] %s552
          %555 = dma.hbm_to_vmem [thread:$0]  %s551, 128, %s553, %s541
        $region84: #{tpu_custom_call.1} parent=79 // pred_fallthru
          _
        // Predicated region
        $region85: #{tpu_custom_call.1} parent=79 // pred_check
          %p556 = pneg %p80
        $region86: #{tpu_custom_call.1} parent=79 // pred_check_branch
          %558 = sbr.rel (%p556) target = $region88
        $region87: #{tpu_custom_call.1} parent=79 // pred_region
          %s559 = sand.u32 %s34, 1
          %s560 = scalar_lea.sflag [#allocation6], %s559
          %s561 = sand.u32 %s70, 1
          %s562 = scalar_lea.vmem [#allocation5], %s561
          %564 = vsyncadd %s560, 0
          %s565 = scalar_lea.hbm %s1, %s34
          %s567 = sshll.u32 %s565, 4
          %s568 = int_to_ptr.hbm [resolvable:$true] %s567
          %s569 = sshll.u32 %s562, 4
          %s570 = int_to_ptr.vmem [resolvable:$true] %s569
          %572 = dma.hbm_to_vmem [thread:$0]  %s568, 16, %s570, %s560
        $region88: #{tpu_custom_call.1} parent=79 // pred_fallthru
          _
      $region80: #{tpu_custom_call.1} parent=5 // pred_fallthru
        _
      %p573 = scmp.le.s32.totalorder 1, %s34
      %p574 = scmp.lt.s32.totalorder %s34, 3
      %p575 = pnand %p573, %p574
      %p576 = pneg %p575
      // Predicated region
      $region89: #{tpu_custom_call.1} parent=5 // pred_check
        _
      $region90: #{tpu_custom_call.1} parent=5 // pred_check_branch
        %578 = sbr.rel (%p575) target = $region92
      $region91: #{tpu_custom_call.1} parent=5 // pred_region
        %s579 = ssub.s32 %s34, 1
        %s580 = sand.u32 %s47, 1
        %s581 = scalar_lea.sflag [#allocation3], %s580
        %s582 = sand.u32 %s47, 1
        %s583 = smul.addr %s582, 8
        %s584 = scalar_lea.vmem [#allocation2], %s583
        // Predicated region
        $region93: #{tpu_custom_call.1} parent=91 // pred_check
          %p585 = pneg %p60
        $region94: #{tpu_custom_call.1} parent=91 // pred_check_branch
          %587 = sbr.rel (%p585) target = $region96
        $region95: #{tpu_custom_call.1} parent=91 // pred_region
          %589 = dma.done %s581, 128
        $region96: #{tpu_custom_call.1} parent=91 // pred_fallthru
          _
        %s590 = sand.u32 %s39, 1
        %s591 = scalar_lea.sflag [#allocation6], %s590
        %s592 = sand.u32 %s73, 1
        %s593 = scalar_lea.vmem [#allocation5], %s592
        // Predicated region
        $region97: #{tpu_custom_call.1} parent=91 // pred_check
          %p594 = pneg %p86
        $region98: #{tpu_custom_call.1} parent=91 // pred_check_branch
          %596 = sbr.rel (%p594) target = $region100
        $region99: #{tpu_custom_call.1} parent=91 // pred_region
          %598 = dma.done %s591, 16
        $region100: #{tpu_custom_call.1} parent=91 // pred_fallthru
          _
        // Predicated region
        $region101: #{tpu_custom_call.1} parent=91 // pred_check
          %p599 = pneg %p233
        $region102: #{tpu_custom_call.1} parent=91 // pred_check_branch
          %601 = sbr.rel (%p599) target = $region104
        $region103: #{tpu_custom_call.1} parent=91 // pred_region
          %603 = dma.done [#allocation6], 512
        $region104: #{tpu_custom_call.1} parent=91 // pred_fallthru
          _
        // Predicated region
        $region105: #{tpu_custom_call.1} parent=91 // pred_check
          %p604 = pneg %p275
        $region106: #{tpu_custom_call.1} parent=91 // pred_check_branch
          %606 = sbr.rel (%p604) target = $region108
        $region107: #{tpu_custom_call.1} parent=91 // pred_region
          %608 = dma.done [#allocation9], 512
        $region108: #{tpu_custom_call.1} parent=91 // pred_fallthru
          _
        %s609 = sand.u32 %s47, 1
        %s610 = scalar_lea.sflag [#allocation3], %s609
        %s611 = sand.u32 %s47, 1
        %s612 = smul.addr %s611, 8
        %s613 = scalar_lea.vmem [#allocation2], %s612
        %p614 = pneg %p60
        %p615 = pneg %p57
        %s616 = sand.u32 %s39, 1
        %s617 = scalar_lea.sflag [#allocation6], %s616
        %s618 = sand.u32 %s73, 1
        %s619 = scalar_lea.vmem [#allocation5], %s618
        %p620 = pneg %p86
        %p621 = pneg %p83
        %p622 = pneg %p107
        %p623 = pneg %p104
        %p624 = pneg %p128
        %p625 = pneg %p125
        %p626 = pneg %p149
        %p627 = pneg %p146
        %p628 = pneg %p170
        %p629 = pneg %p167
        %p630 = pneg %p191
        %p631 = pneg %p188
        %p632 = pneg %p212
        %p633 = pneg %p209
        %p634 = pneg %p233
        %p635 = pneg %p230
        %p636 = pneg %p254
        %p637 = pneg %p251
        %p638 = pneg %p275
        %p639 = pneg %p272
        %p640 = pneg %p296
        %p641 = pneg %p293
        %p642 = pneg %p317
        %p643 = pneg %p314
        %p644 = pneg %p338
        %p645 = pneg %p335
        %p646 = pneg %p359
        %p647 = pneg %p356
        %p648 = pneg %p380
        %p649 = pneg %p377
        %p650 = pneg %p401
        %p651 = pneg %p398
        %p652 = pneg %p422
        %p653 = pneg %p419
        %p654 = pneg %p448
        %p655 = pneg %p445
        %s656 = sand.u32 %s435, 1
        %s657 = scalar_lea.sflag [#allocation4], %s656
        %s658 = sand.u32 %s435, 1
        %s659 = smul.addr %s658, 8
        %s660 = scalar_lea.vmem [#allocation10], %s659
        %v661 = vld [vmem:[%s584] sm:$0xff]
        %v662 = vld [vmem:[%s2] sm:$0xff]
        %v663 = vld [vmem:[%s2 + $0x8] sm:$0xff]
        %v664 = vld [vmem:[%s2 + $0x10] sm:$0xff]
        %v665 = vld [vmem:[%s2 + $0x18] sm:$0xff]
        %v666 = vld [vmem:[%s3] sm:$0x1]
        %v668 = vperm.slane %v666, 0
        %vm670 = vcmask 261120
        %v672 = vsel %vm670, %v661, 0
        %674 = vmatpush.msra.mxu0 0.0
        %675 = vmatpush.msra.mxu0 0.0
        %676 = vmatpush.msra.mxu0 0.0
        %677 = vmatpush.msra.mxu0 0.0
        %678 = vmatpush.msra.mxu0 0.0
        %679 = vmatpush.msra.mxu0 0.0
        %680 = vmatpush.msra.mxu0 0.0
        %681 = vmatpush.msra.mxu0 0.0
        %682 = vmatpush.msra.mxu0 0.0
        %683 = vmatpush.msra.mxu0 0.0
        %684 = vmatpush.msra.mxu0 0.0
        %685 = vmatpush.msra.mxu0 0.0
        %686 = vmatpush.msra.mxu0 %v665
        %687 = vmatpush.msra.mxu0 %v664
        %688 = vmatpush.msra.mxu0 %v663
        %689 = vmatpush.msra.mxu0 %v662
        %690 = vmatmul.f32.gmra.mxu0 %v672
        %v691 = vpop.f32.mrf.mxu0
        %v692 = vadd.f32 %v668, %v691
        %693 = vdwg.mxu0
        %v694 = vld [vmem:[%s4] sm:$0xff]
        %v695 = vld [vmem:[%s4 + $0x8] sm:$0xff]
        %v696 = vld [vmem:[%s4 + $0x10] sm:$0xff]
        %v697 = vld [vmem:[%s4 + $0x18] sm:$0xff]
        %v698 = vld [vmem:[%s5] sm:$0x1]
        %v700 = vperm.slane %v698, 0
        %702 = vmatpush.msra.mxu0 0.0
        %703 = vmatpush.msra.mxu0 0.0
        %704 = vmatpush.msra.mxu0 0.0
        %705 = vmatpush.msra.mxu0 0.0
        %706 = vmatpush.msra.mxu0 0.0
        %707 = vmatpush.msra.mxu0 0.0
        %708 = vmatpush.msra.mxu0 0.0
        %709 = vmatpush.msra.mxu0 0.0
        %710 = vmatpush.msra.mxu0 0.0
        %711 = vmatpush.msra.mxu0 0.0
        %712 = vmatpush.msra.mxu0 0.0
        %713 = vmatpush.msra.mxu0 0.0
        %714 = vmatpush.msra.mxu0 %v697
        %715 = vmatpush.msra.mxu0 %v696
        %716 = vmatpush.msra.mxu0 %v695
        %717 = vmatpush.msra.mxu0 %v694
        %718 = vmatmul.f32.gmra.mxu0 %v672
        %v719 = vpop.f32.mrf.mxu0
        %v720 = vadd.f32 %v700, %v719
        %721 = vdwg.mxu0
        %v722 = vld [vmem:[%s6] sm:$0xff]
        %v723 = vld [vmem:[%s6 + $0x8] sm:$0xff]
        %v724 = vld [vmem:[%s6 + $0x10] sm:$0xff]
        %v725 = vld [vmem:[%s6 + $0x18] sm:$0xff]
        %v726 = vld [vmem:[%s7] sm:$0x1]
        %v728 = vperm.slane %v726, 0
        %730 = vmatpush.msra.mxu0 0.0
        %731 = vmatpush.msra.mxu0 0.0
        %732 = vmatpush.msra.mxu0 0.0
        %733 = vmatpush.msra.mxu0 0.0
        %734 = vmatpush.msra.mxu0 0.0
        %735 = vmatpush.msra.mxu0 0.0
        %736 = vmatpush.msra.mxu0 0.0
        %737 = vmatpush.msra.mxu0 0.0
        %738 = vmatpush.msra.mxu0 0.0
        %739 = vmatpush.msra.mxu0 0.0
        %740 = vmatpush.msra.mxu0 0.0
        %741 = vmatpush.msra.mxu0 0.0
        %742 = vmatpush.msra.mxu0 %v725
        %743 = vmatpush.msra.mxu0 %v724
        %744 = vmatpush.msra.mxu0 %v723
        %745 = vmatpush.msra.mxu0 %v722
        %746 = vmatmul.f32.gmra.mxu0 %v672
        %v747 = vpop.f32.mrf.mxu0
        %v748 = vadd.f32 %v728, %v747
        %749 = vdwg.mxu0
        %v750 = vmul.f32 %v692, 0.35355338
        %v751 = vld [vmem:[%s593] sm:$0x1]
        %vm752 = vcmp.gt.f32.partialorder %v751, 0.5
        %v753 = vsel %vm752, -1e+09, 0.0
        %755 = vrot.lane.b32.xlu0 %v750, 120
        %v756 = vpop.permute.xlu0 %755
        %757 = vrot.lane.b32.xlu0 %v750, 112
        %v758 = vpop.permute.xlu0 %757
        %759 = vrot.lane.b32.xlu0 %v750, 104
        %v760 = vpop.permute.xlu0 %759
        %762 = vrot.lane.b32.xlu0 %v720, 120
        %v763 = vpop.permute.xlu0 %762
        %764 = vrot.lane.b32.xlu0 %v720, 112
        %v765 = vpop.permute.xlu0 %764
        %766 = vrot.lane.b32.xlu0 %v720, 104
        %v767 = vpop.permute.xlu0 %766
        %769 = vrot.lane.b32.xlu0 %v748, 120
        %v770 = vpop.permute.xlu0 %769
        %772 = vrot.lane.b32.xlu0 %v748, 112
        %v773 = vpop.permute.xlu0 %772
        %775 = vrot.lane.b32.xlu0 %v748, 104
        %v776 = vpop.permute.xlu0 %775
        %v779 = vperm.slane %v753, 0
        %vm781 = vcmask 64512
        %v782 = vsel %vm781, %v750, 0
        %v784 = vsel %vm781, %v720, 0
        %786 = vmatpush.xpose.msra.mxu0 0.0
        %787 = vmatpush.xpose.msra.mxu0 0.0
        %788 = vmatpush.xpose.msra.mxu0 0.0
        %789 = vmatpush.xpose.msra.mxu0 0.0
        %790 = vmatpush.xpose.msra.mxu0 0.0
        %791 = vmatpush.xpose.msra.mxu0 0.0
        %792 = vmatpush.xpose.msra.mxu0 0.0
        %793 = vmatpush.xpose.msra.mxu0 0.0
        %794 = vmatpush.xpose.msra.mxu0 0.0
        %795 = vmatpush.xpose.msra.mxu0 0.0
        %796 = vmatpush.xpose.msra.mxu0 0.0
        %797 = vmatpush.xpose.msra.mxu0 0.0
        %798 = vmatpush.xpose.msra.mxu0 0.0
        %799 = vmatpush.xpose.msra.mxu0 0.0
        %800 = vmatpush.xpose.msra.mxu0 0.0
        %801 = vmatpush.xpose.msra.mxu0 %v784
        %802 = vmatmul.f32.gmra.mxu0 %v782
        %v803 = vpop.f32.mrf.mxu0
        %v804 = vadd.f32 %v779, %v803
        %805 = vdwg.mxu0
        %v806 = vsel %vm781, %v756, 0
        %v808 = vsel %vm781, %v763, 0
        %810 = vmatpush.xpose.msra.mxu0 0.0
        %811 = vmatpush.xpose.msra.mxu0 0.0
        %812 = vmatpush.xpose.msra.mxu0 0.0
        %813 = vmatpush.xpose.msra.mxu0 0.0
        %814 = vmatpush.xpose.msra.mxu0 0.0
        %815 = vmatpush.xpose.msra.mxu0 0.0
        %816 = vmatpush.xpose.msra.mxu0 0.0
        %817 = vmatpush.xpose.msra.mxu0 0.0
        %818 = vmatpush.xpose.msra.mxu0 0.0
        %819 = vmatpush.xpose.msra.mxu0 0.0
        %820 = vmatpush.xpose.msra.mxu0 0.0
        %821 = vmatpush.xpose.msra.mxu0 0.0
        %822 = vmatpush.xpose.msra.mxu0 0.0
        %823 = vmatpush.xpose.msra.mxu0 0.0
        %824 = vmatpush.xpose.msra.mxu0 0.0
        %825 = vmatpush.xpose.msra.mxu0 %v808
        %826 = vmatmul.f32.gmra.mxu0 %v806
        %v827 = vpop.f32.mrf.mxu0
        %v828 = vadd.f32 %v779, %v827
        %829 = vdwg.mxu0
        %v830 = vsel %vm781, %v758, 0
        %v832 = vsel %vm781, %v765, 0
        %834 = vmatpush.xpose.msra.mxu0 0.0
        %835 = vmatpush.xpose.msra.mxu0 0.0
        %836 = vmatpush.xpose.msra.mxu0 0.0
        %837 = vmatpush.xpose.msra.mxu0 0.0
        %838 = vmatpush.xpose.msra.mxu0 0.0
        %839 = vmatpush.xpose.msra.mxu0 0.0
        %840 = vmatpush.xpose.msra.mxu0 0.0
        %841 = vmatpush.xpose.msra.mxu0 0.0
        %842 = vmatpush.xpose.msra.mxu0 0.0
        %843 = vmatpush.xpose.msra.mxu0 0.0
        %844 = vmatpush.xpose.msra.mxu0 0.0
        %845 = vmatpush.xpose.msra.mxu0 0.0
        %846 = vmatpush.xpose.msra.mxu0 0.0
        %847 = vmatpush.xpose.msra.mxu0 0.0
        %848 = vmatpush.xpose.msra.mxu0 0.0
        %849 = vmatpush.xpose.msra.mxu0 %v832
        %850 = vmatmul.f32.gmra.mxu0 %v830
        %v851 = vpop.f32.mrf.mxu0
        %v852 = vadd.f32 %v779, %v851
        %853 = vdwg.mxu0
        %v854 = vsel %vm781, %v760, 0
        %v856 = vsel %vm781, %v767, 0
        %858 = vmatpush.xpose.msra.mxu0 0.0
        %859 = vmatpush.xpose.msra.mxu0 0.0
        %860 = vmatpush.xpose.msra.mxu0 0.0
        %861 = vmatpush.xpose.msra.mxu0 0.0
        %862 = vmatpush.xpose.msra.mxu0 0.0
        %863 = vmatpush.xpose.msra.mxu0 0.0
        %864 = vmatpush.xpose.msra.mxu0 0.0
        %865 = vmatpush.xpose.msra.mxu0 0.0
        %866 = vmatpush.xpose.msra.mxu0 0.0
        %867 = vmatpush.xpose.msra.mxu0 0.0
        %868 = vmatpush.xpose.msra.mxu0 0.0
        %869 = vmatpush.xpose.msra.mxu0 0.0
        %870 = vmatpush.xpose.msra.mxu0 0.0
        %871 = vmatpush.xpose.msra.mxu0 0.0
        %872 = vmatpush.xpose.msra.mxu0 0.0
        %873 = vmatpush.xpose.msra.mxu0 %v856
        %874 = vmatmul.f32.gmra.mxu0 %v854
        %v875 = vpop.f32.mrf.mxu0
        %v876 = vadd.f32 %v779, %v875
        %877 = vdwg.mxu0
        %v878 = vsel %vm781, %v804, -inf
        %879 = vmax.xlane.f32.xlu0 %v878
        %v880 = vpop.xlane.xlu0 %879
        %v881 = vsel %vm781, %v828, -inf
        %882 = vmax.xlane.f32.xlu0 %v881
        %v883 = vpop.xlane.xlu0 %882
        %v884 = vsel %vm781, %v852, -inf
        %885 = vmax.xlane.f32.xlu0 %v884
        %v886 = vpop.xlane.xlu0 %885
        %v887 = vsel %vm781, %v876, -inf
        %888 = vmax.xlane.f32.xlu0 %v887
        %v889 = vpop.xlane.xlu0 %888
        %v890 = vsub.f32 %v804, %v880
        %v891 = vsub.f32 %v828, %v883
        %v892 = vsub.f32 %v852, %v886
        %v893 = vsub.f32 %v876, %v889
        %v894 = vmul.f32 %v890, 1.442695
        %v895 = vpow.pop %v894
        %v896 = vmul.f32 %v891, 1.442695
        %v897 = vpow.pop %v896
        %v898 = vmul.f32 %v892, 1.442695
        %v899 = vpow.pop %v898
        %v900 = vmul.f32 %v893, 1.442695
        %v901 = vpow.pop %v900
        %v902 = vsel %vm781, %v895, 0.0
        %903 = vadd.xlane.f32.xlu0 %v902
        %v904 = vpop.xlane.xlu0 %903
        %v905 = vsel %vm781, %v897, 0.0
        %906 = vadd.xlane.f32.xlu0 %v905
        %v907 = vpop.xlane.xlu0 %906
        %v908 = vsel %vm781, %v899, 0.0
        %909 = vadd.xlane.f32.xlu0 %v908
        %v910 = vpop.xlane.xlu0 %909
        %v911 = vsel %vm781, %v901, 0.0
        %912 = vadd.xlane.f32.xlu0 %v911
        %v913 = vpop.xlane.xlu0 %912
        %v914 = vrcp.pop %v904
        %v915 = vmul.f32 %v904, %v914
        %v916 = vsub.f32 1.0, %v915
        %v917 = vmul.f32 %v914, %v916
        %v918 = vadd.f32 %v914, %v917
        %vm919 = vweird.f32 %v904
        %vm920 = vweird.f32 %v914
        %vm921 = vmor %vm919, %vm920
        %v922 = vsel %vm921, %v914, %v918
        %v923 = vand.u32 2147483647, %v904
        %vm924 = vcmp.eq.f32.partialorder %v923, 8.507059e+37
        %v925 = vand.u32 %v904, 2147483648
        %v926 = vor.u32 1.1754944e-38, %v925
        %v927 = vsel %vm924, %v926, %v922
        %v928 = vrcp.pop %v907
        %v929 = vmul.f32 %v907, %v928
        %v930 = vsub.f32 1.0, %v929
        %v931 = vmul.f32 %v928, %v930
        %v932 = vadd.f32 %v928, %v931
        %vm933 = vweird.f32 %v907
        %vm934 = vweird.f32 %v928
        %vm935 = vmor %vm933, %vm934
        %v936 = vsel %vm935, %v928, %v932
        %v937 = vand.u32 2147483647, %v907
        %vm938 = vcmp.eq.f32.partialorder %v937, 8.507059e+37
        %v939 = vand.u32 %v907, 2147483648
        %v940 = vor.u32 1.1754944e-38, %v939
        %v941 = vsel %vm938, %v940, %v936
        %v942 = vrcp.pop %v910
        %v943 = vmul.f32 %v910, %v942
        %v944 = vsub.f32 1.0, %v943
        %v945 = vmul.f32 %v942, %v944
        %v946 = vadd.f32 %v942, %v945
        %vm947 = vweird.f32 %v910
        %vm948 = vweird.f32 %v942
        %vm949 = vmor %vm947, %vm948
        %v950 = vsel %vm949, %v942, %v946
        %v951 = vand.u32 2147483647, %v910
        %vm952 = vcmp.eq.f32.partialorder %v951, 8.507059e+37
        %v953 = vand.u32 %v910, 2147483648
        %v954 = vor.u32 1.1754944e-38, %v953
        %v955 = vsel %vm952, %v954, %v950
        %v956 = vrcp.pop %v913
        %v957 = vmul.f32 %v913, %v956
        %v958 = vsub.f32 1.0, %v957
        %v959 = vmul.f32 %v956, %v958
        %v960 = vadd.f32 %v956, %v959
        %vm961 = vweird.f32 %v913
        %vm962 = vweird.f32 %v956
        %vm963 = vmor %vm961, %vm962
        %v964 = vsel %vm963, %v956, %v960
        %v965 = vand.u32 2147483647, %v913
        %vm966 = vcmp.eq.f32.partialorder %v965, 8.507059e+37
        %v967 = vand.u32 %v913, 2147483648
        %v968 = vor.u32 1.1754944e-38, %v967
        %v969 = vsel %vm966, %v968, %v964
        %v970 = vmul.f32 %v895, %v927
        %v971 = vmul.f32 %v897, %v941
        %v972 = vmul.f32 %v899, %v955
        %v973 = vmul.f32 %v901, %v969
        %v975 = vsel %vm781, %v970, 0
        %977 = vmatpush.msra.mxu0 0.0
        %978 = vmatpush.msra.mxu0 0.0
        %979 = vmatpush.msra.mxu0 0.0
        %980 = vmatpush.msra.mxu0 0.0
        %981 = vmatpush.msra.mxu0 0.0
        %982 = vmatpush.msra.mxu0 0.0
        %983 = vmatpush.msra.mxu0 0.0
        %984 = vmatpush.msra.mxu0 0.0
        %985 = vmatpush.msra.mxu0 0.0
        %986 = vmatpush.msra.mxu0 0.0
        %987 = vmatpush.msra.mxu0 0.0
        %988 = vmatpush.msra.mxu0 0.0
        %989 = vmatpush.msra.mxu0 0.0
        %990 = vmatpush.msra.mxu0 0.0
        %991 = vmatpush.msra.mxu0 0.0
        %992 = vmatpush.msra.mxu0 %v748
        %993 = vmatmul.f32.gmra.mxu0 %v975
        %v994 = vpop.f32.mrf.mxu0
        %v995 = vadd.f32 0.0, %v994
        %996 = vdwg.mxu0
        %v998 = vsel %vm781, %v971, 0
        %1000 = vmatpush.msra.mxu0 0.0
        %1001 = vmatpush.msra.mxu0 0.0
        %1002 = vmatpush.msra.mxu0 0.0
        %1003 = vmatpush.msra.mxu0 0.0
        %1004 = vmatpush.msra.mxu0 0.0
        %1005 = vmatpush.msra.mxu0 0.0
        %1006 = vmatpush.msra.mxu0 0.0
        %1007 = vmatpush.msra.mxu0 0.0
        %1008 = vmatpush.msra.mxu0 0.0
        %1009 = vmatpush.msra.mxu0 0.0
        %1010 = vmatpush.msra.mxu0 0.0
        %1011 = vmatpush.msra.mxu0 0.0
        %1012 = vmatpush.msra.mxu0 0.0
        %1013 = vmatpush.msra.mxu0 0.0
        %1014 = vmatpush.msra.mxu0 0.0
        %1015 = vmatpush.msra.mxu0 %v770
        %1016 = vmatmul.f32.gmra.mxu0 %v998
        %v1017 = vpop.f32.mrf.mxu0
        %v1018 = vadd.f32 0.0, %v1017
        %1019 = vdwg.mxu0
        %v1021 = vsel %vm781, %v972, 0
        %1023 = vmatpush.msra.mxu0 0.0
        %1024 = vmatpush.msra.mxu0 0.0
        %1025 = vmatpush.msra.mxu0 0.0
        %1026 = vmatpush.msra.mxu0 0.0
        %1027 = vmatpush.msra.mxu0 0.0
        %1028 = vmatpush.msra.mxu0 0.0
        %1029 = vmatpush.msra.mxu0 0.0
        %1030 = vmatpush.msra.mxu0 0.0
        %1031 = vmatpush.msra.mxu0 0.0
        %1032 = vmatpush.msra.mxu0 0.0
        %1033 = vmatpush.msra.mxu0 0.0
        %1034 = vmatpush.msra.mxu0 0.0
        %1035 = vmatpush.msra.mxu0 0.0
        %1036 = vmatpush.msra.mxu0 0.0
        %1037 = vmatpush.msra.mxu0 0.0
        %1038 = vmatpush.msra.mxu0 %v773
        %1039 = vmatmul.f32.gmra.mxu0 %v1021
        %v1040 = vpop.f32.mrf.mxu0
        %v1041 = vadd.f32 0.0, %v1040
        %1042 = vdwg.mxu0
        %v1044 = vsel %vm781, %v973, 0
        %1046 = vmatpush.msra.mxu0 0.0
        %1047 = vmatpush.msra.mxu0 0.0
        %1048 = vmatpush.msra.mxu0 0.0
        %1049 = vmatpush.msra.mxu0 0.0
        %1050 = vmatpush.msra.mxu0 0.0
        %1051 = vmatpush.msra.mxu0 0.0
        %1052 = vmatpush.msra.mxu0 0.0
        %1053 = vmatpush.msra.mxu0 0.0
        %1054 = vmatpush.msra.mxu0 0.0
        %1055 = vmatpush.msra.mxu0 0.0
        %1056 = vmatpush.msra.mxu0 0.0
        %1057 = vmatpush.msra.mxu0 0.0
        %1058 = vmatpush.msra.mxu0 0.0
        %1059 = vmatpush.msra.mxu0 0.0
        %1060 = vmatpush.msra.mxu0 0.0
        %1061 = vmatpush.msra.mxu0 %v776
        %1062 = vmatmul.f32.gmra.mxu0 %v1044
        %v1063 = vpop.f32.mrf.mxu0
        %v1064 = vadd.f32 0.0, %v1063
        %1065 = vdwg.mxu0
        %1067 = vrot.lane.b32.xlu0 %v1018, 8
        %v1068 = vpop.permute.xlu0 %1067
        %1071 = vrot.lane.b32.xlu0 %v1041, 16
        %v1072 = vpop.permute.xlu0 %1071
        %1075 = vrot.lane.b32.xlu0 %v1064, 24
        %v1076 = vpop.permute.xlu0 %1075
        %v1078 = vsel %vm781, %v995, %v1068
        %vm1079 = vcmask 130048
        %v1080 = vsel %vm1079, %v1078, %v1072
        %vm1081 = vcmask 195584
        %v1082 = vsel %vm1081, %v1080, %v1076
        %v1083 = vld [vmem:[#allocation7] sm:$0xff]
        %v1084 = vld [vmem:[#allocation7 + $0x8] sm:$0xff]
        %v1085 = vld [vmem:[#allocation7 + $0x10] sm:$0xff]
        %v1086 = vld [vmem:[#allocation7 + $0x18] sm:$0xff]
        %v1087 = vld [vmem:[%s9] sm:$0x1]
        %v1089 = vperm.slane %v1087, 0
        %v1092 = vsel %vm670, %v1082, 0
        %1094 = vmatpush.msra.mxu0 0.0
        %1095 = vmatpush.msra.mxu0 0.0
        %1096 = vmatpush.msra.mxu0 0.0
        %1097 = vmatpush.msra.mxu0 0.0
        %1098 = vmatpush.msra.mxu0 0.0
        %1099 = vmatpush.msra.mxu0 0.0
        %1100 = vmatpush.msra.mxu0 0.0
        %1101 = vmatpush.msra.mxu0 0.0
        %1102 = vmatpush.msra.mxu0 0.0
        %1103 = vmatpush.msra.mxu0 0.0
        %1104 = vmatpush.msra.mxu0 0.0
        %1105 = vmatpush.msra.mxu0 0.0
        %1106 = vmatpush.msra.mxu0 %v1086
        %1107 = vmatpush.msra.mxu0 %v1085
        %1108 = vmatpush.msra.mxu0 %v1084
        %1109 = vmatpush.msra.mxu0 %v1083
        %1110 = vmatmul.f32.gmra.mxu0 %v1092
        %v1111 = vpop.f32.mrf.mxu0
        %v1112 = vadd.f32 %v1089, %v1111
        %1113 = vdwg.mxu0
        %v1114 = vadd.f32 %v661, %v1112
        %v1115 = vsel %vm670, %v1114, 0.0
        %1116 = vadd.xlane.f32.xlu0 %v1115
        %v1117 = vpop.xlane.xlu0 %1116
        %v1118 = vrcp.pop 32.0
        %v1119 = vmul.f32 32.0, %v1118
        %v1120 = vsub.f32 1.0, %v1119
        %v1121 = vmul.f32 %v1118, %v1120
        %v1122 = vadd.f32 %v1118, %v1121
        %vm1123 = vweird.f32 %v1118
        %v1124 = vsel %vm1123, %v1118, %v1122
        %v1125 = vmul.f32 %v1117, %v1124
        %v1126 = vsub.f32 %v1114, %v1125
        %v1127 = vmul.f32 %v1126, %v1126
        %v1128 = vsel %vm670, %v1127, 0.0
        %1129 = vadd.xlane.f32.xlu0 %v1128
        %v1130 = vpop.xlane.xlu0 %1129
        %v1131 = vmul.f32 %v1130, 0.032258064
        %v1132 = vrsqrt.pop %v1131
        %v1133 = vmul.f32 %v1132, %v1131
        %v1134 = vmul.f32 %v1133, %v1132
        %v1135 = vmul.f32 0.5, %v1134
        %v1136 = vsub.f32 1.5, %v1135
        %v1137 = vmul.f32 %v1132, %v1136
        %v1138 = vmul.f32 %v1131, %v1137
        %vm1139 = vcmp.eq.f32.partialorder %v1131, inf
        %v1140 = vsel %vm1139, %v1131, %v1138
        %vm1141 = vcmp.eq.f32.partialorder %v1131, 0.0
        %v1142 = vand.u32 %v1131, 2147483648
        %v1143 = vsel %vm1141, %v1142, %v1140
        %v1144 = vld [vmem:[%s14] sm:$0x1]
        %v1146 = vperm.slane %v1144, 0
        %v1148 = vmul.f32 %v1146, %v1126
        %v1149 = vadd.f32 %v1143, 1e-06
        %v1150 = vrcp.pop %v1149
        %v1151 = vmul.f32 %v1149, %v1150
        %v1152 = vsub.f32 1.0, %v1151
        %v1153 = vmul.f32 %v1150, %v1152
        %v1154 = vadd.f32 %v1150, %v1153
        %vm1155 = vweird.f32 %v1149
        %vm1156 = vweird.f32 %v1150
        %vm1157 = vmor %vm1155, %vm1156
        %v1158 = vsel %vm1157, %v1150, %v1154
        %v1159 = vand.u32 2147483647, %v1149
        %vm1160 = vcmp.eq.f32.partialorder %v1159, 8.507059e+37
        %v1161 = vand.u32 %v1149, 2147483648
        %v1162 = vor.u32 1.1754944e-38, %v1161
        %v1163 = vsel %vm1160, %v1162, %v1158
        %v1164 = vmul.f32 %v1148, %v1163
        %v1165 = vld [vmem:[%s15] sm:$0x1]
        %v1167 = vperm.slane %v1165, 0
        %v1169 = vadd.f32 %v1164, %v1167
        %v1170 = vld [vmem:[#allocation8] sm:$0xff]
        %v1171 = vld [vmem:[#allocation8 + $0x8] sm:$0xff]
        %v1172 = vld [vmem:[#allocation8 + $0x10] sm:$0xff]
        %v1173 = vld [vmem:[#allocation8 + $0x18] sm:$0xff]
        %v1174 = vld [vmem:[%s11] sm:$0x1]
        %v1176 = vperm.slane %v1174, 0
        %v1179 = vsel %vm670, %v1169, 0
        %1181 = vmatpush.msra.mxu0 0.0
        %1182 = vmatpush.msra.mxu0 0.0
        %1183 = vmatpush.msra.mxu0 0.0
        %1184 = vmatpush.msra.mxu0 0.0
        %1185 = vmatpush.msra.mxu0 0.0
        %1186 = vmatpush.msra.mxu0 0.0
        %1187 = vmatpush.msra.mxu0 0.0
        %1188 = vmatpush.msra.mxu0 0.0
        %1189 = vmatpush.msra.mxu0 0.0
        %1190 = vmatpush.msra.mxu0 0.0
        %1191 = vmatpush.msra.mxu0 0.0
        %1192 = vmatpush.msra.mxu0 0.0
        %1193 = vmatpush.msra.mxu0 %v1173
        %1194 = vmatpush.msra.mxu0 %v1172
        %1195 = vmatpush.msra.mxu0 %v1171
        %1196 = vmatpush.msra.mxu0 %v1170
        %1197 = vmatmul.f32.gmra.mxu0 %v1179
        %v1198 = vpop.f32.mrf.mxu0
        %v1199 = vadd.f32 %v1176, %v1198
        %1200 = vdwg.mxu0
        %v1201 = vmax.f32 %v1199, 0.0
        %v1202 = vld [vmem:[%s12] sm:$0xff]
        %v1203 = vld [vmem:[%s12 + $0x8] sm:$0xff]
        %v1204 = vld [vmem:[%s12 + $0x10] sm:$0xff]
        %v1205 = vld [vmem:[%s12 + $0x18] sm:$0xff]
        %v1206 = vld [vmem:[%s12 + $0x20] sm:$0xff]
        %v1207 = vld [vmem:[%s12 + $0x28] sm:$0xff]
        %v1208 = vld [vmem:[%s12 + $0x30] sm:$0xff]
        %v1209 = vld [vmem:[%s12 + $0x38] sm:$0xff]
        %v1210 = vld [vmem:[%s13] sm:$0x1]
        %v1212 = vperm.slane %v1210, 0
        %vm1214 = vcmask 523264
        %v1216 = vsel %vm1214, %v1201, 0
        %1218 = vmatpush.msra.mxu0 0.0
        %1219 = vmatpush.msra.mxu0 0.0
        %1220 = vmatpush.msra.mxu0 0.0
        %1221 = vmatpush.msra.mxu0 0.0
        %1222 = vmatpush.msra.mxu0 0.0
        %1223 = vmatpush.msra.mxu0 0.0
        %1224 = vmatpush.msra.mxu0 0.0
        %1225 = vmatpush.msra.mxu0 0.0
        %1226 = vmatpush.msra.mxu0 %v1209
        %1227 = vmatpush.msra.mxu0 %v1208
        %1228 = vmatpush.msra.mxu0 %v1207
        %1229 = vmatpush.msra.mxu0 %v1206
        %1230 = vmatpush.msra.mxu0 %v1205
        %1231 = vmatpush.msra.mxu0 %v1204
        %1232 = vmatpush.msra.mxu0 %v1203
        %1233 = vmatpush.msra.mxu0 %v1202
        %1234 = vmatmul.f32.gmra.mxu0 %v1216
        %v1235 = vpop.f32.mrf.mxu0
        %v1236 = vadd.f32 %v1212, %v1235
        %1237 = vdwg.mxu0
        %v1238 = vadd.f32 %v1169, %v1236
        %v1239 = vsel %vm670, %v1238, 0.0
        %1240 = vadd.xlane.f32.xlu0 %v1239
        %v1241 = vpop.xlane.xlu0 %1240
        %v1242 = vmul.f32 %v1241, %v1124
        %v1243 = vsub.f32 %v1238, %v1242
        %v1244 = vmul.f32 %v1243, %v1243
        %v1245 = vsel %vm670, %v1244, 0.0
        %1246 = vadd.xlane.f32.xlu0 %v1245
        %v1247 = vpop.xlane.xlu0 %1246
        %v1248 = vmul.f32 %v1247, 0.032258064
        %v1249 = vrsqrt.pop %v1248
        %v1250 = vmul.f32 %v1249, %v1248
        %v1251 = vmul.f32 %v1250, %v1249
        %v1252 = vmul.f32 0.5, %v1251
        %v1253 = vsub.f32 1.5, %v1252
        %v1254 = vmul.f32 %v1249, %v1253
        %v1255 = vmul.f32 %v1248, %v1254
        %vm1256 = vcmp.eq.f32.partialorder %v1248, inf
        %v1257 = vsel %vm1256, %v1248, %v1255
        %vm1258 = vcmp.eq.f32.partialorder %v1248, 0.0
        %v1259 = vand.u32 %v1248, 2147483648
        %v1260 = vsel %vm1258, %v1259, %v1257
        %v1261 = vld [vmem:[%s16] sm:$0x1]
        %v1263 = vperm.slane %v1261, 0
        %v1265 = vmul.f32 %v1263, %v1243
        %v1266 = vadd.f32 %v1260, 1e-06
        %v1267 = vrcp.pop %v1266
        %v1268 = vmul.f32 %v1266, %v1267
        %v1269 = vsub.f32 1.0, %v1268
        %v1270 = vmul.f32 %v1267, %v1269
        %v1271 = vadd.f32 %v1267, %v1270
        %vm1272 = vweird.f32 %v1266
        %vm1273 = vweird.f32 %v1267
        %vm1274 = vmor %vm1272, %vm1273
        %v1275 = vsel %vm1274, %v1267, %v1271
        %v1276 = vand.u32 2147483647, %v1266
        %vm1277 = vcmp.eq.f32.partialorder %v1276, 8.507059e+37
        %v1278 = vand.u32 %v1266, 2147483648
        %v1279 = vor.u32 1.1754944e-38, %v1278
        %v1280 = vsel %vm1277, %v1279, %v1275
        %v1281 = vmul.f32 %v1265, %v1280
        %v1282 = vld [vmem:[%s17] sm:$0x1]
        %v1284 = vperm.slane %v1282, 0
        %v1286 = vadd.f32 %v1281, %v1284
        %1287 = vst.msk [vmem:[%s660] sm:$0xff] %vm670, %v1286
        %s1288 = sand.u32 %s435, 1
        %s1289 = scalar_lea.sflag [#allocation4], %s1288
        %s1290 = sand.u32 %s435, 1
        %s1291 = smul.addr %s1290, 8
        %s1292 = scalar_lea.vmem [#allocation10], %s1291
        // Predicated region
        $region109: #{tpu_custom_call.1} parent=91 // pred_check
          %p1293 = pneg %p445
        $region110: #{tpu_custom_call.1} parent=91 // pred_check_branch
          %1295 = sbr.rel (%p1293) target = $region112
        $region111: #{tpu_custom_call.1} parent=91 // pred_region
          %1297 = vsyncadd %s1289, 0
          %s1298 = smul.addr %s39, 8
          %s1299 = scalar_lea.hbm %s18, %s1298
          %s1301 = sshll.u32 %s1292, 4
          %s1302 = int_to_ptr.vmem [resolvable:$true] %s1301
          %s1303 = sshll.u32 %s1299, 4
          %s1304 = int_to_ptr.hbm [resolvable:$true] %s1303
          %1306 = dma.vmem_to_hbm [thread:$0]  %s1302, 128, %s1304, %s1289
        $region112: #{tpu_custom_call.1} parent=91 // pred_fallthru
          _
      $region92: #{tpu_custom_call.1} parent=5 // pred_fallthru
        _
      %p1307 = scmp.le.s32.totalorder 2, %s34
      // Predicated region
      $region113: #{tpu_custom_call.1} parent=5 // pred_check
        %p1308 = pneg %p1307
      $region114: #{tpu_custom_call.1} parent=5 // pred_check_branch
        %1310 = sbr.rel (%p1308) target = $region116
      $region115: #{tpu_custom_call.1} parent=5 // pred_region
        %s1311 = ssub.s32 %s34, 2
        // Predicated region
        $region117: #{tpu_custom_call.1} parent=115 // pred_check
          %p1312 = pneg %p451
        $region118: #{tpu_custom_call.1} parent=115 // pred_check_branch
          %1314 = sbr.rel (%p1312) target = $region120
        $region119: #{tpu_custom_call.1} parent=115 // pred_region
          %s1315 = sand.u32 %s436, 1
          %s1316 = scalar_lea.sflag [#allocation4], %s1315
          %s1317 = sand.u32 %s436, 1
          %s1318 = smul.addr %s1317, 8
          %s1319 = scalar_lea.vmem [#allocation10], %s1318
          %1321 = dma.done %s1316, 128
        $region120: #{tpu_custom_call.1} parent=115 // pred_fallthru
          _
      $region116: #{tpu_custom_call.1} parent=5 // pred_fallthru
        _
    $region6: #{tpu_custom_call.1} parent=1 // loop_footer
      %s38 = sadd.s32 1, %s34
    $region7: #{tpu_custom_call.1} parent=1 // loop_footer_branch
      %33 = sbr.rel target = $region3
    $region8: #{tpu_custom_call.1} parent=1 // loop_exit
      _
    %1322 = vsyncpa [#allocation3], 1
    %s1323 = scalar_lea.sflag [#allocation3], 1
    %1324 = vsyncpa %s1323, 1
    %1325 = vsyncpa [#allocation6], 1
    %s1326 = scalar_lea.sflag [#allocation6], 1
    %1327 = vsyncpa %s1326, 1
    %1328 = vsyncpa [#allocation9], 1
    %1329 = vsyncpa [#allocation4], 1
    %s1330 = scalar_lea.sflag [#allocation4], 1
    %1331 = vsyncpa %s1330, 1

// kernel: tpu_custom_call.1
$region0: #{tpu_custom_call.1}
  #allocation0 [shape = 'u32[]', space=smem, size = 0x4, offset = 0x4, fixed_abs, tag = 'smem constant byte address 0x4 - core index']
  #allocation1 [shape = 'u32[72,128]{1,0:T(1,128)}', space=vmem, size = 0x9000, scoped, tag = 'internal scratch']
  %s0 = inlined_call_operand.hbm [shape: f32[16,32], index: 0, kind: input, shape index: {}]
  %s1 = inlined_call_operand.hbm [shape: f32[2,1,8], index: 1, kind: input, shape index: {}]
  %s2 = inlined_call_operand.vmem [shape: f32[32,32], index: 2, kind: input, shape index: {}]
  %s3 = inlined_call_operand.vmem [shape: f32[1,32], index: 3, kind: input, shape index: {}]
  %s4 = inlined_call_operand.vmem [shape: f32[32,32], index: 4, kind: input, shape index: {}]
  %s5 = inlined_call_operand.vmem [shape: f32[1,32], index: 5, kind: input, shape index: {}]
  %s6 = inlined_call_operand.vmem [shape: f32[32,32], index: 6, kind: input, shape index: {}]
  %s7 = inlined_call_operand.vmem [shape: f32[1,32], index: 7, kind: input, shape index: {}]
  %s8 = inlined_call_operand.hbm [shape: f32[32,32], index: 8, kind: input, shape index: {}]
  %s9 = inlined_call_operand.vmem [shape: f32[1,32], index: 9, kind: input, shape index: {}]
  %s10 = inlined_call_operand.hbm [shape: f32[32,64], index: 10, kind: input, shape index: {}]
  %s11 = inlined_call_operand.vmem [shape: f32[1,64], index: 11, kind: input, shape index: {}]
  %s12 = inlined_call_operand.vmem [shape: f32[64,32], index: 12, kind: input, shape index: {}]
  %s13 = inlined_call_operand.vmem [shape: f32[1,32], index: 13, kind: input, shape index: {}]
  %s14 = inlined_call_operand.vmem [shape: f32[1,32], index: 14, kind: input, shape index: {}]
  %s15 = inlined_call_operand.vmem [shape: f32[1,32], index: 15, kind: input, shape index: {}]
  %s16 = inlined_call_operand.vmem [shape: f32[1,32], index: 16, kind: input, shape index: {}]
  %s17 = inlined_call_operand.vmem [shape: f32[1,32], index: 17, kind: input, shape index: {}]
  %s18 = inlined_call_operand.hbm [shape: f32[16,32], index: 18, kind: output, shape index: {}]
  %s19 = sld [smem:[#allocation0]]
  $region121: #{tpu_custom_call.1} parent=0
    _
  %s21 = ssub.s32 1, %s19
  %s22 = scalar_select 0, %s21, %s19
  $region1: #{tpu_custom_call.1} parent=0
    #allocation2 [shape = 'u8[8192]{0}', space=vmem, size = 0x2000, scoped, tag = 'input window, operand 0']
    #allocation3 [shape = 's32[2]{0}', space=sflag, size = 0x8, scoped, tag = 'scoped memory for tpu_custom_call.1']
    #allocation4 [shape = 's32[2]{0}', space=sflag, size = 0x8, scoped, tag = 'scoped memory for tpu_custom_call.1']
    #allocation5 [shape = 'u8[1024]{0}', space=vmem, size = 0x400, scoped, tag = 'input window, operand 1']
    #allocation6 [shape = 's32[2]{0}', space=sflag, size = 0x8, scoped, tag = 'scoped memory for tpu_custom_call.1']
    #allocation7 [shape = 'u8[16384]{0}', space=vmem, size = 0x4000, scoped, tag = 'input window, operand 8, single buffered']
    #allocation8 [shape = 'u8[16384]{0}', space=vmem, size = 0x4000, scoped, tag = 'input window, operand 10, single buffered']
    #allocation9 [shape = 's32[1]{0}', space=sflag, size = 0x4, scoped, tag = 'scoped memory for tpu_custom_call.1']
    #allocation10 [shape = 'u8[8192]{0}', space=vmem, size = 0x2000, scoped, tag = 'output window, operand 0']
    %23 = vsyncpa [#allocation3], 0
    %s24 = scalar_lea.sflag [#allocation3], 1
    %25 = vsyncpa %s24, 0
    %26 = vsyncpa [#allocation6], 0
    %s27 = scalar_lea.sflag [#allocation6], 1
    %28 = vsyncpa %s27, 0
    %29 = vsyncpa [#allocation9], 0
    %30 = vsyncpa [#allocation4], 0
    %s31 = scalar_lea.sflag [#allocation4], 1
    %32 = vsyncpa %s31, 0
    loop: start=0, step=1, limit=4
    $region2: #{tpu_custom_call.1} parent=1 // loop_pre_header
      _
    $region3: #{tpu_custom_call.1} parent=1 // loop_header
      %s34 = sphi 0, %s38
      %p35 = scmp.ge.s32.totalorder %s34, 4
      %s44 = sphi 0, %s46
      %s47 = sphi 0, %s44
      %s48 = sphi 0, %s47
      %s64 = sphi 0, %s48
      %s70 = sphi 0, %s72
      %s73 = sphi 0, %s70
      %s74 = sphi 0, %s73
      %s90 = sphi 0, %s74
      %s94 = sphi 0, %s94
      %s96 = sphi 0, %s94
      %s97 = sphi 0, %s96
      %s111 = sphi 0, %s97
      %s115 = sphi 0, %s115
      %s117 = sphi 0, %s115
      %s118 = sphi 0, %s117
      %s132 = sphi 0, %s118
      %s136 = sphi 0, %s136
      %s138 = sphi 0, %s136
      %s139 = sphi 0, %s138
      %s153 = sphi 0, %s139
      %s157 = sphi 0, %s157
      %s159 = sphi 0, %s157
      %s160 = sphi 0, %s159
      %s174 = sphi 0, %s160
      %s178 = sphi 0, %s178
      %s180 = sphi 0, %s178
      %s181 = sphi 0, %s180
      %s195 = sphi 0, %s181
      %s199 = sphi 0, %s199
      %s201 = sphi 0, %s199
      %s202 = sphi 0, %s201
      %s216 = sphi 0, %s202
      %s220 = sphi 0, %s220
      %s222 = sphi 0, %s220
      %s223 = sphi 0, %s222
      %s237 = sphi 0, %s223
      %s241 = sphi 0, %s241
      %s243 = sphi 0, %s241
      %s244 = sphi 0, %s243
      %s258 = sphi 0, %s244
      %s262 = sphi 0, %s262
      %s264 = sphi 0, %s262
      %s265 = sphi 0, %s264
      %s279 = sphi 0, %s265
      %s283 = sphi 0, %s283
      %s285 = sphi 0, %s283
      %s286 = sphi 0, %s285
      %s300 = sphi 0, %s286
      %s304 = sphi 0, %s304
      %s306 = sphi 0, %s304
      %s307 = sphi 0, %s306
      %s321 = sphi 0, %s307
      %s325 = sphi 0, %s325
      %s327 = sphi 0, %s325
      %s328 = sphi 0, %s327
      %s342 = sphi 0, %s328
      %s346 = sphi 0, %s346
      %s348 = sphi 0, %s346
      %s349 = sphi 0, %s348
      %s363 = sphi 0, %s349
      %s367 = sphi 0, %s367
      %s369 = sphi 0, %s367
      %s370 = sphi 0, %s369
      %s384 = sphi 0, %s370
      %s388 = sphi 0, %s388
      %s390 = sphi 0, %s388
      %s391 = sphi 0, %s390
      %s405 = sphi 0, %s391
      %s409 = sphi 0, %s409
      %s411 = sphi 0, %s409
      %s412 = sphi 0, %s411
      %s426 = sphi 0, %s412
      %s432 = sphi 0, %s434
      %s435 = sphi 0, %s432
      %s436 = sphi 0, %s435
      %s452 = sphi 0, %s436
    $region4: #{tpu_custom_call.1} parent=1 // loop_header_branch
      %37 = sbr.rel (%p35) target = $region8
    $region5: #{tpu_custom_call.1} parent=1 // loop_body
      %s39 = ssub.s32 %s34, 1
      %s40 = ssub.s32 %s34, 2
      %s41 = sadd.s32 %s34, 1
      %s42 = ssub.s32 %s34, %s41
      %p43 = scmp.eq.s32.totalorder %s42, 0
      %s45 = sadd.s32 %s44, 1
      %s46 = scalar_select %p43, %s44, %s45
      %p49 = pneg %p43
      %p50 = scmp.eq.s32.totalorder %s34, 1
      %p51 = por %p49, %p50
      %p52 = scmp.ne.s32.totalorder %s44, %s47
      %p53 = scmp.eq.s32.totalorder %s34, 0
      %p54 = por %p52, %p53
      %p55 = scmp.ne.s32.totalorder %s44, %s47
      %p56 = scmp.eq.s32.totalorder %s39, 1
      %p57 = por %p55, %p56
      %p58 = scmp.ne.s32.totalorder %s47, %s48
      %p59 = scmp.eq.s32.totalorder %s39, 0
      %p60 = por %p58, %p59
      %p61 = scmp.ne.s32.totalorder %s47, %s48
      %p62 = scmp.eq.s32.totalorder %s40, 1
      %p63 = por %p61, %p62
      %p65 = scmp.ne.s32.totalorder %s48, %s64
      %p66 = scmp.eq.s32.totalorder %s40, 0
      %p67 = por %p65, %p66
      %s68 = ssub.s32 %s34, %s41
      %p69 = scmp.eq.s32.totalorder %s68, 0
      %s71 = sadd.s32 %s70, 1
      %s72 = scalar_select %p69, %s70, %s71
      %p75 = pneg %p69
      %p76 = scmp.eq.s32.totalorder %s34, 1
      %p77 = por %p75, %p76
      %p78 = scmp.ne.s32.totalorder %s70, %s73
      %p79 = scmp.eq.s32.totalorder %s34, 0
      %p80 = por %p78, %p79
      %p81 = scmp.ne.s32.totalorder %s70, %s73
      %p82 = scmp.eq.s32.totalorder %s39, 1
      %p83 = por %p81, %p82
      %p84 = scmp.ne.s32.totalorder %s73, %s74
      %p85 = scmp.eq.s32.totalorder %s39, 0
      %p86 = por %p84, %p85
      %p87 = scmp.ne.s32.totalorder %s73, %s74
      %p88 = scmp.eq.s32.totalorder %s40, 1
      %p89 = por %p87, %p88
      %p91 = scmp.ne.s32.totalorder %s74, %s90
      %p92 = scmp.eq.s32.totalorder %s40, 0
      %p93 = por %p91, %p92
      %s95 = sadd.s32 %s94, 1
      %p98 = scmp.eq.s32.totalorder %s34, 1
      %p99 = scmp.ne.s32.totalorder %s94, %s96
      %p100 = scmp.eq.s32.totalorder %s34, 0
      %p101 = por %p99, %p100
      %p102 = scmp.ne.s32.totalorder %s94, %s96
      %p103 = scmp.eq.s32.totalorder %s39, 1
      %p104 = por %p102, %p103
      %p105 = scmp.ne.s32.totalorder %s96, %s97
      %p106 = scmp.eq.s32.totalorder %s39, 0
      %p107 = por %p105, %p106
      %p108 = scmp.ne.s32.totalorder %s96, %s97
      %p109 = scmp.eq.s32.totalorder %s40, 1
      %p110 = por %p108, %p109
      %p112 = scmp.ne.s32.totalorder %s97, %s111
      %p113 = scmp.eq.s32.totalorder %s40, 0
      %p114 = por %p112, %p113
      %s116 = sadd.s32 %s115, 1
      %p119 = scmp.eq.s32.totalorder %s34, 1
      %p120 = scmp.ne.s32.totalorder %s115, %s117
      %p121 = scmp.eq.s32.totalorder %s34, 0
      %p122 = por %p120, %p121
      %p123 = scmp.ne.s32.totalorder %s115, %s117
      %p124 = scmp.eq.s32.totalorder %s39, 1
      %p125 = por %p123, %p124
      %p126 = scmp.ne.s32.totalorder %s117, %s118
      %p127 = scmp.eq.s32.totalorder %s39, 0
      %p128 = por %p126, %p127
      %p129 = scmp.ne.s32.totalorder %s117, %s118
      %p130 = scmp.eq.s32.totalorder %s40, 1
      %p131 = por %p129, %p130
      %p133 = scmp.ne.s32.totalorder %s118, %s132
      %p134 = scmp.eq.s32.totalorder %s40, 0
      %p135 = por %p133, %p134
      %s137 = sadd.s32 %s136, 1
      %p140 = scmp.eq.s32.totalorder %s34, 1
      %p141 = scmp.ne.s32.totalorder %s136, %s138
      %p142 = scmp.eq.s32.totalorder %s34, 0
      %p143 = por %p141, %p142
      %p144 = scmp.ne.s32.totalorder %s136, %s138
      %p145 = scmp.eq.s32.totalorder %s39, 1
      %p146 = por %p144, %p145
      %p147 = scmp.ne.s32.totalorder %s138, %s139
      %p148 = scmp.eq.s32.totalorder %s39, 0
      %p149 = por %p147, %p148
      %p150 = scmp.ne.s32.totalorder %s138, %s139
      %p151 = scmp.eq.s32.totalorder %s40, 1
      %p152 = por %p150, %p151
      %p154 = scmp.ne.s32.totalorder %s139, %s153
      %p155 = scmp.eq.s32.totalorder %s40, 0
      %p156 = por %p154, %p155
      %s158 = sadd.s32 %s157, 1
      %p161 = scmp.eq.s32.totalorder %s34, 1
      %p162 = scmp.ne.s32.totalorder %s157, %s159
      %p163 = scmp.eq.s32.totalorder %s34, 0
      %p164 = por %p162, %p163
      %p165 = scmp.ne.s32.totalorder %s157, %s159
      %p166 = scmp.eq.s32.totalorder %s39, 1
      %p167 = por %p165, %p166
      %p168 = scmp.ne.s32.totalorder %s159, %s160
      %p169 = scmp.eq.s32.totalorder %s39, 0
      %p170 = por %p168, %p169
      %p171 = scmp.ne.s32.totalorder %s159, %s160
      %p172 = scmp.eq.s32.totalorder %s40, 1
      %p173 = por %p171, %p172
      %p175 = scmp.ne.s32.totalorder %s160, %s174
      %p176 = scmp.eq.s32.totalorder %s40, 0
      %p177 = por %p175, %p176
      %s179 = sadd.s32 %s178, 1
      %p182 = scmp.eq.s32.totalorder %s34, 1
      %p183 = scmp.ne.s32.totalorder %s178, %s180
      %p184 = scmp.eq.s32.totalorder %s34, 0
      %p185 = por %p183, %p184
      %p186 = scmp.ne.s32.totalorder %s178, %s180
      %p187 = scmp.eq.s32.totalorder %s39, 1
      %p188 = por %p186, %p187
      %p189 = scmp.ne.s32.totalorder %s180, %s181
      %p190 = scmp.eq.s32.totalorder %s39, 0
      %p191 = por %p189, %p190
      %p192 = scmp.ne.s32.totalorder %s180, %s181
      %p193 = scmp.eq.s32.totalorder %s40, 1
      %p194 = por %p192, %p193
      %p196 = scmp.ne.s32.totalorder %s181, %s195
      %p197 = scmp.eq.s32.totalorder %s40, 0
      %p198 = por %p196, %p197
      %s200 = sadd.s32 %s199, 1
      %p203 = scmp.eq.s32.totalorder %s34, 1
      %p204 = scmp.ne.s32.totalorder %s199, %s201
      %p205 = scmp.eq.s32.totalorder %s34, 0
      %p206 = por %p204, %p205
      %p207 = scmp.ne.s32.totalorder %s199, %s201
      %p208 = scmp.eq.s32.totalorder %s39, 1
      %p209 = por %p207, %p208
      %p210 = scmp.ne.s32.totalorder %s201, %s202
      %p211 = scmp.eq.s32.totalorder %s39, 0
      %p212 = por %p210, %p211
      %p213 = scmp.ne.s32.totalorder %s201, %s202
      %p214 = scmp.eq.s32.totalorder %s40, 1
      %p215 = por %p213, %p214
      %p217 = scmp.ne.s32.totalorder %s202, %s216
      %p218 = scmp.eq.s32.totalorder %s40, 0
      %p219 = por %p217, %p218
      %s221 = sadd.s32 %s220, 1
      %p224 = scmp.eq.s32.totalorder %s34, 1
      %p225 = scmp.ne.s32.totalorder %s220, %s222
      %p226 = scmp.eq.s32.totalorder %s34, 0
      %p227 = por %p225, %p226
      %p228 = scmp.ne.s32.totalorder %s220, %s222
      %p229 = scmp.eq.s32.totalorder %s39, 1
      %p230 = por %p228, %p229
      %p231 = scmp.ne.s32.totalorder %s222, %s223
      %p232 = scmp.eq.s32.totalorder %s39, 0
      %p233 = por %p231, %p232
      %p234 = scmp.ne.s32.totalorder %s222, %s223
      %p235 = scmp.eq.s32.totalorder %s40, 1
      %p236 = por %p234, %p235
      %p238 = scmp.ne.s32.totalorder %s223, %s237
      %p239 = scmp.eq.s32.totalorder %s40, 0
      %p240 = por %p238, %p239
      %s242 = sadd.s32 %s241, 1
      %p245 = scmp.eq.s32.totalorder %s34, 1
      %p246 = scmp.ne.s32.totalorder %s241, %s243
      %p247 = scmp.eq.s32.totalorder %s34, 0
      %p248 = por %p246, %p247
      %p249 = scmp.ne.s32.totalorder %s241, %s243
      %p250 = scmp.eq.s32.totalorder %s39, 1
      %p251 = por %p249, %p250
      %p252 = scmp.ne.s32.totalorder %s243, %s244
      %p253 = scmp.eq.s32.totalorder %s39, 0
      %p254 = por %p252, %p253
      %p255 = scmp.ne.s32.totalorder %s243, %s244
      %p256 = scmp.eq.s32.totalorder %s40, 1
      %p257 = por %p255, %p256
      %p259 = scmp.ne.s32.totalorder %s244, %s258
      %p260 = scmp.eq.s32.totalorder %s40, 0
      %p261 = por %p259, %p260
      %s263 = sadd.s32 %s262, 1
      %p266 = scmp.eq.s32.totalorder %s34, 1
      %p267 = scmp.ne.s32.totalorder %s262, %s264
      %p268 = scmp.eq.s32.totalorder %s34, 0
      %p269 = por %p267, %p268
      %p270 = scmp.ne.s32.totalorder %s262, %s264
      %p271 = scmp.eq.s32.totalorder %s39, 1
      %p272 = por %p270, %p271
      %p273 = scmp.ne.s32.totalorder %s264, %s265
      %p274 = scmp.eq.s32.totalorder %s39, 0
      %p275 = por %p273, %p274
      %p276 = scmp.ne.s32.totalorder %s264, %s265
      %p277 = scmp.eq.s32.totalorder %s40, 1
      %p278 = por %p276, %p277
      %p280 = scmp.ne.s32.totalorder %s265, %s279
      %p281 = scmp.eq.s32.totalorder %s40, 0
      %p282 = por %p280, %p281
      %s284 = sadd.s32 %s283, 1
      %p287 = scmp.eq.s32.totalorder %s34, 1
      %p288 = scmp.ne.s32.totalorder %s283, %s285
      %p289 = scmp.eq.s32.totalorder %s34, 0
      %p290 = por %p288, %p289
      %p291 = scmp.ne.s32.totalorder %s283, %s285
      %p292 = scmp.eq.s32.totalorder %s39, 1
      %p293 = por %p291, %p292
      %p294 = scmp.ne.s32.totalorder %s285, %s286
      %p295 = scmp.eq.s32.totalorder %s39, 0
      %p296 = por %p294, %p295
      %p297 = scmp.ne.s32.totalorder %s285, %s286
      %p298 = scmp.eq.s32.totalorder %s40, 1
      %p299 = por %p297, %p298
      %p301 = scmp.ne.s32.totalorder %s286, %s300
      %p302 = scmp.eq.s32.totalorder %s40, 0
      %p303 = por %p301, %p302
      %s305 = sadd.s32 %s304, 1
      %p308 = scmp.eq.s32.totalorder %s34, 1
      %p309 = scmp.ne.s32.totalorder %s304, %s306
      %p310 = scmp.eq.s32.totalorder %s34, 0
      %p311 = por %p309, %p310
      %p312 = scmp.ne.s32.totalorder %s304, %s306
      %p313 = scmp.eq.s32.totalorder %s39, 1
      %p314 = por %p312, %p313
      %p315 = scmp.ne.s32.totalorder %s306, %s307
      %p316 = scmp.eq.s32.totalorder %s39, 0
      %p317 = por %p315, %p316
      %p318 = scmp.ne.s32.totalorder %s306, %s307
      %p319 = scmp.eq.s32.totalorder %s40, 1
      %p320 = por %p318, %p319
      %p322 = scmp.ne.s32.totalorder %s307, %s321
      %p323 = scmp.eq.s32.totalorder %s40, 0
      %p324 = por %p322, %p323
      %s326 = sadd.s32 %s325, 1
      %p329 = scmp.eq.s32.totalorder %s34, 1
      %p330 = scmp.ne.s32.totalorder %s325, %s327
      %p331 = scmp.eq.s32.totalorder %s34, 0
      %p332 = por %p330, %p331
      %p333 = scmp.ne.s32.totalorder %s325, %s327
      %p334 = scmp.eq.s32.totalorder %s39, 1
      %p335 = por %p333, %p334
      %p336 = scmp.ne.s32.totalorder %s327, %s328
      %p337 = scmp.eq.s32.totalorder %s39, 0
      %p338 = por %p336, %p337
      %p339 = scmp.ne.s32.totalorder %s327, %s328
      %p340 = scmp.eq.s32.totalorder %s40, 1
      %p341 = por %p339, %p340
      %p343 = scmp.ne.s32.totalorder %s328, %s342
      %p344 = scmp.eq.s32.totalorder %s40, 0
      %p345 = por %p343, %p344
      %s347 = sadd.s32 %s346, 1
      %p350 = scmp.eq.s32.totalorder %s34, 1
      %p351 = scmp.ne.s32.totalorder %s346, %s348
      %p352 = scmp.eq.s32.totalorder %s34, 0
      %p353 = por %p351, %p352
      %p354 = scmp.ne.s32.totalorder %s346, %s348
      %p355 = scmp.eq.s32.totalorder %s39, 1
      %p356 = por %p354, %p355
      %p357 = scmp.ne.s32.totalorder %s348, %s349
      %p358 = scmp.eq.s32.totalorder %s39, 0
      %p359 = por %p357, %p358
      %p360 = scmp.ne.s32.totalorder %s348, %s349
      %p361 = scmp.eq.s32.totalorder %s40, 1
      %p362 = por %p360, %p361
      %p364 = scmp.ne.s32.totalorder %s349, %s363
      %p365 = scmp.eq.s32.totalorder %s40, 0
      %p366 = por %p364, %p365
      %s368 = sadd.s32 %s367, 1
      %p371 = scmp.eq.s32.totalorder %s34, 1
      %p372 = scmp.ne.s32.totalorder %s367, %s369
      %p373 = scmp.eq.s32.totalorder %s34, 0
      %p374 = por %p372, %p373
      %p375 = scmp.ne.s32.totalorder %s367, %s369
      %p376 = scmp.eq.s32.totalorder %s39, 1
      %p377 = por %p375, %p376
      %p378 = scmp.ne.s32.totalorder %s369, %s370
      %p379 = scmp.eq.s32.totalorder %s39, 0
      %p380 = por %p378, %p379
      %p381 = scmp.ne.s32.totalorder %s369, %s370
      %p382 = scmp.eq.s32.totalorder %s40, 1
      %p383 = por %p381, %p382
      %p385 = scmp.ne.s32.totalorder %s370, %s384
      %p386 = scmp.eq.s32.totalorder %s40, 0
      %p387 = por %p385, %p386
      %s389 = sadd.s32 %s388, 1
      %p392 = scmp.eq.s32.totalorder %s34, 1
      %p393 = scmp.ne.s32.totalorder %s388, %s390
      %p394 = scmp.eq.s32.totalorder %s34, 0
      %p395 = por %p393, %p394
      %p396 = scmp.ne.s32.totalorder %s388, %s390
      %p397 = scmp.eq.s32.totalorder %s39, 1
      %p398 = por %p396, %p397
      %p399 = scmp.ne.s32.totalorder %s390, %s391
      %p400 = scmp.eq.s32.totalorder %s39, 0
      %p401 = por %p399, %p400
      %p402 = scmp.ne.s32.totalorder %s390, %s391
      %p403 = scmp.eq.s32.totalorder %s40, 1
      %p404 = por %p402, %p403
      %p406 = scmp.ne.s32.totalorder %s391, %s405
      %p407 = scmp.eq.s32.totalorder %s40, 0
      %p408 = por %p406, %p407
      %s410 = sadd.s32 %s409, 1
      %p413 = scmp.eq.s32.totalorder %s34, 1
      %p414 = scmp.ne.s32.totalorder %s409, %s411
      %p415 = scmp.eq.s32.totalorder %s34, 0
      %p416 = por %p414, %p415
      %p417 = scmp.ne.s32.totalorder %s409, %s411
      %p418 = scmp.eq.s32.totalorder %s39, 1
      %p419 = por %p417, %p418
      %p420 = scmp.ne.s32.totalorder %s411, %s412
      %p421 = scmp.eq.s32.totalorder %s39, 0
      %p422 = por %p420, %p421
      %p423 = scmp.ne.s32.totalorder %s411, %s412
      %p424 = scmp.eq.s32.totalorder %s40, 1
      %p425 = por %p423, %p424
      %p427 = scmp.ne.s32.totalorder %s412, %s426
      %p428 = scmp.eq.s32.totalorder %s40, 0
      %p429 = por %p427, %p428
      %s430 = ssub.s32 %s34, %s41
      %p431 = scmp.eq.s32.totalorder %s430, 0
      %s433 = sadd.s32 %s432, 1
      %s434 = scalar_select %p431, %s432, %s433
      %p437 = pneg %p431
      %p438 = scmp.eq.s32.totalorder %s34, 1
      %p439 = por %p437, %p438
      %p440 = scmp.ne.s32.totalorder %s432, %s435
      %p441 = scmp.eq.s32.totalorder %s34, 0
      %p442 = por %p440, %p441
      %p443 = scmp.ne.s32.totalorder %s432, %s435
      %p444 = scmp.eq.s32.totalorder %s39, 1
      %p445 = por %p443, %p444
      %p446 = scmp.ne.s32.totalorder %s435, %s436
      %p447 = scmp.eq.s32.totalorder %s39, 0
      %p448 = por %p446, %p447
      %p449 = scmp.ne.s32.totalorder %s435, %s436
      %p450 = scmp.eq.s32.totalorder %s40, 1
      %p451 = por %p449, %p450
      %p453 = scmp.ne.s32.totalorder %s436, %s452
      %p454 = scmp.eq.s32.totalorder %s40, 0
      %p455 = por %p453, %p454
      %p456 = scmp.le.s32.totalorder 1, %s34
      %p457 = scmp.lt.s32.totalorder %s34, 3
      %p458 = pnand %p456, %p457
      %p459 = pneg %p458
      // Predicated region
      $region9: #{tpu_custom_call.1} parent=5 // pred_check
        _
      $region10: #{tpu_custom_call.1} parent=5 // pred_check_branch
        %461 = sbr.rel (%p458) target = $region12
      $region11: #{tpu_custom_call.1} parent=5 // pred_region
        %s462 = ssub.s32 %s34, 1
        // Predicated region
        $region13: #{tpu_custom_call.1} parent=11 // pred_check
          %p463 = pneg %p107
        $region14: #{tpu_custom_call.1} parent=11 // pred_check_branch
          %465 = sbr.rel (%p463) target = $region16
        $region15: #{tpu_custom_call.1} parent=11 // pred_region
          _
        $region16: #{tpu_custom_call.1} parent=11 // pred_fallthru
          _
        // Predicated region
        $region17: #{tpu_custom_call.1} parent=11 // pred_check
          %p466 = pneg %p128
        $region18: #{tpu_custom_call.1} parent=11 // pred_check_branch
          %468 = sbr.rel (%p466) target = $region20
        $region19: #{tpu_custom_call.1} parent=11 // pred_region
          _
        $region20: #{tpu_custom_call.1} parent=11 // pred_fallthru
          _
        // Predicated region
        $region21: #{tpu_custom_call.1} parent=11 // pred_check
          %p469 = pneg %p149
        $region22: #{tpu_custom_call.1} parent=11 // pred_check_branch
          %471 = sbr.rel (%p469) target = $region24
        $region23: #{tpu_custom_call.1} parent=11 // pred_region
          _
        $region24: #{tpu_custom_call.1} parent=11 // pred_fallthru
          _
        // Predicated region
        $region25: #{tpu_custom_call.1} parent=11 // pred_check
          %p472 = pneg %p170
        $region26: #{tpu_custom_call.1} parent=11 // pred_check_branch
          %474 = sbr.rel (%p472) target = $region28
        $region27: #{tpu_custom_call.1} parent=11 // pred_region
          _
        $region28: #{tpu_custom_call.1} parent=11 // pred_fallthru
          _
        // Predicated region
        $region29: #{tpu_custom_call.1} parent=11 // pred_check
          %p475 = pneg %p191
        $region30: #{tpu_custom_call.1} parent=11 // pred_check_branch
          %477 = sbr.rel (%p475) target = $region32
        $region31: #{tpu_custom_call.1} parent=11 // pred_region
          _
        $region32: #{tpu_custom_call.1} parent=11 // pred_fallthru
          _
        // Predicated region
        $region33: #{tpu_custom_call.1} parent=11 // pred_check
          %p478 = pneg %p212
        $region34: #{tpu_custom_call.1} parent=11 // pred_check_branch
          %480 = sbr.rel (%p478) target = $region36
        $region35: #{tpu_custom_call.1} parent=11 // pred_region
          _
        $region36: #{tpu_custom_call.1} parent=11 // pred_fallthru
          _
        // Predicated region
        $region37: #{tpu_custom_call.1} parent=11 // pred_check
          %p481 = pneg %p233
        $region38: #{tpu_custom_call.1} parent=11 // pred_check_branch
          %483 = sbr.rel (%p481) target = $region40
        $region39: #{tpu_custom_call.1} parent=11 // pred_region
          %485 = vsyncadd [#allocation6], 0
          %s486 = sshll.u32 %s8, 4
          %s487 = int_to_ptr.hbm [resolvable:$true] %s486
          %s488 = sshll.u32 [#allocation7], 4
          %s489 = int_to_ptr.vmem [resolvable:$true] %s488
          %494 = dma.hbm_to_vmem [thread:$0]  %s487, 512, %s489, [#allocation6], 128, 128, 8
        $region40: #{tpu_custom_call.1} parent=11 // pred_fallthru
          _
        // Predicated region
        $region41: #{tpu_custom_call.1} parent=11 // pred_check
          %p495 = pneg %p254
        $region42: #{tpu_custom_call.1} parent=11 // pred_check_branch
          %497 = sbr.rel (%p495) target = $region44
        $region43: #{tpu_custom_call.1} parent=11 // pred_region
          _
        $region44: #{tpu_custom_call.1} parent=11 // pred_fallthru
          _
        // Predicated region
        $region45: #{tpu_custom_call.1} parent=11 // pred_check
          %p498 = pneg %p275
        $region46: #{tpu_custom_call.1} parent=11 // pred_check_branch
          %500 = sbr.rel (%p498) target = $region48
        $region47: #{tpu_custom_call.1} parent=11 // pred_region
          %502 = vsyncadd [#allocation9], 0
          %s503 = sshll.u32 %s10, 4
          %s504 = int_to_ptr.hbm [resolvable:$true] %s503
          %s505 = sshll.u32 [#allocation8], 4
          %s506 = int_to_ptr.vmem [resolvable:$true] %s505
          %511 = dma.hbm_to_vmem [thread:$0]  %s504, 512, %s506, [#allocation9], 128, 128, 8
        $region48: #{tpu_custom_call.1} parent=11 // pred_fallthru
          _
        // Predicated region
        $region49: #{tpu_custom_call.1} parent=11 // pred_check
          %p512 = pneg %p296
        $region50: #{tpu_custom_call.1} parent=11 // pred_check_branch
          %514 = sbr.rel (%p512) target = $region52
        $region51: #{tpu_custom_call.1} parent=11 // pred_region
          _
        $region52: #{tpu_custom_call.1} parent=11 // pred_fallthru
          _
        // Predicated region
        $region53: #{tpu_custom_call.1} parent=11 // pred_check
          %p515 = pneg %p317
        $region54: #{tpu_custom_call.1} parent=11 // pred_check_branch
          %517 = sbr.rel (%p515) target = $region56
        $region55: #{tpu_custom_call.1} parent=11 // pred_region
          _
        $region56: #{tpu_custom_call.1} parent=11 // pred_fallthru
          _
        // Predicated region
        $region57: #{tpu_custom_call.1} parent=11 // pred_check
          %p518 = pneg %p338
        $region58: #{tpu_custom_call.1} parent=11 // pred_check_branch
          %520 = sbr.rel (%p518) target = $region60
        $region59: #{tpu_custom_call.1} parent=11 // pred_region
          _
        $region60: #{tpu_custom_call.1} parent=11 // pred_fallthru
          _
        // Predicated region
        $region61: #{tpu_custom_call.1} parent=11 // pred_check
          %p521 = pneg %p359
        $region62: #{tpu_custom_call.1} parent=11 // pred_check_branch
          %523 = sbr.rel (%p521) target = $region64
        $region63: #{tpu_custom_call.1} parent=11 // pred_region
          _
        $region64: #{tpu_custom_call.1} parent=11 // pred_fallthru
          _
        // Predicated region
        $region65: #{tpu_custom_call.1} parent=11 // pred_check
          %p524 = pneg %p380
        $region66: #{tpu_custom_call.1} parent=11 // pred_check_branch
          %526 = sbr.rel (%p524) target = $region68
        $region67: #{tpu_custom_call.1} parent=11 // pred_region
          _
        $region68: #{tpu_custom_call.1} parent=11 // pred_fallthru
          _
        // Predicated region
        $region69: #{tpu_custom_call.1} parent=11 // pred_check
          %p527 = pneg %p401
        $region70: #{tpu_custom_call.1} parent=11 // pred_check_branch
          %529 = sbr.rel (%p527) target = $region72
        $region71: #{tpu_custom_call.1} parent=11 // pred_region
          _
        $region72: #{tpu_custom_call.1} parent=11 // pred_fallthru
          _
        // Predicated region
        $region73: #{tpu_custom_call.1} parent=11 // pred_check
          %p530 = pneg %p422
        $region74: #{tpu_custom_call.1} parent=11 // pred_check_branch
          %532 = sbr.rel (%p530) target = $region76
        $region75: #{tpu_custom_call.1} parent=11 // pred_region
          _
        $region76: #{tpu_custom_call.1} parent=11 // pred_fallthru
          _
      $region12: #{tpu_custom_call.1} parent=5 // pred_fallthru
        _
      %p533 = scmp.lt.s32.totalorder %s34, 2
      // Predicated region
      $region77: #{tpu_custom_call.1} parent=5 // pred_check
        %p534 = pneg %p533
      $region78: #{tpu_custom_call.1} parent=5 // pred_check_branch
        %536 = sbr.rel (%p534) target = $region80
      $region79: #{tpu_custom_call.1} parent=5 // pred_region
        // Predicated region
        $region81: #{tpu_custom_call.1} parent=79 // pred_check
          %p537 = pneg %p54
        $region82: #{tpu_custom_call.1} parent=79 // pred_check_branch
          %539 = sbr.rel (%p537) target = $region84
        $region83: #{tpu_custom_call.1} parent=79 // pred_region
          %s540 = sand.u32 %s44, 1
          %s541 = scalar_lea.sflag [#allocation3], %s540
          %s542 = sand.u32 %s44, 1
          %s543 = smul.addr %s542, 8
          %s544 = scalar_lea.vmem [#allocation2], %s543
          %546 = vsyncadd %s541, 0
          %s547 = smul.addr %s34, 8
          %s548 = scalar_lea.hbm %s0, %s547
          %s550 = sshll.u32 %s548, 4
          %s551 = int_to_ptr.hbm [resolvable:$true] %s550
          %s552 = sshll.u32 %s544, 4
          %s553 = int_to_ptr.vmem [resolvable:$true] %s552
          %555 = dma.hbm_to_vmem [thread:$0]  %s551, 128, %s553, %s541
        $region84: #{tpu_custom_call.1} parent=79 // pred_fallthru
          _
        // Predicated region
        $region85: #{tpu_custom_call.1} parent=79 // pred_check
          %p556 = pneg %p80
        $region86: #{tpu_custom_call.1} parent=79 // pred_check_branch
          %558 = sbr.rel (%p556) target = $region88
        $region87: #{tpu_custom_call.1} parent=79 // pred_region
          %s559 = sand.u32 %s34, 1
          %s560 = scalar_lea.sflag [#allocation6], %s559
          %s561 = sand.u32 %s70, 1
          %s562 = scalar_lea.vmem [#allocation5], %s561
          %564 = vsyncadd %s560, 0
          %s565 = scalar_lea.hbm %s1, %s34
          %s567 = sshll.u32 %s565, 4
          %s568 = int_to_ptr.hbm [resolvable:$true] %s567
          %s569 = sshll.u32 %s562, 4
          %s570 = int_to_ptr.vmem [resolvable:$true] %s569
          %572 = dma.hbm_to_vmem [thread:$0]  %s568, 16, %s570, %s560
        $region88: #{tpu_custom_call.1} parent=79 // pred_fallthru
          _
      $region80: #{tpu_custom_call.1} parent=5 // pred_fallthru
        _
      %p573 = scmp.le.s32.totalorder 1, %s34
      %p574 = scmp.lt.s32.totalorder %s34, 3
      %p575 = pnand %p573, %p574
      %p576 = pneg %p575
      // Predicated region
      $region89: #{tpu_custom_call.1} parent=5 // pred_check
        _
      $region90: #{tpu_custom_call.1} parent=5 // pred_check_branch
        %578 = sbr.rel (%p575) target = $region92
      $region91: #{tpu_custom_call.1} parent=5 // pred_region
        %s579 = ssub.s32 %s34, 1
        %s580 = sand.u32 %s47, 1
        %s581 = scalar_lea.sflag [#allocation3], %s580
        %s582 = sand.u32 %s47, 1
        %s583 = smul.addr %s582, 8
        %s584 = scalar_lea.vmem [#allocation2], %s583
        // Predicated region
        $region93: #{tpu_custom_call.1} parent=91 // pred_check
          %p585 = pneg %p60
        $region94: #{tpu_custom_call.1} parent=91 // pred_check_branch
          %587 = sbr.rel (%p585) target = $region96
        $region95: #{tpu_custom_call.1} parent=91 // pred_region
          %589 = dma.done %s581, 128
        $region96: #{tpu_custom_call.1} parent=91 // pred_fallthru
          _
        %s590 = sand.u32 %s39, 1
        %s591 = scalar_lea.sflag [#allocation6], %s590
        %s592 = sand.u32 %s73, 1
        %s593 = scalar_lea.vmem [#allocation5], %s592
        // Predicated region
        $region97: #{tpu_custom_call.1} parent=91 // pred_check
          %p594 = pneg %p86
        $region98: #{tpu_custom_call.1} parent=91 // pred_check_branch
          %596 = sbr.rel (%p594) target = $region100
        $region99: #{tpu_custom_call.1} parent=91 // pred_region
          %598 = dma.done %s591, 16
        $region100: #{tpu_custom_call.1} parent=91 // pred_fallthru
          _
        // Predicated region
        $region101: #{tpu_custom_call.1} parent=91 // pred_check
          %p599 = pneg %p233
        $region102: #{tpu_custom_call.1} parent=91 // pred_check_branch
          %601 = sbr.rel (%p599) target = $region104
        $region103: #{tpu_custom_call.1} parent=91 // pred_region
          %603 = dma.done [#allocation6], 512
        $region104: #{tpu_custom_call.1} parent=91 // pred_fallthru
          _
        // Predicated region
        $region105: #{tpu_custom_call.1} parent=91 // pred_check
          %p604 = pneg %p275
        $region106: #{tpu_custom_call.1} parent=91 // pred_check_branch
          %606 = sbr.rel (%p604) target = $region108
        $region107: #{tpu_custom_call.1} parent=91 // pred_region
          %608 = dma.done [#allocation9], 512
        $region108: #{tpu_custom_call.1} parent=91 // pred_fallthru
          _
        %s609 = sand.u32 %s47, 1
        %s610 = scalar_lea.sflag [#allocation3], %s609
        %s611 = sand.u32 %s47, 1
        %s612 = smul.addr %s611, 8
        %s613 = scalar_lea.vmem [#allocation2], %s612
        %p614 = pneg %p60
        %p615 = pneg %p57
        %s616 = sand.u32 %s39, 1
        %s617 = scalar_lea.sflag [#allocation6], %s616
        %s618 = sand.u32 %s73, 1
        %s619 = scalar_lea.vmem [#allocation5], %s618
        %p620 = pneg %p86
        %p621 = pneg %p83
        %p622 = pneg %p107
        %p623 = pneg %p104
        %p624 = pneg %p128
        %p625 = pneg %p125
        %p626 = pneg %p149
        %p627 = pneg %p146
        %p628 = pneg %p170
        %p629 = pneg %p167
        %p630 = pneg %p191
        %p631 = pneg %p188
        %p632 = pneg %p212
        %p633 = pneg %p209
        %p634 = pneg %p233
        %p635 = pneg %p230
        %p636 = pneg %p254
        %p637 = pneg %p251
        %p638 = pneg %p275
        %p639 = pneg %p272
        %p640 = pneg %p296
        %p641 = pneg %p293
        %p642 = pneg %p317
        %p643 = pneg %p314
        %p644 = pneg %p338
        %p645 = pneg %p335
        %p646 = pneg %p359
        %p647 = pneg %p356
        %p648 = pneg %p380
        %p649 = pneg %p377
        %p650 = pneg %p401
        %p651 = pneg %p398
        %p652 = pneg %p422
        %p653 = pneg %p419
        %p654 = pneg %p448
        %p655 = pneg %p445
        %s656 = sand.u32 %s435, 1
        %s657 = scalar_lea.sflag [#allocation4], %s656
        %s658 = sand.u32 %s435, 1
        %s659 = smul.addr %s658, 8
        %s660 = scalar_lea.vmem [#allocation10], %s659
        %v661 = vld [vmem:[%s584] sm:$0xff]
        %v662 = vld [vmem:[%s2] sm:$0xff]
        %v663 = vld [vmem:[%s2 + $0x8] sm:$0xff]
        %v664 = vld [vmem:[%s2 + $0x10] sm:$0xff]
        %v665 = vld [vmem:[%s2 + $0x18] sm:$0xff]
        %v666 = vld [vmem:[%s3] sm:$0x1]
        %v668 = vperm.slane %v666, 0
        %vm670 = vcmask 261120
        %v672 = vsel %vm670, %v661, 0
        %674 = vmatpush.msra.mxu0 0.0
        %675 = vmatpush.msra.mxu0 0.0
        %676 = vmatpush.msra.mxu0 0.0
        %677 = vmatpush.msra.mxu0 0.0
        %678 = vmatpush.msra.mxu0 0.0
        %679 = vmatpush.msra.mxu0 0.0
        %680 = vmatpush.msra.mxu0 0.0
        %681 = vmatpush.msra.mxu0 0.0
        %682 = vmatpush.msra.mxu0 0.0
        %683 = vmatpush.msra.mxu0 0.0
        %684 = vmatpush.msra.mxu0 0.0
        %685 = vmatpush.msra.mxu0 0.0
        %686 = vmatpush.msra.mxu0 %v665
        %687 = vmatpush.msra.mxu0 %v664
        %688 = vmatpush.msra.mxu0 %v663
        %689 = vmatpush.msra.mxu0 %v662
        %690 = vmatmul.f32.gmra.mxu0 %v672
        %v691 = vpop.f32.mrf.mxu0
        %v692 = vadd.f32 %v668, %v691
        %693 = vdwg.mxu0
        %v694 = vld [vmem:[%s4] sm:$0xff]
        %v695 = vld [vmem:[%s4 + $0x8] sm:$0xff]
        %v696 = vld [vmem:[%s4 + $0x10] sm:$0xff]
        %v697 = vld [vmem:[%s4 + $0x18] sm:$0xff]
        %v698 = vld [vmem:[%s5] sm:$0x1]
        %v700 = vperm.slane %v698, 0
        %702 = vmatpush.msra.mxu0 0.0
        %703 = vmatpush.msra.mxu0 0.0
        %704 = vmatpush.msra.mxu0 0.0
        %705 = vmatpush.msra.mxu0 0.0
        %706 = vmatpush.msra.mxu0 0.0
        %707 = vmatpush.msra.mxu0 0.0
        %708 = vmatpush.msra.mxu0 0.0
        %709 = vmatpush.msra.mxu0 0.0
        %710 = vmatpush.msra.mxu0 0.0
        %711 = vmatpush.msra.mxu0 0.0
        %712 = vmatpush.msra.mxu0 0.0
        %713 = vmatpush.msra.mxu0 0.0
        %714 = vmatpush.msra.mxu0 %v697
        %715 = vmatpush.msra.mxu0 %v696
        %716 = vmatpush.msra.mxu0 %v695
        %717 = vmatpush.msra.mxu0 %v694
        %718 = vmatmul.f32.gmra.mxu0 %v672
        %v719 = vpop.f32.mrf.mxu0
        %v720 = vadd.f32 %v700, %v719
        %721 = vdwg.mxu0
        %v722 = vld [vmem:[%s6] sm:$0xff]
        %v723 = vld [vmem:[%s6 + $0x8] sm:$0xff]
        %v724 = vld [vmem:[%s6 + $0x10] sm:$0xff]
        %v725 = vld [vmem:[%s6 + $0x18] sm:$0xff]
        %v726 = vld [vmem:[%s7] sm:$0x1]
        %v728 = vperm.slane %v726, 0
        %730 = vmatpush.msra.mxu0 0.0
        %731 = vmatpush.msra.mxu0 0.0
        %732 = vmatpush.msra.mxu0 0.0
        %733 = vmatpush.msra.mxu0 0.0
        %734 = vmatpush.msra.mxu0 0.0
        %735 = vmatpush.msra.mxu0 0.0
        %736 = vmatpush.msra.mxu0 0.0
        %737 = vmatpush.msra.mxu0 0.0
        %738 = vmatpush.msra.mxu0 0.0
        %739 = vmatpush.msra.mxu0 0.0
        %740 = vmatpush.msra.mxu0 0.0
        %741 = vmatpush.msra.mxu0 0.0
        %742 = vmatpush.msra.mxu0 %v725
        %743 = vmatpush.msra.mxu0 %v724
        %744 = vmatpush.msra.mxu0 %v723
        %745 = vmatpush.msra.mxu0 %v722
        %746 = vmatmul.f32.gmra.mxu0 %v672
        %v747 = vpop.f32.mrf.mxu0
        %v748 = vadd.f32 %v728, %v747
        %749 = vdwg.mxu0
        %v750 = vmul.f32 %v692, 0.35355338
        %v751 = vld [vmem:[%s593] sm:$0x1]
        %vm752 = vcmp.gt.f32.partialorder %v751, 0.5
        %v753 = vsel %vm752, -1e+09, 0.0
        %755 = vrot.lane.b32.xlu0 %v750, 120
        %v756 = vpop.permute.xlu0 %755
        %757 = vrot.lane.b32.xlu0 %v750, 112
        %v758 = vpop.permute.xlu0 %757
        %759 = vrot.lane.b32.xlu0 %v750, 104
        %v760 = vpop.permute.xlu0 %759
        %762 = vrot.lane.b32.xlu0 %v720, 120
        %v763 = vpop.permute.xlu0 %762
        %764 = vrot.lane.b32.xlu0 %v720, 112
        %v765 = vpop.permute.xlu0 %764
        %766 = vrot.lane.b32.xlu0 %v720, 104
        %v767 = vpop.permute.xlu0 %766
        %769 = vrot.lane.b32.xlu0 %v748, 120
        %v770 = vpop.permute.xlu0 %769
        %772 = vrot.lane.b32.xlu0 %v748, 112
        %v773 = vpop.permute.xlu0 %772
        %775 = vrot.lane.b32.xlu0 %v748, 104
        %v776 = vpop.permute.xlu0 %775
        %v779 = vperm.slane %v753, 0
        %vm781 = vcmask 64512
        %v782 = vsel %vm781, %v750, 0
        %v784 = vsel %vm781, %v720, 0
        %786 = vmatpush.xpose.msra.mxu0 0.0
        %787 = vmatpush.xpose.msra.mxu0 0.0
        %788 = vmatpush.xpose.msra.mxu0 0.0
        %789 = vmatpush.xpose.msra.mxu0 0.0
        %790 = vmatpush.xpose.msra.mxu0 0.0
        %791 = vmatpush.xpose.msra.mxu0 0.0
        %792 = vmatpush.xpose.msra.mxu0 0.0
        %793 = vmatpush.xpose.msra.mxu0 0.0
        %794 = vmatpush.xpose.msra.mxu0 0.0
        %795 = vmatpush.xpose.msra.mxu0 0.0
        %796 = vmatpush.xpose.msra.mxu0 0.0
        %797 = vmatpush.xpose.msra.mxu0 0.0
        %798 = vmatpush.xpose.msra.mxu0 0.0
        %799 = vmatpush.xpose.msra.mxu0 0.0
        %800 = vmatpush.xpose.msra.mxu0 0.0
        %801 = vmatpush.xpose.msra.mxu0 %v784
        %802 = vmatmul.f32.gmra.mxu0 %v782
        %v803 = vpop.f32.mrf.mxu0
        %v804 = vadd.f32 %v779, %v803
        %805 = vdwg.mxu0
        %v806 = vsel %vm781, %v756, 0
        %v808 = vsel %vm781, %v763, 0
        %810 = vmatpush.xpose.msra.mxu0 0.0
        %811 = vmatpush.xpose.msra.mxu0 0.0
        %812 = vmatpush.xpose.msra.mxu0 0.0
        %813 = vmatpush.xpose.msra.mxu0 0.0
        %814 = vmatpush.xpose.msra.mxu0 0.0
        %815 = vmatpush.xpose.msra.mxu0 0.0
        %816 = vmatpush.xpose.msra.mxu0 0.0
        %817 = vmatpush.xpose.msra.mxu0 0.0
        %818 = vmatpush.xpose.msra.mxu0 0.0
        %819 = vmatpush.xpose.msra.mxu0 0.0
        %820 = vmatpush.xpose.msra.mxu0 0.0
        %821 = vmatpush.xpose.msra.mxu0 0.0
        %822 = vmatpush.xpose.msra.mxu0 0.0
        %823 = vmatpush.xpose.msra.mxu0 0.0
        %824 = vmatpush.xpose.msra.mxu0 0.0
        %825 = vmatpush.xpose.msra.mxu0 %v808
        %826 = vmatmul.f32.gmra.mxu0 %v806
        %v827 = vpop.f32.mrf.mxu0
        %v828 = vadd.f32 %v779, %v827
        %829 = vdwg.mxu0
        %v830 = vsel %vm781, %v758, 0
        %v832 = vsel %vm781, %v765, 0
        %834 = vmatpush.xpose.msra.mxu0 0.0
        %835 = vmatpush.xpose.msra.mxu0 0.0
        %836 = vmatpush.xpose.msra.mxu0 0.0
        %837 = vmatpush.xpose.msra.mxu0 0.0
        %838 = vmatpush.xpose.msra.mxu0 0.0
        %839 = vmatpush.xpose.msra.mxu0 0.0
        %840 = vmatpush.xpose.msra.mxu0 0.0
        %841 = vmatpush.xpose.msra.mxu0 0.0
        %842 = vmatpush.xpose.msra.mxu0 0.0
        %843 = vmatpush.xpose.msra.mxu0 0.0
        %844 = vmatpush.xpose.msra.mxu0 0.0
        %845 = vmatpush.xpose.msra.mxu0 0.0
        %846 = vmatpush.xpose.msra.mxu0 0.0
        %847 = vmatpush.xpose.msra.mxu0 0.0
        %848 = vmatpush.xpose.msra.mxu0 0.0
        %849 = vmatpush.xpose.msra.mxu0 %v832
        %850 = vmatmul.f32.gmra.mxu0 %v830
        %v851 = vpop.f32.mrf.mxu0
        %v852 = vadd.f32 %v779, %v851
        %853 = vdwg.mxu0
        %v854 = vsel %vm781, %v760, 0
        %v856 = vsel %vm781, %v767, 0
        %858 = vmatpush.xpose.msra.mxu0 0.0
        %859 = vmatpush.xpose.msra.mxu0 0.0
        %860 = vmatpush.xpose.msra.mxu0 0.0
        %861 = vmatpush.xpose.msra.mxu0 0.0
        %862 = vmatpush.xpose.msra.mxu0 0.0
        %863 = vmatpush.xpose.msra.mxu0 0.0
        %864 = vmatpush.xpose.msra.mxu0 0.0
        %865 = vmatpush.xpose.msra.mxu0 0.0
        %866 = vmatpush.xpose.msra.mxu0 0.0
        %867 = vmatpush.xpose.msra.mxu0 0.0
        %868 = vmatpush.xpose.msra.mxu0 0.0
        %869 = vmatpush.xpose.msra.mxu0 0.0
        %870 = vmatpush.xpose.msra.mxu0 0.0
        %871 = vmatpush.xpose.msra.mxu0 0.0
        %872 = vmatpush.xpose.msra.mxu0 0.0
        %873 = vmatpush.xpose.msra.mxu0 %v856
        %874 = vmatmul.f32.gmra.mxu0 %v854
        %v875 = vpop.f32.mrf.mxu0
        %v876 = vadd.f32 %v779, %v875
        %877 = vdwg.mxu0
        %v878 = vsel %vm781, %v804, -inf
        %879 = vmax.xlane.f32.xlu0 %v878
        %v880 = vpop.xlane.xlu0 %879
        %v881 = vsel %vm781, %v828, -inf
        %882 = vmax.xlane.f32.xlu0 %v881
        %v883 = vpop.xlane.xlu0 %882
        %v884 = vsel %vm781, %v852, -inf
        %885 = vmax.xlane.f32.xlu0 %v884
        %v886 = vpop.xlane.xlu0 %885
        %v887 = vsel %vm781, %v876, -inf
        %888 = vmax.xlane.f32.xlu0 %v887
        %v889 = vpop.xlane.xlu0 %888
        %v890 = vsub.f32 %v804, %v880
        %v891 = vsub.f32 %v828, %v883
        %v892 = vsub.f32 %v852, %v886
        %v893 = vsub.f32 %v876, %v889
        %v894 = vmul.f32 %v890, 1.442695
        %v895 = vpow.pop %v894
        %v896 = vmul.f32 %v891, 1.442695
        %v897 = vpow.pop %v896
        %v898 = vmul.f32 %v892, 1.442695
        %v899 = vpow.pop %v898
        %v900 = vmul.f32 %v893, 1.442695
        %v901 = vpow.pop %v900
        %v902 = vsel %vm781, %v895, 0.0
        %903 = vadd.xlane.f32.xlu0 %v902
        %v904 = vpop.xlane.xlu0 %903
        %v905 = vsel %vm781, %v897, 0.0
        %906 = vadd.xlane.f32.xlu0 %v905
        %v907 = vpop.xlane.xlu0 %906
        %v908 = vsel %vm781, %v899, 0.0
        %909 = vadd.xlane.f32.xlu0 %v908
        %v910 = vpop.xlane.xlu0 %909
        %v911 = vsel %vm781, %v901, 0.0
        %912 = vadd.xlane.f32.xlu0 %v911
        %v913 = vpop.xlane.xlu0 %912
        %v914 = vrcp.pop %v904
        %v915 = vmul.f32 %v904, %v914
        %v916 = vsub.f32 1.0, %v915
        %v917 = vmul.f32 %v914, %v916
        %v918 = vadd.f32 %v914, %v917
        %vm919 = vweird.f32 %v904
        %vm920 = vweird.f32 %v914
        %vm921 = vmor %vm919, %vm920
        %v922 = vsel %vm921, %v914, %v918
        %v923 = vand.u32 2147483647, %v904
        %vm924 = vcmp.eq.f32.partialorder %v923, 8.507059e+37
        %v925 = vand.u32 %v904, 2147483648
        %v926 = vor.u32 1.1754944e-38, %v925
        %v927 = vsel %vm924, %v926, %v922
        %v928 = vrcp.pop %v907
        %v929 = vmul.f32 %v907, %v928
        %v930 = vsub.f32 1.0, %v929
        %v931 = vmul.f32 %v928, %v930
        %v932 = vadd.f32 %v928, %v931
        %vm933 = vweird.f32 %v907
        %vm934 = vweird.f32 %v928
        %vm935 = vmor %vm933, %vm934
        %v936 = vsel %vm935, %v928, %v932
        %v937 = vand.u32 2147483647, %v907
        %vm938 = vcmp.eq.f32.partialorder %v937, 8.507059e+37
        %v939 = vand.u32 %v907, 2147483648
        %v940 = vor.u32 1.1754944e-38, %v939
        %v941 = vsel %vm938, %v940, %v936
        %v942 = vrcp.pop %v910
        %v943 = vmul.f32 %v910, %v942
        %v944 = vsub.f32 1.0, %v943
        %v945 = vmul.f32 %v942, %v944
        %v946 = vadd.f32 %v942, %v945
        %vm947 = vweird.f32 %v910
        %vm948 = vweird.f32 %v942
        %vm949 = vmor %vm947, %vm948
        %v950 = vsel %vm949, %v942, %v946
        %v951 = vand.u32 2147483647, %v910
        %vm952 = vcmp.eq.f32.partialorder %v951, 8.507059e+37
        %v953 = vand.u32 %v910, 2147483648
        %v954 = vor.u32 1.1754944e-38, %v953
        %v955 = vsel %vm952, %v954, %v950
        %v956 = vrcp.pop %v913
        %v957 = vmul.f32 %v913, %v956
        %v958 = vsub.f32 1.0, %v957
        %v959 = vmul.f32 %v956, %v958
        %v960 = vadd.f32 %v956, %v959
        %vm961 = vweird.f32 %v913
        %vm962 = vweird.f32 %v956
        %vm963 = vmor %vm961, %vm962
        %v964 = vsel %vm963, %v956, %v960
        %v965 = vand.u32 2147483647, %v913
        %vm966 = vcmp.eq.f32.partialorder %v965, 8.507059e+37
        %v967 = vand.u32 %v913, 2147483648
        %v968 = vor.u32 1.1754944e-38, %v967
        %v969 = vsel %vm966, %v968, %v964
        %v970 = vmul.f32 %v895, %v927
        %v971 = vmul.f32 %v897, %v941
        %v972 = vmul.f32 %v899, %v955
        %v973 = vmul.f32 %v901, %v969
        %v975 = vsel %vm781, %v970, 0
        %977 = vmatpush.msra.mxu0 0.0
        %978 = vmatpush.msra.mxu0 0.0
        %979 = vmatpush.msra.mxu0 0.0
        %980 = vmatpush.msra.mxu0 0.0
        %981 = vmatpush.msra.mxu0 0.0
        %982 = vmatpush.msra.mxu0 0.0
        %983 = vmatpush.msra.mxu0 0.0
        %984 = vmatpush.msra.mxu0 0.0
        %985 = vmatpush.msra.mxu0 0.0
        %986 = vmatpush.msra.mxu0 0.0
        %987 = vmatpush.msra.mxu0 0.0
        %988 = vmatpush.msra.mxu0 0.0
        %989 = vmatpush.msra.mxu0 0.0
        %990 = vmatpush.msra.mxu0 0.0
        %991 = vmatpush.msra.mxu0 0.0
        %992 = vmatpush.msra.mxu0 %v748
        %993 = vmatmul.f32.gmra.mxu0 %v975
        %v994 = vpop.f32.mrf.mxu0
        %v995 = vadd.f32 0.0, %v994
        %996 = vdwg.mxu0
        %v998 = vsel %vm781, %v971, 0
        %1000 = vmatpush.msra.mxu0 0.0
        %1001 = vmatpush.msra.mxu0 0.0
        %1002 = vmatpush.msra.mxu0 0.0
        %1003 = vmatpush.msra.mxu0 0.0
        %1004 = vmatpush.msra.mxu0 0.0
        %1005 = vmatpush.msra.mxu0 0.0
        %1006 = vmatpush.msra.mxu0 0.0
        %1007 = vmatpush.msra.mxu0 0.0
        %1008 = vmatpush.msra.mxu0 0.0
        %1009 = vmatpush.msra.mxu0 0.0
        %1010 = vmatpush.msra.mxu0 0.0
        %1011 = vmatpush.msra.mxu0 0.0
        %1012 = vmatpush.msra.mxu0 0.0
        %1013 = vmatpush.msra.mxu0 0.0
        %1014 = vmatpush.msra.mxu0 0.0
        %1015 = vmatpush.msra.mxu0 %v770
        %1016 = vmatmul.f32.gmra.mxu0 %v998
        %v1017 = vpop.f32.mrf.mxu0
        %v1018 = vadd.f32 0.0, %v1017
        %1019 = vdwg.mxu0
        %v1021 = vsel %vm781, %v972, 0
        %1023 = vmatpush.msra.mxu0 0.0
        %1024 = vmatpush.msra.mxu0 0.0
        %1025 = vmatpush.msra.mxu0 0.0
        %1026 = vmatpush.msra.mxu0 0.0
        %1027 = vmatpush.msra.mxu0 0.0
        %1028 = vmatpush.msra.mxu0 0.0
        %1029 = vmatpush.msra.mxu0 0.0
        %1030 = vmatpush.msra.mxu0 0.0
        %1031 = vmatpush.msra.mxu0 0.0
        %1032 = vmatpush.msra.mxu0 0.0
        %1033 = vmatpush.msra.mxu0 0.0
        %1034 = vmatpush.msra.mxu0 0.0
        %1035 = vmatpush.msra.mxu0 0.0
        %1036 = vmatpush.msra.mxu0 0.0
        %1037 = vmatpush.msra.mxu0 0.0
        %1038 = vmatpush.msra.mxu0 %v773
        %1039 = vmatmul.f32.gmra.mxu0 %v1021
        %v1040 = vpop.f32.mrf.mxu0
        %v1041 = vadd.f32 0.0, %v1040
        %1042 = vdwg.mxu0
        %v1044 = vsel %vm781, %v973, 0
        %1046 = vmatpush.msra.mxu0 0.0
        %1047 = vmatpush.msra.mxu0 0.0
        %1048 = vmatpush.msra.mxu0 0.0
        %1049 = vmatpush.msra.mxu0 0.0
        %1050 = vmatpush.msra.mxu0 0.0
        %1051 = vmatpush.msra.mxu0 0.0
        %1052 = vmatpush.msra.mxu0 0.0
        %1053 = vmatpush.msra.mxu0 0.0
        %1054 = vmatpush.msra.mxu0 0.0
        %1055 = vmatpush.msra.mxu0 0.0
        %1056 = vmatpush.msra.mxu0 0.0
        %1057 = vmatpush.msra.mxu0 0.0
        %1058 = vmatpush.msra.mxu0 0.0
        %1059 = vmatpush.msra.mxu0 0.0
        %1060 = vmatpush.msra.mxu0 0.0
        %1061 = vmatpush.msra.mxu0 %v776
        %1062 = vmatmul.f32.gmra.mxu0 %v1044
        %v1063 = vpop.f32.mrf.mxu0
        %v1064 = vadd.f32 0.0, %v1063
        %1065 = vdwg.mxu0
        %1067 = vrot.lane.b32.xlu0 %v1018, 8
        %v1068 = vpop.permute.xlu0 %1067
        %1071 = vrot.lane.b32.xlu0 %v1041, 16
        %v1072 = vpop.permute.xlu0 %1071
        %1075 = vrot.lane.b32.xlu0 %v1064, 24
        %v1076 = vpop.permute.xlu0 %1075
        %v1078 = vsel %vm781, %v995, %v1068
        %vm1079 = vcmask 130048
        %v1080 = vsel %vm1079, %v1078, %v1072
        %vm1081 = vcmask 195584
        %v1082 = vsel %vm1081, %v1080, %v1076
        %v1083 = vld [vmem:[#allocation7] sm:$0xff]
        %v1084 = vld [vmem:[#allocation7 + $0x8] sm:$0xff]
        %v1085 = vld [vmem:[#allocation7 + $0x10] sm:$0xff]
        %v1086 = vld [vmem:[#allocation7 + $0x18] sm:$0xff]
        %v1087 = vld [vmem:[%s9] sm:$0x1]
        %v1089 = vperm.slane %v1087, 0
        %v1092 = vsel %vm670, %v1082, 0
        %1094 = vmatpush.msra.mxu0 0.0
        %1095 = vmatpush.msra.mxu0 0.0
        %1096 = vmatpush.msra.mxu0 0.0
        %1097 = vmatpush.msra.mxu0 0.0
        %1098 = vmatpush.msra.mxu0 0.0
        %1099 = vmatpush.msra.mxu0 0.0
        %1100 = vmatpush.msra.mxu0 0.0
        %1101 = vmatpush.msra.mxu0 0.0
        %1102 = vmatpush.msra.mxu0 0.0
        %1103 = vmatpush.msra.mxu0 0.0
        %1104 = vmatpush.msra.mxu0 0.0
        %1105 = vmatpush.msra.mxu0 0.0
        %1106 = vmatpush.msra.mxu0 %v1086
        %1107 = vmatpush.msra.mxu0 %v1085
        %1108 = vmatpush.msra.mxu0 %v1084
        %1109 = vmatpush.msra.mxu0 %v1083
        %1110 = vmatmul.f32.gmra.mxu0 %v1092
        %v1111 = vpop.f32.mrf.mxu0
        %v1112 = vadd.f32 %v1089, %v1111
        %1113 = vdwg.mxu0
        %v1114 = vadd.f32 %v661, %v1112
        %v1115 = vsel %vm670, %v1114, 0.0
        %1116 = vadd.xlane.f32.xlu0 %v1115
        %v1117 = vpop.xlane.xlu0 %1116
        %v1118 = vrcp.pop 32.0
        %v1119 = vmul.f32 32.0, %v1118
        %v1120 = vsub.f32 1.0, %v1119
        %v1121 = vmul.f32 %v1118, %v1120
        %v1122 = vadd.f32 %v1118, %v1121
        %vm1123 = vweird.f32 %v1118
        %v1124 = vsel %vm1123, %v1118, %v1122
        %v1125 = vmul.f32 %v1117, %v1124
        %v1126 = vsub.f32 %v1114, %v1125
        %v1127 = vmul.f32 %v1126, %v1126
        %v1128 = vsel %vm670, %v1127, 0.0
        %1129 = vadd.xlane.f32.xlu0 %v1128
        %v1130 = vpop.xlane.xlu0 %1129
        %v1131 = vmul.f32 %v1130, 0.032258064
        %v1132 = vrsqrt.pop %v1131
        %v1133 = vmul.f32 %v1132, %v1131
        %v1134 = vmul.f32 %v1133, %v1132
        %v1135 = vmul.f32 0.5, %v1134
        %v1136 = vsub.f32 1.5, %v1135
        %v1137 = vmul.f32 %v1132, %v1136
        %v1138 = vmul.f32 %v1131, %v1137
        %vm1139 = vcmp.eq.f32.partialorder %v1131, inf
        %v1140 = vsel %vm1139, %v1131, %v1138
        %vm1141 = vcmp.eq.f32.partialorder %v1131, 0.0
        %v1142 = vand.u32 %v1131, 2147483648
        %v1143 = vsel %vm1141, %v1142, %v1140
        %v1144 = vld [vmem:[%s14] sm:$0x1]
        %v1146 = vperm.slane %v1144, 0
        %v1148 = vmul.f32 %v1146, %v1126
        %v1149 = vadd.f32 %v1143, 1e-06
        %v1150 = vrcp.pop %v1149
        %v1151 = vmul.f32 %v1149, %v1150
        %v1152 = vsub.f32 1.0, %v1151
        %v1153 = vmul.f32 %v1150, %v1152
        %v1154 = vadd.f32 %v1150, %v1153
        %vm1155 = vweird.f32 %v1149
        %vm1156 = vweird.f32 %v1150
        %vm1157 = vmor %vm1155, %vm1156
        %v1158 = vsel %vm1157, %v1150, %v1154
        %v1159 = vand.u32 2147483647, %v1149
        %vm1160 = vcmp.eq.f32.partialorder %v1159, 8.507059e+37
        %v1161 = vand.u32 %v1149, 2147483648
        %v1162 = vor.u32 1.1754944e-38, %v1161
        %v1163 = vsel %vm1160, %v1162, %v1158
        %v1164 = vmul.f32 %v1148, %v1163
        %v1165 = vld [vmem:[%s15] sm:$0x1]
        %v1167 = vperm.slane %v1165, 0
        %v1169 = vadd.f32 %v1164, %v1167
        %v1170 = vld [vmem:[#allocation8] sm:$0xff]
        %v1171 = vld [vmem:[#allocation8 + $0x8] sm:$0xff]
        %v1172 = vld [vmem:[#allocation8 + $0x10] sm:$0xff]
        %v1173 = vld [vmem:[#allocation8 + $0x18] sm:$0xff]
        %v1174 = vld [vmem:[%s11] sm:$0x1]
        %v1176 = vperm.slane %v1174, 0
        %v1179 = vsel %vm670, %v1169, 0
        %1181 = vmatpush.msra.mxu0 0.0
        %1182 = vmatpush.msra.mxu0 0.0
        %1183 = vmatpush.msra.mxu0 0.0
        %1184 = vmatpush.msra.mxu0 0.0
        %1185 = vmatpush.msra.mxu0 0.0
        %1186 = vmatpush.msra.mxu0 0.0
        %1187 = vmatpush.msra.mxu0 0.0
        %1188 = vmatpush.msra.mxu0 0.0
        %1189 = vmatpush.msra.mxu0 0.0
        %1190 = vmatpush.msra.mxu0 0.0
        %1191 = vmatpush.msra.mxu0 0.0
        %1192 = vmatpush.msra.mxu0 0.0
        %1193 = vmatpush.msra.mxu0 %v1173
        %1194 = vmatpush.msra.mxu0 %v1172
        %1195 = vmatpush.msra.mxu0 %v1171
        %1196 = vmatpush.msra.mxu0 %v1170
        %1197 = vmatmul.f32.gmra.mxu0 %v1179
        %v1198 = vpop.f32.mrf.mxu0
        %v1199 = vadd.f32 %v1176, %v1198
        %1200 = vdwg.mxu0
        %v1201 = vmax.f32 %v1199, 0.0
        %v1202 = vld [vmem:[%s12] sm:$0xff]
        %v1203 = vld [vmem:[%s12 + $0x8] sm:$0xff]
        %v1204 = vld [vmem:[%s12 + $0x10] sm:$0xff]
        %v1205 = vld [vmem:[%s12 + $0x18] sm:$0xff]
        %v1206 = vld [vmem:[%s12 + $0x20] sm:$0xff]
        %v1207 = vld [vmem:[%s12 + $0x28] sm:$0xff]
        %v1208 = vld [vmem:[%s12 + $0x30] sm:$0xff]
        %v1209 = vld [vmem:[%s12 + $0x38] sm:$0xff]
        %v1210 = vld [vmem:[%s13] sm:$0x1]
        %v1212 = vperm.slane %v1210, 0
        %vm1214 = vcmask 523264
        %v1216 = vsel %vm1214, %v1201, 0
        %1218 = vmatpush.msra.mxu0 0.0
        %1219 = vmatpush.msra.mxu0 0.0
        %1220 = vmatpush.msra.mxu0 0.0
        %1221 = vmatpush.msra.mxu0 0.0
        %1222 = vmatpush.msra.mxu0 0.0
        %1223 = vmatpush.msra.mxu0 0.0
        %1224 = vmatpush.msra.mxu0 0.0
        %1225 = vmatpush.msra.mxu0 0.0
        %1226 = vmatpush.msra.mxu0 %v1209
        %1227 = vmatpush.msra.mxu0 %v1208
        %1228 = vmatpush.msra.mxu0 %v1207
        %1229 = vmatpush.msra.mxu0 %v1206
        %1230 = vmatpush.msra.mxu0 %v1205
        %1231 = vmatpush.msra.mxu0 %v1204
        %1232 = vmatpush.msra.mxu0 %v1203
        %1233 = vmatpush.msra.mxu0 %v1202
        %1234 = vmatmul.f32.gmra.mxu0 %v1216
        %v1235 = vpop.f32.mrf.mxu0
        %v1236 = vadd.f32 %v1212, %v1235
        %1237 = vdwg.mxu0
        %v1238 = vadd.f32 %v1169, %v1236
        %v1239 = vsel %vm670, %v1238, 0.0
        %1240 = vadd.xlane.f32.xlu0 %v1239
        %v1241 = vpop.xlane.xlu0 %1240
        %v1242 = vmul.f32 %v1241, %v1124
        %v1243 = vsub.f32 %v1238, %v1242
        %v1244 = vmul.f32 %v1243, %v1243
        %v1245 = vsel %vm670, %v1244, 0.0
        %1246 = vadd.xlane.f32.xlu0 %v1245
        %v1247 = vpop.xlane.xlu0 %1246
        %v1248 = vmul.f32 %v1247, 0.032258064
        %v1249 = vrsqrt.pop %v1248
        %v1250 = vmul.f32 %v1249, %v1248
        %v1251 = vmul.f32 %v1250, %v1249
        %v1252 = vmul.f32 0.5, %v1251
        %v1253 = vsub.f32 1.5, %v1252
        %v1254 = vmul.f32 %v1249, %v1253
        %v1255 = vmul.f32 %v1248, %v1254
        %vm1256 = vcmp.eq.f32.partialorder %v1248, inf
        %v1257 = vsel %vm1256, %v1248, %v1255
        %vm1258 = vcmp.eq.f32.partialorder %v1248, 0.0
        %v1259 = vand.u32 %v1248, 2147483648
        %v1260 = vsel %vm1258, %v1259, %v1257
        %v1261 = vld [vmem:[%s16] sm:$0x1]
        %v1263 = vperm.slane %v1261, 0
        %v1265 = vmul.f32 %v1263, %v1243
        %v1266 = vadd.f32 %v1260, 1e-06
        %v1267 = vrcp.pop %v1266
        %v1268 = vmul.f32 %v1266, %v1267
        %v1269 = vsub.f32 1.0, %v1268
        %v1270 = vmul.f32 %v1267, %v1269
        %v1271 = vadd.f32 %v1267, %v1270
        %vm1272 = vweird.f32 %v1266
        %vm1273 = vweird.f32 %v1267
        %vm1274 = vmor %vm1272, %vm1273
        %v1275 = vsel %vm1274, %v1267, %v1271
        %v1276 = vand.u32 2147483647, %v1266
        %vm1277 = vcmp.eq.f32.partialorder %v1276, 8.507059e+37
        %v1278 = vand.u32 %v1266, 2147483648
        %v1279 = vor.u32 1.1754944e-38, %v1278
        %v1280 = vsel %vm1277, %v1279, %v1275
        %v1281 = vmul.f32 %v1265, %v1280
        %v1282 = vld [vmem:[%s17] sm:$0x1]
        %v1284 = vperm.slane %v1282, 0
        %v1286 = vadd.f32 %v1281, %v1284
        %1287 = vst.msk [vmem:[%s660] sm:$0xff] %vm670, %v1286
        %s1288 = sand.u32 %s435, 1
        %s1289 = scalar_lea.sflag [#allocation4], %s1288
        %s1290 = sand.u32 %s435, 1
        %s1291 = smul.addr %s1290, 8
        %s1292 = scalar_lea.vmem [#allocation10], %s1291
        // Predicated region
        $region109: #{tpu_custom_call.1} parent=91 // pred_check
          %p1293 = pneg %p445
        $region110: #{tpu_custom_call.1} parent=91 // pred_check_branch
          %1295 = sbr.rel (%p1293) target = $region112
        $region111: #{tpu_custom_call.1} parent=91 // pred_region
          %1297 = vsyncadd %s1289, 0
          %s1298 = smul.addr %s39, 8
          %s1299 = scalar_lea.hbm %s18, %s1298
          %s1301 = sshll.u32 %s1292, 4
          %s1302 = int_to_ptr.vmem [resolvable:$true] %s1301
          %s1303 = sshll.u32 %s1299, 4
          %s1304 = int_to_ptr.hbm [resolvable:$true] %s1303
          %1306 = dma.vmem_to_hbm [thread:$0]  %s1302, 128, %s1304, %s1289
        $region112: #{tpu_custom_call.1} parent=91 // pred_fallthru
          _
      $region92: #{tpu_custom_call.1} parent=5 // pred_fallthru
        _
      %p1307 = scmp.le.s32.totalorder 2, %s34
      // Predicated region
      $region113: #{tpu_custom_call.1} parent=5 // pred_check
        %p1308 = pneg %p1307
      $region114: #{tpu_custom_call.1} parent=5 // pred_check_branch
        %1310 = sbr.rel (%p1308) target = $region116
      $region115: #{tpu_custom_call.1} parent=5 // pred_region
        %s1311 = ssub.s32 %s34, 2
        // Predicated region
        $region117: #{tpu_custom_call.1} parent=115 // pred_check
          %p1312 = pneg %p451
        $region118: #{tpu_custom_call.1} parent=115 // pred_check_branch
          %1314 = sbr.rel (%p1312) target = $region120
        $region119: #{tpu_custom_call.1} parent=115 // pred_region
          %s1315 = sand.u32 %s436, 1
          %s1316 = scalar_lea.sflag [#allocation4], %s1315
          %s1317 = sand.u32 %s436, 1
          %s1318 = smul.addr %s1317, 8
          %s1319 = scalar_lea.vmem [#allocation10], %s1318
          %1321 = dma.done %s1316, 128
        $region120: #{tpu_custom_call.1} parent=115 // pred_fallthru
          _
      $region116: #{tpu_custom_call.1} parent=5 // pred_fallthru
        _
    $region6: #{tpu_custom_call.1} parent=1 // loop_footer
      %s38 = sadd.s32 1, %s34
    $region7: #{tpu_custom_call.1} parent=1 // loop_footer_branch
      %33 = sbr.rel target = $region3
    $region8: #{tpu_custom_call.1} parent=1 // loop_exit
      _
    %1322 = vsyncpa [#allocation3], 1
    %s1323 = scalar_lea.sflag [#allocation3], 1
    %1324 = vsyncpa %s1323, 1
    %1325 = vsyncpa [#allocation6], 1
    %s1326 = scalar_lea.sflag [#allocation6], 1
    %1327 = vsyncpa %s1326, 1
    %1328 = vsyncpa [#allocation9], 1
    %1329 = vsyncpa [#allocation4], 1
    %s1330 = scalar_lea.sflag [#allocation4], 1
    %1331 = vsyncpa %s1330, 1

</llo_original>
